<compile_context>
chip_gen: v5e
topology: v5e:2x2
jax: 0.10.0
libtpu: 0.0.40
codegen_flags: <defaults>
</compile_context>

<pallas_src>
import functools

import jax
import jax.numpy as jnp
from jax.experimental import pallas as pl
from jax.experimental.pallas import tpu as pltpu

_SINGLE_TILE_A_BYTES = 8 * 1024 * 1024   # whole-M single-tile path if bf16 A fits
_TM_TILED = 512                          # M tile for the (rare) tiled fallback
_VMEM_LIMIT = 48 * 1024 * 1024           # stays under v7x's 64 MiB physical VMEM


def _round_up(x, m):
    return (x + m - 1) // m * m


# ---------------------------------------------------------------------------
# Pallas kernels
# ---------------------------------------------------------------------------
def _conv_act_kernel(w_ref, a_ref, bias_ref, o_ref, *, slope):
    """(Cout, K) @ (K, tm) + bias (+LeakyReLU).  K is never tiled here."""
    y = jnp.dot(w_ref[...], a_ref[...], preferred_element_type=jnp.float32)
    y = y + bias_ref[...]
    if slope is not None:
        y = jnp.where(y >= 0, y, slope * y)
    o_ref[...] = y.astype(o_ref.dtype)


def _conv_bn_act_kernel(w_ref, a_ref, bias_ref, gamma_ref, beta_ref, o_ref,
                        *, eps, slope):
    """Single-M-tile conv + training-mode BatchNorm + LeakyReLU, fully fused."""
    y = jnp.dot(w_ref[...], a_ref[...], preferred_element_type=jnp.float32)
    y = y + bias_ref[...]                                    # (Cout, M) f32
    inv_m = 1.0 / y.shape[1]
    mean = jnp.sum(y, axis=1, keepdims=True) * inv_m
    ctr = y - mean
    var = jnp.sum(ctr * ctr, axis=1, keepdims=True) * inv_m  # biased, two-pass
    scale = gamma_ref[...] * jax.lax.rsqrt(var + eps)
    z = ctr * scale + beta_ref[...]
    o_ref[...] = jnp.where(z >= 0, z, slope * z).astype(o_ref.dtype)


def _conv_pstats_kernel(w_ref, a_ref, bias_ref, o_ref, stats_ref, *, tm, m_total):
    """Tiled-M fallback: conv + bias; per-tile partial (sum, sumsq) for BN.

    Partial stats per M tile keep the grid axis race-free under "parallel"
    (megacore-shardable on v7x); the BN-apply kernel reduces the partials.
    """
    y = jnp.dot(w_ref[...], a_ref[...], preferred_element_type=jnp.float32)
    y = y + bias_ref[...]
    o_ref[...] = y.astype(o_ref.dtype)
    if m_total % tm:   # static check: no dead mask work when M needs no padding
        col = pl.program_id(0) * tm + jax.lax.broadcasted_iota(jnp.int32, y.shape, 1)
        y = jnp.where(col < m_total, y, 0.0)
    s1 = jnp.sum(y, axis=1, keepdims=True)
    s2 = jnp.sum(y * y, axis=1, keepdims=True)
    stats_ref[...] = jnp.concatenate([s1, s2], axis=1)[None]   # (1, Cout, 2)


def _bn_apply_kernel(y_ref, stats_ref, gamma_ref, beta_ref, o_ref,
                     *, m_total, eps, slope):
    """Tiled-M fallback: reduce partial stats, normalize + LeakyReLU per tile."""
    st = jnp.sum(stats_ref[...], axis=0)                      # (Cout, 2)
    inv_m = 1.0 / m_total
    mean = st[:, 0:1] * inv_m
    var = st[:, 1:2] * inv_m - mean * mean
    scale = gamma_ref[...] * jax.lax.rsqrt(var + eps)
    shift = beta_ref[...] - mean * scale
    z = y_ref[...] * scale + shift
    o_ref[...] = jnp.where(z >= 0, z, slope * z).astype(o_ref.dtype)


# ---------------------------------------------------------------------------
# Wrappers
# ---------------------------------------------------------------------------
def _im2col_cndhw(x, ksize, stride, padding):
    """x: (C, N, D, H, W) -> (kd*kh*kw*C, N*Do*Ho*Wo); K-order = (kd, kh, kw, cin)."""
    # TODO(synk): implicit in-kernel im2col (per-tap strided DMA from an
    # HBM-resident activation) would remove the kd*kh*kw-fold HBM inflation;
    # kept wrapper-side because every layer here is launch-overhead bound.
    C, N, D, H, W = x.shape
    kd, kh, kw = ksize
    sd, sh, sw = stride
    pd, ph, pw = padding
    xp = jnp.pad(x, ((0, 0), (0, 0), (pd, pd), (ph, ph), (pw, pw)))
    Do = (D + 2 * pd - kd) // sd + 1
    Ho = (H + 2 * ph - kh) // sh + 1
    Wo = (W + 2 * pw - kw) // sw + 1
    taps = []
    for a in range(kd):
        for b in range(kh):
            for c in range(kw):
                taps.append(xp[:, :, a:a + Do * sd:sd,
                                      b:b + Ho * sh:sh,
                                      c:c + Wo * sw:sw])
    at = jnp.stack(taps, axis=0).reshape(kd * kh * kw * C, N * Do * Ho * Wo)
    return at, (N, Do, Ho, Wo)


def conv3d_pallas(x, w, b, stride, padding, *, leaky_slope=None, bn=None,
                  bn_eps=1e-5, bn_slope=0.2, out_dtype=jnp.bfloat16):
    """Conv3d on a CNDHW tensor; fuses LeakyReLU or BatchNorm+LeakyReLU.

    x: (Cin, N, D, H, W); w: (Cout, Cin, kd, kh, kw); b: (Cout,)
    bn: None or (gamma, beta).  Returns (Cout, N, Do, Ho, Wo) in out_dtype.
    """
    Cout, Cin, kd, kh, kw = w.shape
    at, (N, Do, Ho, Wo) = _im2col_cndhw(x.astype(jnp.bfloat16),
                                        (kd, kh, kw), stride, padding)
    K, M = at.shape
    wt = jnp.transpose(w, (0, 2, 3, 4, 1)).reshape(Cout, K).astype(jnp.bfloat16)
    bias = b.reshape(Cout, 1).astype(jnp.float32)
    cp = pltpu.CompilerParams(dimension_semantics=("parallel",),
                              vmem_limit_bytes=_VMEM_LIMIT)

    # ----- single-tile fast path: whole M (and whole K) in one launch --------
    if K * M * 2 <= _SINGLE_TILE_A_BYTES:
        vec_spec = pl.BlockSpec((Cout, 1), lambda i: (0, 0))
        if bn is None:
            kern = functools.partial(_conv_act_kernel, slope=leaky_slope)
            args = (wt, at, bias)
            in_specs = [pl.BlockSpec((Cout, K), lambda i: (0, 0)),
                        pl.BlockSpec((K, M), lambda i: (0, 0)),
                        vec_spec]
        else:
            gamma, beta = bn
            kern = functools.partial(_conv_bn_act_kernel, eps=bn_eps, slope=bn_slope)
            args = (wt, at, bias,
                    gamma.reshape(Cout, 1).astype(jnp.float32),
                    beta.reshape(Cout, 1).astype(jnp.float32))
            in_specs = [pl.BlockSpec((Cout, K), lambda i: (0, 0)),
                        pl.BlockSpec((K, M), lambda i: (0, 0)),
                        vec_spec, vec_spec, vec_spec]
        y = pl.pallas_call(
            kern, grid=(1,), in_specs=in_specs,
            out_specs=pl.BlockSpec((Cout, M), lambda i: (0, 0)),
            out_shape=jax.ShapeDtypeStruct((Cout, M), out_dtype),
            compiler_params=cp,
        )(*args)
        return y.reshape(Cout, N, Do, Ho, Wo)

    # ----- tiled fallback for large M (not hit at the test shapes) -----------
    # TODO(synk): K is never tiled here; add a K axis + accumulator if K*tm
    # ever exceeds the VMEM budget.
    tm = _TM_TILED
    Mp = _round_up(M, tm)
    if Mp > M:
        at = jnp.pad(at, ((0, 0), (0, Mp - M)))     # zero M columns, sliced off
    grid = (Mp // tm,)
    w_spec = pl.BlockSpec((Cout, K), lambda i: (0, 0))
    a_spec = pl.BlockSpec((K, tm), lambda i: (0, i))
    v_spec = pl.BlockSpec((Cout, 1), lambda i: (0, 0))
    o_spec = pl.BlockSpec((Cout, tm), lambda i: (0, i))

    if bn is None:
        y = pl.pallas_call(
            functools.partial(_conv_act_kernel, slope=leaky_slope),
            grid=grid, in_specs=[w_spec, a_spec, v_spec], out_specs=o_spec,
            out_shape=jax.ShapeDtypeStruct((Cout, Mp), out_dtype),
            compiler_params=cp,
        )(wt, at, bias)
    else:
        gamma, beta = bn
        y_pre, pstats = pl.pallas_call(
            functools.partial(_conv_pstats_kernel, tm=tm, m_total=M),
            grid=grid, in_specs=[w_spec, a_spec, v_spec],
            out_specs=(o_spec, pl.BlockSpec((1, Cout, 2), lambda i: (i, 0, 0))),
            out_shape=(jax.ShapeDtypeStruct((Cout, Mp), jnp.float32),
                       jax.ShapeDtypeStruct((grid[0], Cout, 2), jnp.float32)),
            compiler_params=cp,
        )(wt, at, bias)
        y = pl.pallas_call(
            functools.partial(_bn_apply_kernel, m_total=M, eps=bn_eps,
                              slope=bn_slope),
            grid=grid,
            in_specs=[o_spec,
                      pl.BlockSpec((grid[0], Cout, 2), lambda i: (0, 0, 0)),
                      v_spec, v_spec],
            out_specs=o_spec,
            out_shape=jax.ShapeDtypeStruct((Cout, Mp), out_dtype),
            compiler_params=cp,
        )(y_pre, pstats,
          gamma.reshape(Cout, 1).astype(jnp.float32),
          beta.reshape(Cout, 1).astype(jnp.float32))

    return y[:, :M].reshape(Cout, N, Do, Ho, Wo)


# ---------------------------------------------------------------------------
# Model: parameter init + forward
# ---------------------------------------------------------------------------
def init_params(key, n_channels=3, ndf=16, n_output_neurons=1):
    ks = jax.random.split(key, 8)
    shapes = [
        (ndf, n_channels, 4, 4, 4),
        (ndf * 2, ndf, 4, 4, 4),
        (ndf * 4, ndf * 2, 4, 4, 4),
        (n_output_neurons, ndf * 4, 4, 4, 4),
    ]
    params = {}
    for i, s in enumerate(shapes, start=1):
        fan_in = s[1] * s[2] * s[3] * s[4]
        scale = 1.0 / jnp.sqrt(jnp.float32(fan_in))
        params[f"w{i}"] = scale * jax.random.normal(ks[2 * (i - 1)], s, jnp.float32)
        params[f"b{i}"] = scale * jax.random.normal(ks[2 * (i - 1) + 1], (s[0],),
                                                    jnp.float32)
    # BatchNorm affine params (PyTorch default init: gamma=1, beta=0).
    params["g2"] = jnp.ones((ndf * 2,), jnp.float32)
    params["be2"] = jnp.zeros((ndf * 2,), jnp.float32)
    params["g3"] = jnp.ones((ndf * 4,), jnp.float32)
    params["be3"] = jnp.zeros((ndf * 4,), jnp.float32)
    return params


def patch_video_discriminator_forward(x, params):
    """Mirrors PatchVideoDiscriminator.forward (use_noise=False, norm_mode='batch')."""
    # Noise(use_noise=False) layers are identity.
    # TODO(synk): norm_mode='spectral' (torch spectral_norm) path not implemented;
    # the default construction uses norm_mode='batch' (training-mode batch stats).
    # TODO(synk): conv3+conv4 could be fused into one kernel (both fit VMEM) to
    # drop one more launch.
    h = jnp.transpose(x, (1, 0, 2, 3, 4))                # one-time NCDHW -> CNDHW
    h = conv3d_pallas(h, params["w1"], params["b1"], (1, 2, 2), (0, 1, 1),
                      leaky_slope=0.2)                    # conv1 + LeakyReLU fused
    h = conv3d_pallas(h, params["w2"], params["b2"], (1, 2, 2), (0, 1, 1),
                      bn=(params["g2"], params["be2"]))   # conv2 + BN + LeakyReLU
    h = conv3d_pallas(h, params["w3"], params["b3"], (1, 2, 2), (0, 1, 1),
                      bn=(params["g3"], params["be3"]))   # conv3 + BN + LeakyReLU
    h = conv3d_pallas(h, params["w4"], params["b4"], (1, 2, 2), (0, 1, 1),
                      out_dtype=jnp.float32)              # conv4 (no activation)
    h = jnp.transpose(h, (1, 0, 2, 3, 4))                 # back to NCDHW
    h = jnp.squeeze(h)                                    # matches torch h.squeeze()
    return h, None


if __name__ == "__main__":
    key = jax.random.PRNGKey(0)
    # T >= 13 so the temporal dim survives four k=4/stride-1 convs;
    # H = W = 16 halves to 1 after four stride-2 convs.
    N, C, T, H, W = 2, 3, 13, 16, 16
    x = jax.random.normal(key, (N, C, T, H, W), jnp.float32)
    params = init_params(jax.random.PRNGKey(1), n_channels=C, ndf=16,
                         n_output_neurons=1)

    fwd = jax.jit(lambda inp: patch_video_discriminator_forward(inp, params))
    h, aux = fwd(x)
    jax.block_until_ready(h)
    assert h.shape == (N,), h.shape        # (2,1,1,1,1) squeezed -> (2,)
    assert bool(jnp.all(jnp.isfinite(h)))
    assert aux is None
    print("KERNEL_OK")
</pallas_src>

<mosaic_0001>
module attributes {stable_mosaic.version = 11 : i64} {
  func.func @_conv_act_kernel(%arg0: i32, %arg1: memref<16x192xbf16, #tpu.memory_space<vmem>>, %arg2: memref<192x1280xbf16, #tpu.memory_space<vmem>>, %arg3: memref<16x1xf32, #tpu.memory_space<vmem>>, %arg4: memref<16x1280xbf16, #tpu.memory_space<vmem>>) attributes {dimension_semantics = [#tpu.dimension_semantics<parallel>], iteration_bounds = array<i64: 1>, scalar_prefetch = 0 : i64, scratch_operands = 0 : i64, tpu.core_type = #tpu.core_type<tc>, window_params = [{pipeline_mode = #tpu.pipeline_mode<synchronous>, transform_indices = @transform_0, window_bounds = array<i64: 16, 192>}, {pipeline_mode = #tpu.pipeline_mode<synchronous>, transform_indices = @transform_1, window_bounds = array<i64: 192, 1280>}, {pipeline_mode = #tpu.pipeline_mode<synchronous>, transform_indices = @transform_2, window_bounds = array<i64: 16, 1>}, {pipeline_mode = #tpu.pipeline_mode<synchronous>, transform_indices = @transform_3, window_bounds = array<i64: 16, 1280>}]} {
    %c0 = arith.constant 0 : index
    %c0_0 = arith.constant 0 : index
    %0 = vector.load %arg1[%c0, %c0_0] : memref<16x192xbf16, #tpu.memory_space<vmem>>, vector<16x192xbf16>
    %c0_1 = arith.constant 0 : index
    %c0_2 = arith.constant 0 : index
    %1 = vector.load %arg2[%c0_1, %c0_2] : memref<192x1280xbf16, #tpu.memory_space<vmem>>, vector<192x1280xbf16>
    %cst = arith.constant dense<0.000000e+00> : vector<16x1280xf32>
    %2 = tpu.matmul %0, %1, %cst {dimension_numbers = #tpu.dot_dimension_numbers<[1], [0], [0], [1], [0, 0, 1, 1], [], []>} : vector<16x192xbf16>, vector<192x1280xbf16>, vector<16x1280xf32> -> vector<16x1280xf32>
    %c0_3 = arith.constant 0 : index
    %c0_4 = arith.constant 0 : index
    %3 = vector.load %arg3[%c0_3, %c0_4] : memref<16x1xf32, #tpu.memory_space<vmem>>, vector<16x1xf32>
    %4 = vector.broadcast %3 : vector<16x1xf32> to vector<16x1280xf32>
    %5 = arith.addf %2, %4 : vector<16x1280xf32>
    %cst_5 = arith.constant 0.000000e+00 : f32
    %6 = vector.broadcast %cst_5 : f32 to vector<16x1280xf32>
    %7 = arith.cmpf oge, %5, %6 : vector<16x1280xf32>
    %cst_6 = arith.constant 2.000000e-01 : f32
    %8 = vector.broadcast %cst_6 : f32 to vector<16x1280xf32>
    %9 = arith.mulf %8, %5 : vector<16x1280xf32>
    %10 = arith.select %7, %5, %9 : vector<16x1280xi1>, vector<16x1280xf32>
    %11 = arith.truncf %10 : vector<16x1280xf32> to vector<16x1280xbf16>
    %c0_7 = arith.constant 0 : index
    %c0_8 = arith.constant 0 : index
    %12 = vector.load %arg4[%c0_7, %c0_8] : memref<16x1280xbf16, #tpu.memory_space<vmem>>, vector<16x1280xbf16>
    tpu.vector_store %arg4[%c0_7, %c0_8], %11 {strides = array<i32>} : memref<16x1280xbf16, #tpu.memory_space<vmem>>, vector<16x1280xbf16>,
    return
  }
  func.func @transform_0(%arg0: i32) -> (i32, i32) {
    %c0_i32 = arith.constant 0 : i32
    %c0_i32_0 = arith.constant 0 : i32
    %c0_i32_1 = arith.constant 0 : i32
    return %c0_i32, %c0_i32_0 : i32, i32
  }
  func.func @transform_1(%arg0: i32) -> (i32, i32) {
    %c0_i32 = arith.constant 0 : i32
    %c0_i32_0 = arith.constant 0 : i32
    %c0_i32_1 = arith.constant 0 : i32
    return %c0_i32, %c0_i32_0 : i32, i32
  }
  func.func @transform_2(%arg0: i32) -> (i32, i32) {
    %c0_i32 = arith.constant 0 : i32
    %c0_i32_0 = arith.constant 0 : i32
    %c0_i32_1 = arith.constant 0 : i32
    return %c0_i32, %c0_i32_0 : i32, i32
  }
  func.func @transform_3(%arg0: i32) -> (i32, i32) {
    %c0_i32 = arith.constant 0 : i32
    %c0_i32_0 = arith.constant 0 : i32
    %c0_i32_1 = arith.constant 0 : i32
    return %c0_i32, %c0_i32_0 : i32, i32
  }
}

module attributes {stable_mosaic.version = 11 : i64} {
  func.func @_conv_bn_act_kernel(%arg0: i32, %arg1: memref<32x1024xbf16, #tpu.memory_space<vmem>>, %arg2: memref<1024x224xbf16, #tpu.memory_space<vmem>>, %arg3: memref<32x1xf32, #tpu.memory_space<vmem>>, %arg4: memref<32x1xf32, #tpu.memory_space<vmem>>, %arg5: memref<32x1xf32, #tpu.memory_space<vmem>>, %arg6: memref<32x224xbf16, #tpu.memory_space<vmem>>) attributes {dimension_semantics = [#tpu.dimension_semantics<parallel>], iteration_bounds = array<i64: 1>, scalar_prefetch = 0 : i64, scratch_operands = 0 : i64, tpu.core_type = #tpu.core_type<tc>, window_params = [{pipeline_mode = #tpu.pipeline_mode<synchronous>, transform_indices = @transform_0, window_bounds = array<i64: 32, 1024>}, {pipeline_mode = #tpu.pipeline_mode<synchronous>, transform_indices = @transform_1, window_bounds = array<i64: 1024, 224>}, {pipeline_mode = #tpu.pipeline_mode<synchronous>, transform_indices = @transform_2, window_bounds = array<i64: 32, 1>}, {pipeline_mode = #tpu.pipeline_mode<synchronous>, transform_indices = @transform_3, window_bounds = array<i64: 32, 1>}, {pipeline_mode = #tpu.pipeline_mode<synchronous>, transform_indices = @transform_4, window_bounds = array<i64: 32, 1>}, {pipeline_mode = #tpu.pipeline_mode<synchronous>, transform_indices = @transform_5, window_bounds = array<i64: 32, 224>}]} {
    %c0 = arith.constant 0 : index
    %c0_0 = arith.constant 0 : index
    %0 = vector.load %arg1[%c0, %c0_0] : memref<32x1024xbf16, #tpu.memory_space<vmem>>, vector<32x1024xbf16>
    %c0_1 = arith.constant 0 : index
    %c0_2 = arith.constant 0 : index
    %1 = vector.load %arg2[%c0_1, %c0_2] : memref<1024x224xbf16, #tpu.memory_space<vmem>>, vector<1024x224xbf16>
    %cst = arith.constant dense<0.000000e+00> : vector<32x224xf32>
    %2 = tpu.matmul %0, %1, %cst {dimension_numbers = #tpu.dot_dimension_numbers<[1], [0], [0], [1], [0, 0, 1, 1], [], []>} : vector<32x1024xbf16>, vector<1024x224xbf16>, vector<32x224xf32> -> vector<32x224xf32>
    %c0_3 = arith.constant 0 : index
    %c0_4 = arith.constant 0 : index
    %3 = vector.load %arg3[%c0_3, %c0_4] : memref<32x1xf32, #tpu.memory_space<vmem>>, vector<32x1xf32>
    %4 = vector.broadcast %3 : vector<32x1xf32> to vector<32x224xf32>
    %5 = arith.addf %2, %4 : vector<32x224xf32>
    %cst_5 = arith.constant dense<0.000000e+00> : vector<32xf32>
    %6 = vector.multi_reduction <add>, %5, %cst_5 [1] : vector<32x224xf32> to vector<32xf32>
    %7 = vector.shape_cast %6 : vector<32xf32> to vector<32x1xf32>
    %cst_6 = arith.constant 0.00446428591 : f32
    %8 = vector.broadcast %cst_6 : f32 to vector<32x1xf32>
    %9 = arith.mulf %7, %8 : vector<32x1xf32>
    %10 = vector.broadcast %9 : vector<32x1xf32> to vector<32x224xf32>
    %11 = arith.subf %5, %10 : vector<32x224xf32>
    %12 = arith.mulf %11, %11 : vector<32x224xf32>
    %cst_7 = arith.constant dense<0.000000e+00> : vector<32xf32>
    %13 = vector.multi_reduction <add>, %12, %cst_7 [1] : vector<32x224xf32> to vector<32xf32>
    %14 = vector.shape_cast %13 : vector<32xf32> to vector<32x1xf32>
    %cst_8 = arith.constant 0.00446428591 : f32
    %15 = vector.broadcast %cst_8 : f32 to vector<32x1xf32>
    %16 = arith.mulf %14, %15 : vector<32x1xf32>
    %c0_9 = arith.constant 0 : index
    %c0_10 = arith.constant 0 : index
    %17 = vector.load %arg4[%c0_9, %c0_10] : memref<32x1xf32, #tpu.memory_space<vmem>>, vector<32x1xf32>
    %cst_11 = arith.constant 9.99999974E-6 : f32
    %18 = vector.broadcast %cst_11 : f32 to vector<32x1xf32>
    %19 = arith.addf %16, %18 : vector<32x1xf32>
    %20 = math.rsqrt %19 : vector<32x1xf32>
    %21 = arith.mulf %17, %20 : vector<32x1xf32>
    %22 = vector.broadcast %21 : vector<32x1xf32> to vector<32x224xf32>
    %23 = arith.mulf %11, %22 : vector<32x224xf32>
    %c0_12 = arith.constant 0 : index
    %c0_13 = arith.constant 0 : index
    %24 = vector.load %arg5[%c0_12, %c0_13] : memref<32x1xf32, #tpu.memory_space<vmem>>, vector<32x1xf32>
    %25 = vector.broadcast %24 : vector<32x1xf32> to vector<32x224xf32>
    %26 = arith.addf %23, %25 : vector<32x224xf32>
    %cst_14 = arith.constant 0.000000e+00 : f32
    %27 = vector.broadcast %cst_14 : f32 to vector<32x224xf32>
    %28 = arith.cmpf oge, %26, %27 : vector<32x224xf32>
    %cst_15 = arith.constant 2.000000e-01 : f32
    %29 = vector.broadcast %cst_15 : f32 to vector<32x224xf32>
    %30 = arith.mulf %29, %26 : vector<32x224xf32>
    %31 = arith.select %28, %26, %30 : vector<32x224xi1>, vector<32x224xf32>
    %32 = arith.truncf %31 : vector<32x224xf32> to vector<32x224xbf16>
    %c0_16 = arith.constant 0 : index
    %c0_17 = arith.constant 0 : index
    %33 = vector.load %arg6[%c0_16, %c0_17] : memref<32x224xbf16, #tpu.memory_space<vmem>>, vector<32x224xbf16>
    tpu.vector_store %arg6[%c0_16, %c0_17], %32 {strides = array<i32>} : memref<32x224xbf16, #tpu.memory_space<vmem>>, vector<32x224xbf16>,
    return
  }
  func.func @transform_0(%arg0: i32) -> (i32, i32) {
    %c0_i32 = arith.constant 0 : i32
    %c0_i32_0 = arith.constant 0 : i32
    %c0_i32_1 = arith.constant 0 : i32
    return %c0_i32, %c0_i32_0 : i32, i32
  }
  func.func @transform_1(%arg0: i32) -> (i32, i32) {
    %c0_i32 = arith.constant 0 : i32
    %c0_i32_0 = arith.constant 0 : i32
    %c0_i32_1 = arith.constant 0 : i32
    return %c0_i32, %c0_i32_0 : i32, i32
  }
  func.func @transform_2(%arg0: i32) -> (i32, i32) {
    %c0_i32 = arith.constant 0 : i32
    %c0_i32_0 = arith.constant 0 : i32
    %c0_i32_1 = arith.constant 0 : i32
    return %c0_i32, %c0_i32_0 : i32, i32
  }
  func.func @transform_3(%arg0: i32) -> (i32, i32) {
    %c0_i32 = arith.constant 0 : i32
    %c0_i32_0 = arith.constant 0 : i32
    %c0_i32_1 = arith.constant 0 : i32
    return %c0_i32, %c0_i32_0 : i32, i32
  }
  func.func @transform_4(%arg0: i32) -> (i32, i32) {
    %c0_i32 = arith.constant 0 : i32
    %c0_i32_0 = arith.constant 0 : i32
    %c0_i32_1 = arith.constant 0 : i32
    return %c0_i32, %c0_i32_0 : i32, i32
  }
  func.func @transform_5(%arg0: i32) -> (i32, i32) {
    %c0_i32 = arith.constant 0 : i32
    %c0_i32_0 = arith.constant 0 : i32
    %c0_i32_1 = arith.constant 0 : i32
    return %c0_i32, %c0_i32_0 : i32, i32
  }
}

module attributes {stable_mosaic.version = 11 : i64} {
  func.func @_conv_bn_act_kernel(%arg0: i32, %arg1: memref<64x2048xbf16, #tpu.memory_space<vmem>>, %arg2: memref<2048x32xbf16, #tpu.memory_space<vmem>>, %arg3: memref<64x1xf32, #tpu.memory_space<vmem>>, %arg4: memref<64x1xf32, #tpu.memory_space<vmem>>, %arg5: memref<64x1xf32, #tpu.memory_space<vmem>>, %arg6: memref<64x32xbf16, #tpu.memory_space<vmem>>) attributes {dimension_semantics = [#tpu.dimension_semantics<parallel>], iteration_bounds = array<i64: 1>, scalar_prefetch = 0 : i64, scratch_operands = 0 : i64, tpu.core_type = #tpu.core_type<tc>, window_params = [{pipeline_mode = #tpu.pipeline_mode<synchronous>, transform_indices = @transform_0, window_bounds = array<i64: 64, 2048>}, {pipeline_mode = #tpu.pipeline_mode<synchronous>, transform_indices = @transform_1, window_bounds = array<i64: 2048, 32>}, {pipeline_mode = #tpu.pipeline_mode<synchronous>, transform_indices = @transform_2, window_bounds = array<i64: 64, 1>}, {pipeline_mode = #tpu.pipeline_mode<synchronous>, transform_indices = @transform_3, window_bounds = array<i64: 64, 1>}, {pipeline_mode = #tpu.pipeline_mode<synchronous>, transform_indices = @transform_4, window_bounds = array<i64: 64, 1>}, {pipeline_mode = #tpu.pipeline_mode<synchronous>, transform_indices = @transform_5, window_bounds = array<i64: 64, 32>}]} {
    %c0 = arith.constant 0 : index
    %c0_0 = arith.constant 0 : index
    %0 = vector.load %arg1[%c0, %c0_0] : memref<64x2048xbf16, #tpu.memory_space<vmem>>, vector<64x2048xbf16>
    %c0_1 = arith.constant 0 : index
    %c0_2 = arith.constant 0 : index
    %1 = vector.load %arg2[%c0_1, %c0_2] : memref<2048x32xbf16, #tpu.memory_space<vmem>>, vector<2048x32xbf16>
    %cst = arith.constant dense<0.000000e+00> : vector<64x32xf32>
    %2 = tpu.matmul %0, %1, %cst {dimension_numbers = #tpu.dot_dimension_numbers<[1], [0], [0], [1], [0, 0, 1, 1], [], []>} : vector<64x2048xbf16>, vector<2048x32xbf16>, vector<64x32xf32> -> vector<64x32xf32>
    %c0_3 = arith.constant 0 : index
    %c0_4 = arith.constant 0 : index
    %3 = vector.load %arg3[%c0_3, %c0_4] : memref<64x1xf32, #tpu.memory_space<vmem>>, vector<64x1xf32>
    %4 = vector.broadcast %3 : vector<64x1xf32> to vector<64x32xf32>
    %5 = arith.addf %2, %4 : vector<64x32xf32>
    %cst_5 = arith.constant dense<0.000000e+00> : vector<64xf32>
    %6 = vector.multi_reduction <add>, %5, %cst_5 [1] : vector<64x32xf32> to vector<64xf32>
    %7 = vector.shape_cast %6 : vector<64xf32> to vector<64x1xf32>
    %cst_6 = arith.constant 3.125000e-02 : f32
    %8 = vector.broadcast %cst_6 : f32 to vector<64x1xf32>
    %9 = arith.mulf %7, %8 : vector<64x1xf32>
    %10 = vector.broadcast %9 : vector<64x1xf32> to vector<64x32xf32>
    %11 = arith.subf %5, %10 : vector<64x32xf32>
    %12 = arith.mulf %11, %11 : vector<64x32xf32>
    %cst_7 = arith.constant dense<0.000000e+00> : vector<64xf32>
    %13 = vector.multi_reduction <add>, %12, %cst_7 [1] : vector<64x32xf32> to vector<64xf32>
    %14 = vector.shape_cast %13 : vector<64xf32> to vector<64x1xf32>
    %cst_8 = arith.constant 3.125000e-02 : f32
    %15 = vector.broadcast %cst_8 : f32 to vector<64x1xf32>
    %16 = arith.mulf %14, %15 : vector<64x1xf32>
    %c0_9 = arith.constant 0 : index
    %c0_10 = arith.constant 0 : index
    %17 = vector.load %arg4[%c0_9, %c0_10] : memref<64x1xf32, #tpu.memory_space<vmem>>, vector<64x1xf32>
    %cst_11 = arith.constant 9.99999974E-6 : f32
    %18 = vector.broadcast %cst_11 : f32 to vector<64x1xf32>
    %19 = arith.addf %16, %18 : vector<64x1xf32>
    %20 = math.rsqrt %19 : vector<64x1xf32>
    %21 = arith.mulf %17, %20 : vector<64x1xf32>
    %22 = vector.broadcast %21 : vector<64x1xf32> to vector<64x32xf32>
    %23 = arith.mulf %11, %22 : vector<64x32xf32>
    %c0_12 = arith.constant 0 : index
    %c0_13 = arith.constant 0 : index
    %24 = vector.load %arg5[%c0_12, %c0_13] : memref<64x1xf32, #tpu.memory_space<vmem>>, vector<64x1xf32>
    %25 = vector.broadcast %24 : vector<64x1xf32> to vector<64x32xf32>
    %26 = arith.addf %23, %25 : vector<64x32xf32>
    %cst_14 = arith.constant 0.000000e+00 : f32
    %27 = vector.broadcast %cst_14 : f32 to vector<64x32xf32>
    %28 = arith.cmpf oge, %26, %27 : vector<64x32xf32>
    %cst_15 = arith.constant 2.000000e-01 : f32
    %29 = vector.broadcast %cst_15 : f32 to vector<64x32xf32>
    %30 = arith.mulf %29, %26 : vector<64x32xf32>
    %31 = arith.select %28, %26, %30 : vector<64x32xi1>, vector<64x32xf32>
    %32 = arith.truncf %31 : vector<64x32xf32> to vector<64x32xbf16>
    %c0_16 = arith.constant 0 : index
    %c0_17 = arith.constant 0 : index
    %33 = vector.load %arg6[%c0_16, %c0_17] : memref<64x32xbf16, #tpu.memory_space<vmem>>, vector<64x32xbf16>
    tpu.vector_store %arg6[%c0_16, %c0_17], %32 {strides = array<i32>} : memref<64x32xbf16, #tpu.memory_space<vmem>>, vector<64x32xbf16>,
    return
  }
  func.func @transform_0(%arg0: i32) -> (i32, i32) {
    %c0_i32 = arith.constant 0 : i32
    %c0_i32_0 = arith.constant 0 : i32
    %c0_i32_1 = arith.constant 0 : i32
    return %c0_i32, %c0_i32_0 : i32, i32
  }
  func.func @transform_1(%arg0: i32) -> (i32, i32) {
    %c0_i32 = arith.constant 0 : i32
    %c0_i32_0 = arith.constant 0 : i32
    %c0_i32_1 = arith.constant 0 : i32
    return %c0_i32, %c0_i32_0 : i32, i32
  }
  func.func @transform_2(%arg0: i32) -> (i32, i32) {
    %c0_i32 = arith.constant 0 : i32
    %c0_i32_0 = arith.constant 0 : i32
    %c0_i32_1 = arith.constant 0 : i32
    return %c0_i32, %c0_i32_0 : i32, i32
  }
  func.func @transform_3(%arg0: i32) -> (i32, i32) {
    %c0_i32 = arith.constant 0 : i32
    %c0_i32_0 = arith.constant 0 : i32
    %c0_i32_1 = arith.constant 0 : i32
    return %c0_i32, %c0_i32_0 : i32, i32
  }
  func.func @transform_4(%arg0: i32) -> (i32, i32) {
    %c0_i32 = arith.constant 0 : i32
    %c0_i32_0 = arith.constant 0 : i32
    %c0_i32_1 = arith.constant 0 : i32
    return %c0_i32, %c0_i32_0 : i32, i32
  }
  func.func @transform_5(%arg0: i32) -> (i32, i32) {
    %c0_i32 = arith.constant 0 : i32
    %c0_i32_0 = arith.constant 0 : i32
    %c0_i32_1 = arith.constant 0 : i32
    return %c0_i32, %c0_i32_0 : i32, i32
  }
}

module attributes {stable_mosaic.version = 11 : i64} {
  func.func @_conv_act_kernel(%arg0: i32, %arg1: memref<1x4096xbf16, #tpu.memory_space<vmem>>, %arg2: memref<4096x2xbf16, #tpu.memory_space<vmem>>, %arg3: memref<1x1xf32, #tpu.memory_space<vmem>>, %arg4: memref<1x2xf32, #tpu.memory_space<vmem>>) attributes {dimension_semantics = [#tpu.dimension_semantics<parallel>], iteration_bounds = array<i64: 1>, scalar_prefetch = 0 : i64, scratch_operands = 0 : i64, tpu.core_type = #tpu.core_type<tc>, window_params = [{pipeline_mode = #tpu.pipeline_mode<synchronous>, transform_indices = @transform_0, window_bounds = array<i64: 1, 4096>}, {pipeline_mode = #tpu.pipeline_mode<synchronous>, transform_indices = @transform_1, window_bounds = array<i64: 4096, 2>}, {pipeline_mode = #tpu.pipeline_mode<synchronous>, transform_indices = @transform_2, window_bounds = array<i64: 1, 1>}, {pipeline_mode = #tpu.pipeline_mode<synchronous>, transform_indices = @transform_3, window_bounds = array<i64: 1, 2>}]} {
    %c0 = arith.constant 0 : index
    %c0_0 = arith.constant 0 : index
    %0 = vector.load %arg1[%c0, %c0_0] : memref<1x4096xbf16, #tpu.memory_space<vmem>>, vector<1x4096xbf16>
    %c0_1 = arith.constant 0 : index
    %c0_2 = arith.constant 0 : index
    %1 = vector.load %arg2[%c0_1, %c0_2] : memref<4096x2xbf16, #tpu.memory_space<vmem>>, vector<4096x2xbf16>
    %cst = arith.constant dense<0.000000e+00> : vector<1x2xf32>
    %2 = tpu.matmul %0, %1, %cst {dimension_numbers = #tpu.dot_dimension_numbers<[1], [0], [0], [1], [0, 0, 1, 1], [], []>} : vector<1x4096xbf16>, vector<4096x2xbf16>, vector<1x2xf32> -> vector<1x2xf32>
    %c0_3 = arith.constant 0 : index
    %c0_4 = arith.constant 0 : index
    %3 = vector.load %arg3[%c0_3, %c0_4] : memref<1x1xf32, #tpu.memory_space<vmem>>, vector<1x1xf32>
    %4 = vector.broadcast %3 : vector<1x1xf32> to vector<1x2xf32>
    %5 = arith.addf %2, %4 : vector<1x2xf32>
    %c0_5 = arith.constant 0 : index
    %c0_6 = arith.constant 0 : index
    %6 = vector.load %arg4[%c0_5, %c0_6] : memref<1x2xf32, #tpu.memory_space<vmem>>, vector<1x2xf32>
    tpu.vector_store %arg4[%c0_5, %c0_6], %5 {strides = array<i32>} : memref<1x2xf32, #tpu.memory_space<vmem>>, vector<1x2xf32>,
    return
  }
  func.func @transform_0(%arg0: i32) -> (i32, i32) {
    %c0_i32 = arith.constant 0 : i32
    %c0_i32_0 = arith.constant 0 : i32
    %c0_i32_1 = arith.constant 0 : i32
    return %c0_i32, %c0_i32_0 : i32, i32
  }
  func.func @transform_1(%arg0: i32) -> (i32, i32) {
    %c0_i32 = arith.constant 0 : i32
    %c0_i32_0 = arith.constant 0 : i32
    %c0_i32_1 = arith.constant 0 : i32
    return %c0_i32, %c0_i32_0 : i32, i32
  }
  func.func @transform_2(%arg0: i32) -> (i32, i32) {
    %c0_i32 = arith.constant 0 : i32
    %c0_i32_0 = arith.constant 0 : i32
    %c0_i32_1 = arith.constant 0 : i32
    return %c0_i32, %c0_i32_0 : i32, i32
  }
  func.func @transform_3(%arg0: i32) -> (i32, i32) {
    %c0_i32 = arith.constant 0 : i32
    %c0_i32_0 = arith.constant 0 : i32
    %c0_i32_1 = arith.constant 0 : i32
    return %c0_i32, %c0_i32_0 : i32, i32
  }
}

</mosaic_0001>

<llo_original>
// kernel: _lambda_.4
$region0: #{_lambda_.4}
  #allocation0 [shape = 'u32[]', space=smem, size = 0x4, offset = 0x4, fixed_abs, tag = 'smem constant byte address 0x4 - core index']
  #allocation1 [shape = 'u32[72,128]{1,0:T(1,128)}', space=vmem, size = 0x9000, scoped, tag = 'internal scratch']
  %s0 = inlined_call_operand.vmem [shape: bf16[16,192], index: 0, kind: input, shape index: {}]
  %s1 = inlined_call_operand.vmem [shape: bf16[192,1280], index: 1, kind: input, shape index: {}]
  %s2 = inlined_call_operand.vmem [shape: f32[16,1], index: 2, kind: input, shape index: {}]
  %s3 = inlined_call_operand.vmem [shape: bf16[16,1280], index: 3, kind: output, shape index: {}]
  %s4 = sld [smem:[#allocation0]]
  $region22: #{_lambda_.4} parent=0
    _
  %s6 = ssub.s32 1, %s4
  %s7 = scalar_select 0, %s6, %s4
  // Predicated region
  $region2: #{_lambda_.4} parent=0 // pred_check
    _
  $region3: #{_lambda_.4} parent=0 // pred_check_branch
    %9 = sbr.rel (0) target = $region5
  $region4: #{_lambda_.4} parent=0 // pred_region
    _
  $region5: #{_lambda_.4} parent=0 // pred_fallthru
    _
  // Predicated region
  $region6: #{_lambda_.4} parent=0 // pred_check
    _
  $region7: #{_lambda_.4} parent=0 // pred_check_branch
    %11 = sbr.rel (0) target = $region9
  $region8: #{_lambda_.4} parent=0 // pred_region
    _
  $region9: #{_lambda_.4} parent=0 // pred_fallthru
    _
  // Predicated region
  $region10: #{_lambda_.4} parent=0 // pred_check
    _
  $region11: #{_lambda_.4} parent=0 // pred_check_branch
    %13 = sbr.rel (0) target = $region13
  $region12: #{_lambda_.4} parent=0 // pred_region
    _
  $region13: #{_lambda_.4} parent=0 // pred_fallthru
    _
  %v15 = vld [vmem:[%s0] sm:$0xff]
  %v16 = vld [vmem:[%s0 + $0x8] sm:$0xff]
  %v17 = vld [vmem:[%s1] sm:$0xff]
  %v18 = vld [vmem:[%s1 + $0x8] sm:$0xff]
  %v19 = vld [vmem:[%s1 + $0x10] sm:$0xff]
  %v20 = vld [vmem:[%s1 + $0x18] sm:$0xff]
  %v21 = vld [vmem:[%s1 + $0x20] sm:$0xff]
  %v22 = vld [vmem:[%s1 + $0x28] sm:$0xff]
  %v23 = vld [vmem:[%s1 + $0x30] sm:$0xff]
  %v24 = vld [vmem:[%s1 + $0x38] sm:$0xff]
  %v25 = vld [vmem:[%s1 + $0x40] sm:$0xff]
  %v26 = vld [vmem:[%s1 + $0x48] sm:$0xff]
  %v27 = vld [vmem:[%s1 + $0x50] sm:$0xff]
  %v28 = vld [vmem:[%s1 + $0x58] sm:$0xff]
  %v29 = vld [vmem:[%s1 + $0x60] sm:$0xff]
  %v30 = vld [vmem:[%s1 + $0x68] sm:$0xff]
  %v31 = vld [vmem:[%s1 + $0x70] sm:$0xff]
  %v32 = vld [vmem:[%s1 + $0x78] sm:$0xff]
  %v33 = vld [vmem:[%s1 + $0x80] sm:$0xff]
  %v34 = vld [vmem:[%s1 + $0x88] sm:$0xff]
  %v35 = vld [vmem:[%s1 + $0x90] sm:$0xff]
  %v36 = vld [vmem:[%s1 + $0x98] sm:$0xff]
  %v37 = vld [vmem:[%s1 + $0xa0] sm:$0xff]
  %v38 = vld [vmem:[%s1 + $0xa8] sm:$0xff]
  %v39 = vld [vmem:[%s1 + $0xb0] sm:$0xff]
  %v40 = vld [vmem:[%s1 + $0xb8] sm:$0xff]
  %v41 = vld [vmem:[%s1 + $0xc0] sm:$0xff]
  %v42 = vld [vmem:[%s1 + $0xc8] sm:$0xff]
  %v43 = vld [vmem:[%s1 + $0xd0] sm:$0xff]
  %v44 = vld [vmem:[%s1 + $0xd8] sm:$0xff]
  %v45 = vld [vmem:[%s1 + $0xe0] sm:$0xff]
  %v46 = vld [vmem:[%s1 + $0xe8] sm:$0xff]
  %v47 = vld [vmem:[%s1 + $0xf0] sm:$0xff]
  %v48 = vld [vmem:[%s1 + $0xf8] sm:$0xff]
  %v49 = vld [vmem:[%s1 + $0x100] sm:$0xff]
  %v50 = vld [vmem:[%s1 + $0x108] sm:$0xff]
  %v51 = vld [vmem:[%s1 + $0x110] sm:$0xff]
  %v52 = vld [vmem:[%s1 + $0x118] sm:$0xff]
  %v53 = vld [vmem:[%s1 + $0x120] sm:$0xff]
  %v54 = vld [vmem:[%s1 + $0x128] sm:$0xff]
  %v55 = vld [vmem:[%s1 + $0x130] sm:$0xff]
  %v56 = vld [vmem:[%s1 + $0x138] sm:$0xff]
  %v57 = vld [vmem:[%s1 + $0x140] sm:$0xff]
  %v58 = vld [vmem:[%s1 + $0x148] sm:$0xff]
  %v59 = vld [vmem:[%s1 + $0x150] sm:$0xff]
  %v60 = vld [vmem:[%s1 + $0x158] sm:$0xff]
  %v61 = vld [vmem:[%s1 + $0x160] sm:$0xff]
  %v62 = vld [vmem:[%s1 + $0x168] sm:$0xff]
  %v63 = vld [vmem:[%s1 + $0x170] sm:$0xff]
  %v64 = vld [vmem:[%s1 + $0x178] sm:$0xff]
  %v65 = vld [vmem:[%s1 + $0x180] sm:$0xff]
  %v66 = vld [vmem:[%s1 + $0x188] sm:$0xff]
  %v67 = vld [vmem:[%s1 + $0x190] sm:$0xff]
  %v68 = vld [vmem:[%s1 + $0x198] sm:$0xff]
  %v69 = vld [vmem:[%s1 + $0x1a0] sm:$0xff]
  %v70 = vld [vmem:[%s1 + $0x1a8] sm:$0xff]
  %v71 = vld [vmem:[%s1 + $0x1b0] sm:$0xff]
  %v72 = vld [vmem:[%s1 + $0x1b8] sm:$0xff]
  %v73 = vld [vmem:[%s1 + $0x1c0] sm:$0xff]
  %v74 = vld [vmem:[%s1 + $0x1c8] sm:$0xff]
  %v75 = vld [vmem:[%s1 + $0x1d0] sm:$0xff]
  %v76 = vld [vmem:[%s1 + $0x1d8] sm:$0xff]
  %v77 = vld [vmem:[%s1 + $0x1e0] sm:$0xff]
  %v78 = vld [vmem:[%s1 + $0x1e8] sm:$0xff]
  %v79 = vld [vmem:[%s1 + $0x1f0] sm:$0xff]
  %v80 = vld [vmem:[%s1 + $0x1f8] sm:$0xff]
  %v81 = vld [vmem:[%s1 + $0x200] sm:$0xff]
  %v82 = vld [vmem:[%s1 + $0x208] sm:$0xff]
  %v83 = vld [vmem:[%s1 + $0x210] sm:$0xff]
  %v84 = vld [vmem:[%s1 + $0x218] sm:$0xff]
  %v85 = vld [vmem:[%s1 + $0x220] sm:$0xff]
  %v86 = vld [vmem:[%s1 + $0x228] sm:$0xff]
  %v87 = vld [vmem:[%s1 + $0x230] sm:$0xff]
  %v88 = vld [vmem:[%s1 + $0x238] sm:$0xff]
  %v89 = vld [vmem:[%s1 + $0x240] sm:$0xff]
  %v90 = vld [vmem:[%s1 + $0x248] sm:$0xff]
  %v91 = vld [vmem:[%s1 + $0x250] sm:$0xff]
  %v92 = vld [vmem:[%s1 + $0x258] sm:$0xff]
  %v93 = vld [vmem:[%s1 + $0x260] sm:$0xff]
  %v94 = vld [vmem:[%s1 + $0x268] sm:$0xff]
  %v95 = vld [vmem:[%s1 + $0x270] sm:$0xff]
  %v96 = vld [vmem:[%s1 + $0x278] sm:$0xff]
  %v97 = vld [vmem:[%s1 + $0x280] sm:$0xff]
  %v98 = vld [vmem:[%s1 + $0x288] sm:$0xff]
  %v99 = vld [vmem:[%s1 + $0x290] sm:$0xff]
  %v100 = vld [vmem:[%s1 + $0x298] sm:$0xff]
  %v101 = vld [vmem:[%s1 + $0x2a0] sm:$0xff]
  %v102 = vld [vmem:[%s1 + $0x2a8] sm:$0xff]
  %v103 = vld [vmem:[%s1 + $0x2b0] sm:$0xff]
  %v104 = vld [vmem:[%s1 + $0x2b8] sm:$0xff]
  %v105 = vld [vmem:[%s1 + $0x2c0] sm:$0xff]
  %v106 = vld [vmem:[%s1 + $0x2c8] sm:$0xff]
  %v107 = vld [vmem:[%s1 + $0x2d0] sm:$0xff]
  %v108 = vld [vmem:[%s1 + $0x2d8] sm:$0xff]
  %v109 = vld [vmem:[%s1 + $0x2e0] sm:$0xff]
  %v110 = vld [vmem:[%s1 + $0x2e8] sm:$0xff]
  %v111 = vld [vmem:[%s1 + $0x2f0] sm:$0xff]
  %v112 = vld [vmem:[%s1 + $0x2f8] sm:$0xff]
  %v113 = vld [vmem:[%s1 + $0x300] sm:$0xff]
  %v114 = vld [vmem:[%s1 + $0x308] sm:$0xff]
  %v115 = vld [vmem:[%s1 + $0x310] sm:$0xff]
  %v116 = vld [vmem:[%s1 + $0x318] sm:$0xff]
  %v117 = vld [vmem:[%s1 + $0x320] sm:$0xff]
  %v118 = vld [vmem:[%s1 + $0x328] sm:$0xff]
  %v119 = vld [vmem:[%s1 + $0x330] sm:$0xff]
  %v120 = vld [vmem:[%s1 + $0x338] sm:$0xff]
  %v121 = vld [vmem:[%s1 + $0x340] sm:$0xff]
  %v122 = vld [vmem:[%s1 + $0x348] sm:$0xff]
  %v123 = vld [vmem:[%s1 + $0x350] sm:$0xff]
  %v124 = vld [vmem:[%s1 + $0x358] sm:$0xff]
  %v125 = vld [vmem:[%s1 + $0x360] sm:$0xff]
  %v126 = vld [vmem:[%s1 + $0x368] sm:$0xff]
  %v127 = vld [vmem:[%s1 + $0x370] sm:$0xff]
  %v128 = vld [vmem:[%s1 + $0x378] sm:$0xff]
  %v129 = vld [vmem:[%s1 + $0x380] sm:$0xff]
  %v130 = vld [vmem:[%s1 + $0x388] sm:$0xff]
  %v131 = vld [vmem:[%s1 + $0x390] sm:$0xff]
  %v132 = vld [vmem:[%s1 + $0x398] sm:$0xff]
  %v133 = vld [vmem:[%s1 + $0x3a0] sm:$0xff]
  %v134 = vld [vmem:[%s1 + $0x3a8] sm:$0xff]
  %v135 = vld [vmem:[%s1 + $0x3b0] sm:$0xff]
  %v136 = vld [vmem:[%s1 + $0x3b8] sm:$0xff]
  %v137 = vld [vmem:[%s2] sm:$0xff]
  %v138 = vld [vmem:[%s2 + $0x8] sm:$0xff]
  %140 = vset.pattern.permute.xlu0 0
  %141 = vperm.xlu0 %140, %v137
  %v142 = vpop.permute.xlu0 %141
  %145 = vset.pattern.permute.xlu0 0
  %146 = vperm.xlu0 %145, %v138
  %v147 = vpop.permute.xlu0 %146
  %v151 = vunpack.c.l.b16 %v15
  %v152 = vunpack.c.h.b16 %v15
  %v153 = vunpack.c.l.b16 %v16
  %v154 = vunpack.c.h.b16 %v16
  %v155 = vpack.c.b16 %v153, %v151
  %v156 = vpack.c.b16 %v154, %v152
  %v278 = vunpack.c.l.b16 %v17
  %v279 = vunpack.c.h.b16 %v17
  %v280 = vunpack.c.l.b16 %v18
  %v281 = vunpack.c.h.b16 %v18
  %v282 = vunpack.c.l.b16 %v19
  %v283 = vunpack.c.h.b16 %v19
  %v284 = vunpack.c.l.b16 %v20
  %v285 = vunpack.c.h.b16 %v20
  %v286 = vunpack.c.l.b16 %v21
  %v287 = vunpack.c.h.b16 %v21
  %v288 = vunpack.c.l.b16 %v22
  %v289 = vunpack.c.h.b16 %v22
  %v290 = vunpack.c.l.b16 %v23
  %v291 = vunpack.c.h.b16 %v23
  %v292 = vunpack.c.l.b16 %v24
  %v293 = vunpack.c.h.b16 %v24
  %v294 = vunpack.c.l.b16 %v25
  %v295 = vunpack.c.h.b16 %v25
  %v296 = vunpack.c.l.b16 %v26
  %v297 = vunpack.c.h.b16 %v26
  %v298 = vunpack.c.l.b16 %v27
  %v299 = vunpack.c.h.b16 %v27
  %v300 = vunpack.c.l.b16 %v28
  %v301 = vunpack.c.h.b16 %v28
  %v302 = vunpack.c.l.b16 %v29
  %v303 = vunpack.c.h.b16 %v29
  %v304 = vunpack.c.l.b16 %v30
  %v305 = vunpack.c.h.b16 %v30
  %v306 = vunpack.c.l.b16 %v31
  %v307 = vunpack.c.h.b16 %v31
  %v308 = vunpack.c.l.b16 %v32
  %v309 = vunpack.c.h.b16 %v32
  %v310 = vunpack.c.l.b16 %v33
  %v311 = vunpack.c.h.b16 %v33
  %v312 = vunpack.c.l.b16 %v34
  %v313 = vunpack.c.h.b16 %v34
  %v314 = vunpack.c.l.b16 %v35
  %v315 = vunpack.c.h.b16 %v35
  %v316 = vunpack.c.l.b16 %v36
  %v317 = vunpack.c.h.b16 %v36
  %v318 = vunpack.c.l.b16 %v37
  %v319 = vunpack.c.h.b16 %v37
  %v320 = vunpack.c.l.b16 %v38
  %v321 = vunpack.c.h.b16 %v38
  %v322 = vunpack.c.l.b16 %v39
  %v323 = vunpack.c.h.b16 %v39
  %v324 = vunpack.c.l.b16 %v40
  %v325 = vunpack.c.h.b16 %v40
  %v326 = vunpack.c.l.b16 %v41
  %v327 = vunpack.c.h.b16 %v41
  %v328 = vunpack.c.l.b16 %v42
  %v329 = vunpack.c.h.b16 %v42
  %v330 = vunpack.c.l.b16 %v43
  %v331 = vunpack.c.h.b16 %v43
  %v332 = vunpack.c.l.b16 %v44
  %v333 = vunpack.c.h.b16 %v44
  %v334 = vunpack.c.l.b16 %v45
  %v335 = vunpack.c.h.b16 %v45
  %v336 = vunpack.c.l.b16 %v46
  %v337 = vunpack.c.h.b16 %v46
  %v338 = vunpack.c.l.b16 %v47
  %v339 = vunpack.c.h.b16 %v47
  %v340 = vunpack.c.l.b16 %v48
  %v341 = vunpack.c.h.b16 %v48
  %v342 = vunpack.c.l.b16 %v49
  %v343 = vunpack.c.h.b16 %v49
  %v344 = vunpack.c.l.b16 %v50
  %v345 = vunpack.c.h.b16 %v50
  %v346 = vunpack.c.l.b16 %v51
  %v347 = vunpack.c.h.b16 %v51
  %v348 = vunpack.c.l.b16 %v52
  %v349 = vunpack.c.h.b16 %v52
  %v350 = vunpack.c.l.b16 %v53
  %v351 = vunpack.c.h.b16 %v53
  %v352 = vunpack.c.l.b16 %v54
  %v353 = vunpack.c.h.b16 %v54
  %v354 = vunpack.c.l.b16 %v55
  %v355 = vunpack.c.h.b16 %v55
  %v356 = vunpack.c.l.b16 %v56
  %v357 = vunpack.c.h.b16 %v56
  %v358 = vunpack.c.l.b16 %v57
  %v359 = vunpack.c.h.b16 %v57
  %v360 = vunpack.c.l.b16 %v58
  %v361 = vunpack.c.h.b16 %v58
  %v362 = vunpack.c.l.b16 %v59
  %v363 = vunpack.c.h.b16 %v59
  %v364 = vunpack.c.l.b16 %v60
  %v365 = vunpack.c.h.b16 %v60
  %v366 = vunpack.c.l.b16 %v61
  %v367 = vunpack.c.h.b16 %v61
  %v368 = vunpack.c.l.b16 %v62
  %v369 = vunpack.c.h.b16 %v62
  %v370 = vunpack.c.l.b16 %v63
  %v371 = vunpack.c.h.b16 %v63
  %v372 = vunpack.c.l.b16 %v64
  %v373 = vunpack.c.h.b16 %v64
  %v374 = vunpack.c.l.b16 %v65
  %v375 = vunpack.c.h.b16 %v65
  %v376 = vunpack.c.l.b16 %v66
  %v377 = vunpack.c.h.b16 %v66
  %v378 = vunpack.c.l.b16 %v67
  %v379 = vunpack.c.h.b16 %v67
  %v380 = vunpack.c.l.b16 %v68
  %v381 = vunpack.c.h.b16 %v68
  %v382 = vunpack.c.l.b16 %v69
  %v383 = vunpack.c.h.b16 %v69
  %v384 = vunpack.c.l.b16 %v70
  %v385 = vunpack.c.h.b16 %v70
  %v386 = vunpack.c.l.b16 %v71
  %v387 = vunpack.c.h.b16 %v71
  %v388 = vunpack.c.l.b16 %v72
  %v389 = vunpack.c.h.b16 %v72
  %v390 = vunpack.c.l.b16 %v73
  %v391 = vunpack.c.h.b16 %v73
  %v392 = vunpack.c.l.b16 %v74
  %v393 = vunpack.c.h.b16 %v74
  %v394 = vunpack.c.l.b16 %v75
  %v395 = vunpack.c.h.b16 %v75
  %v396 = vunpack.c.l.b16 %v76
  %v397 = vunpack.c.h.b16 %v76
  %v398 = vunpack.c.l.b16 %v77
  %v399 = vunpack.c.h.b16 %v77
  %v400 = vunpack.c.l.b16 %v78
  %v401 = vunpack.c.h.b16 %v78
  %v402 = vunpack.c.l.b16 %v79
  %v403 = vunpack.c.h.b16 %v79
  %v404 = vunpack.c.l.b16 %v80
  %v405 = vunpack.c.h.b16 %v80
  %v406 = vunpack.c.l.b16 %v81
  %v407 = vunpack.c.h.b16 %v81
  %v408 = vunpack.c.l.b16 %v82
  %v409 = vunpack.c.h.b16 %v82
  %v410 = vunpack.c.l.b16 %v83
  %v411 = vunpack.c.h.b16 %v83
  %v412 = vunpack.c.l.b16 %v84
  %v413 = vunpack.c.h.b16 %v84
  %v414 = vunpack.c.l.b16 %v85
  %v415 = vunpack.c.h.b16 %v85
  %v416 = vunpack.c.l.b16 %v86
  %v417 = vunpack.c.h.b16 %v86
  %v418 = vunpack.c.l.b16 %v87
  %v419 = vunpack.c.h.b16 %v87
  %v420 = vunpack.c.l.b16 %v88
  %v421 = vunpack.c.h.b16 %v88
  %v422 = vunpack.c.l.b16 %v89
  %v423 = vunpack.c.h.b16 %v89
  %v424 = vunpack.c.l.b16 %v90
  %v425 = vunpack.c.h.b16 %v90
  %v426 = vunpack.c.l.b16 %v91
  %v427 = vunpack.c.h.b16 %v91
  %v428 = vunpack.c.l.b16 %v92
  %v429 = vunpack.c.h.b16 %v92
  %v430 = vunpack.c.l.b16 %v93
  %v431 = vunpack.c.h.b16 %v93
  %v432 = vunpack.c.l.b16 %v94
  %v433 = vunpack.c.h.b16 %v94
  %v434 = vunpack.c.l.b16 %v95
  %v435 = vunpack.c.h.b16 %v95
  %v436 = vunpack.c.l.b16 %v96
  %v437 = vunpack.c.h.b16 %v96
  %v438 = vunpack.c.l.b16 %v97
  %v439 = vunpack.c.h.b16 %v97
  %v440 = vunpack.c.l.b16 %v98
  %v441 = vunpack.c.h.b16 %v98
  %v442 = vunpack.c.l.b16 %v99
  %v443 = vunpack.c.h.b16 %v99
  %v444 = vunpack.c.l.b16 %v100
  %v445 = vunpack.c.h.b16 %v100
  %v446 = vunpack.c.l.b16 %v101
  %v447 = vunpack.c.h.b16 %v101
  %v448 = vunpack.c.l.b16 %v102
  %v449 = vunpack.c.h.b16 %v102
  %v450 = vunpack.c.l.b16 %v103
  %v451 = vunpack.c.h.b16 %v103
  %v452 = vunpack.c.l.b16 %v104
  %v453 = vunpack.c.h.b16 %v104
  %v454 = vunpack.c.l.b16 %v105
  %v455 = vunpack.c.h.b16 %v105
  %v456 = vunpack.c.l.b16 %v106
  %v457 = vunpack.c.h.b16 %v106
  %v458 = vunpack.c.l.b16 %v107
  %v459 = vunpack.c.h.b16 %v107
  %v460 = vunpack.c.l.b16 %v108
  %v461 = vunpack.c.h.b16 %v108
  %v462 = vunpack.c.l.b16 %v109
  %v463 = vunpack.c.h.b16 %v109
  %v464 = vunpack.c.l.b16 %v110
  %v465 = vunpack.c.h.b16 %v110
  %v466 = vunpack.c.l.b16 %v111
  %v467 = vunpack.c.h.b16 %v111
  %v468 = vunpack.c.l.b16 %v112
  %v469 = vunpack.c.h.b16 %v112
  %v470 = vunpack.c.l.b16 %v113
  %v471 = vunpack.c.h.b16 %v113
  %v472 = vunpack.c.l.b16 %v114
  %v473 = vunpack.c.h.b16 %v114
  %v474 = vunpack.c.l.b16 %v115
  %v475 = vunpack.c.h.b16 %v115
  %v476 = vunpack.c.l.b16 %v116
  %v477 = vunpack.c.h.b16 %v116
  %v478 = vunpack.c.l.b16 %v117
  %v479 = vunpack.c.h.b16 %v117
  %v480 = vunpack.c.l.b16 %v118
  %v481 = vunpack.c.h.b16 %v118
  %v482 = vunpack.c.l.b16 %v119
  %v483 = vunpack.c.h.b16 %v119
  %v484 = vunpack.c.l.b16 %v120
  %v485 = vunpack.c.h.b16 %v120
  %v486 = vunpack.c.l.b16 %v121
  %v487 = vunpack.c.h.b16 %v121
  %v488 = vunpack.c.l.b16 %v122
  %v489 = vunpack.c.h.b16 %v122
  %v490 = vunpack.c.l.b16 %v123
  %v491 = vunpack.c.h.b16 %v123
  %v492 = vunpack.c.l.b16 %v124
  %v493 = vunpack.c.h.b16 %v124
  %v494 = vunpack.c.l.b16 %v125
  %v495 = vunpack.c.h.b16 %v125
  %v496 = vunpack.c.l.b16 %v126
  %v497 = vunpack.c.h.b16 %v126
  %v498 = vunpack.c.l.b16 %v127
  %v499 = vunpack.c.h.b16 %v127
  %v500 = vunpack.c.l.b16 %v128
  %v501 = vunpack.c.h.b16 %v128
  %v502 = vunpack.c.l.b16 %v129
  %v503 = vunpack.c.h.b16 %v129
  %v504 = vunpack.c.l.b16 %v130
  %v505 = vunpack.c.h.b16 %v130
  %v506 = vunpack.c.l.b16 %v131
  %v507 = vunpack.c.h.b16 %v131
  %v508 = vunpack.c.l.b16 %v132
  %v509 = vunpack.c.h.b16 %v132
  %v510 = vunpack.c.l.b16 %v133
  %v511 = vunpack.c.h.b16 %v133
  %v512 = vunpack.c.l.b16 %v134
  %v513 = vunpack.c.h.b16 %v134
  %v514 = vunpack.c.l.b16 %v135
  %v515 = vunpack.c.h.b16 %v135
  %v516 = vunpack.c.l.b16 %v136
  %v517 = vunpack.c.h.b16 %v136
  %v518 = vpack.c.b16 %v288, %v278
  %v519 = vpack.c.b16 %v289, %v279
  %v520 = vpack.c.b16 %v290, %v280
  %v521 = vpack.c.b16 %v291, %v281
  %v522 = vpack.c.b16 %v292, %v282
  %v523 = vpack.c.b16 %v293, %v283
  %v524 = vpack.c.b16 %v294, %v284
  %v525 = vpack.c.b16 %v295, %v285
  %v526 = vpack.c.b16 %v296, %v286
  %v527 = vpack.c.b16 %v297, %v287
  %v528 = vpack.c.b16 %v308, %v298
  %v529 = vpack.c.b16 %v309, %v299
  %v530 = vpack.c.b16 %v310, %v300
  %v531 = vpack.c.b16 %v311, %v301
  %v532 = vpack.c.b16 %v312, %v302
  %v533 = vpack.c.b16 %v313, %v303
  %v534 = vpack.c.b16 %v314, %v304
  %v535 = vpack.c.b16 %v315, %v305
  %v536 = vpack.c.b16 %v316, %v306
  %v537 = vpack.c.b16 %v317, %v307
  %v538 = vpack.c.b16 %v328, %v318
  %v539 = vpack.c.b16 %v329, %v319
  %v540 = vpack.c.b16 %v330, %v320
  %v541 = vpack.c.b16 %v331, %v321
  %v542 = vpack.c.b16 %v332, %v322
  %v543 = vpack.c.b16 %v333, %v323
  %v544 = vpack.c.b16 %v334, %v324
  %v545 = vpack.c.b16 %v335, %v325
  %v546 = vpack.c.b16 %v336, %v326
  %v547 = vpack.c.b16 %v337, %v327
  %v548 = vpack.c.b16 %v348, %v338
  %v549 = vpack.c.b16 %v349, %v339
  %v550 = vpack.c.b16 %v350, %v340
  %v551 = vpack.c.b16 %v351, %v341
  %v552 = vpack.c.b16 %v352, %v342
  %v553 = vpack.c.b16 %v353, %v343
  %v554 = vpack.c.b16 %v354, %v344
  %v555 = vpack.c.b16 %v355, %v345
  %v556 = vpack.c.b16 %v356, %v346
  %v557 = vpack.c.b16 %v357, %v347
  %v558 = vpack.c.b16 %v368, %v358
  %v559 = vpack.c.b16 %v369, %v359
  %v560 = vpack.c.b16 %v370, %v360
  %v561 = vpack.c.b16 %v371, %v361
  %v562 = vpack.c.b16 %v372, %v362
  %v563 = vpack.c.b16 %v373, %v363
  %v564 = vpack.c.b16 %v374, %v364
  %v565 = vpack.c.b16 %v375, %v365
  %v566 = vpack.c.b16 %v376, %v366
  %v567 = vpack.c.b16 %v377, %v367
  %v568 = vpack.c.b16 %v388, %v378
  %v569 = vpack.c.b16 %v389, %v379
  %v570 = vpack.c.b16 %v390, %v380
  %v571 = vpack.c.b16 %v391, %v381
  %v572 = vpack.c.b16 %v392, %v382
  %v573 = vpack.c.b16 %v393, %v383
  %v574 = vpack.c.b16 %v394, %v384
  %v575 = vpack.c.b16 %v395, %v385
  %v576 = vpack.c.b16 %v396, %v386
  %v577 = vpack.c.b16 %v397, %v387
  %v578 = vpack.c.b16 %v408, %v398
  %v579 = vpack.c.b16 %v409, %v399
  %v580 = vpack.c.b16 %v410, %v400
  %v581 = vpack.c.b16 %v411, %v401
  %v582 = vpack.c.b16 %v412, %v402
  %v583 = vpack.c.b16 %v413, %v403
  %v584 = vpack.c.b16 %v414, %v404
  %v585 = vpack.c.b16 %v415, %v405
  %v586 = vpack.c.b16 %v416, %v406
  %v587 = vpack.c.b16 %v417, %v407
  %v588 = vpack.c.b16 %v428, %v418
  %v589 = vpack.c.b16 %v429, %v419
  %v590 = vpack.c.b16 %v430, %v420
  %v591 = vpack.c.b16 %v431, %v421
  %v592 = vpack.c.b16 %v432, %v422
  %v593 = vpack.c.b16 %v433, %v423
  %v594 = vpack.c.b16 %v434, %v424
  %v595 = vpack.c.b16 %v435, %v425
  %v596 = vpack.c.b16 %v436, %v426
  %v597 = vpack.c.b16 %v437, %v427
  %v598 = vpack.c.b16 %v448, %v438
  %v599 = vpack.c.b16 %v449, %v439
  %v600 = vpack.c.b16 %v450, %v440
  %v601 = vpack.c.b16 %v451, %v441
  %v602 = vpack.c.b16 %v452, %v442
  %v603 = vpack.c.b16 %v453, %v443
  %v604 = vpack.c.b16 %v454, %v444
  %v605 = vpack.c.b16 %v455, %v445
  %v606 = vpack.c.b16 %v456, %v446
  %v607 = vpack.c.b16 %v457, %v447
  %v608 = vpack.c.b16 %v468, %v458
  %v609 = vpack.c.b16 %v469, %v459
  %v610 = vpack.c.b16 %v470, %v460
  %v611 = vpack.c.b16 %v471, %v461
  %v612 = vpack.c.b16 %v472, %v462
  %v613 = vpack.c.b16 %v473, %v463
  %v614 = vpack.c.b16 %v474, %v464
  %v615 = vpack.c.b16 %v475, %v465
  %v616 = vpack.c.b16 %v476, %v466
  %v617 = vpack.c.b16 %v477, %v467
  %v618 = vpack.c.b16 %v488, %v478
  %v619 = vpack.c.b16 %v489, %v479
  %v620 = vpack.c.b16 %v490, %v480
  %v621 = vpack.c.b16 %v491, %v481
  %v622 = vpack.c.b16 %v492, %v482
  %v623 = vpack.c.b16 %v493, %v483
  %v624 = vpack.c.b16 %v494, %v484
  %v625 = vpack.c.b16 %v495, %v485
  %v626 = vpack.c.b16 %v496, %v486
  %v627 = vpack.c.b16 %v497, %v487
  %v628 = vpack.c.b16 %v508, %v498
  %v629 = vpack.c.b16 %v509, %v499
  %v630 = vpack.c.b16 %v510, %v500
  %v631 = vpack.c.b16 %v511, %v501
  %v632 = vpack.c.b16 %v512, %v502
  %v633 = vpack.c.b16 %v513, %v503
  %v634 = vpack.c.b16 %v514, %v504
  %v635 = vpack.c.b16 %v515, %v505
  %v636 = vpack.c.b16 %v516, %v506
  %v637 = vpack.c.b16 %v517, %v507
  %vm758 = vcmask 523264
  %v760 = vsel %vm758, %v156, 0
  %762 = vmatpush.bf16.msra.mxu0 %v588
  %763 = vmatpush.bf16.msra.mxu0 %v578
  %764 = vmatpush.bf16.msra.mxu0 %v568
  %765 = vmatpush.bf16.msra.mxu0 %v558
  %766 = vmatpush.bf16.msra.mxu0 %v548
  %767 = vmatpush.bf16.msra.mxu0 %v538
  %768 = vmatpush.bf16.msra.mxu0 %v528
  %769 = vmatpush.bf16.msra.mxu0 %v518
  %770 = vmatmul.bf16.gmra.mxu0 %v155
  %v771 = vpop.f32.mrf.mxu0
  %v772 = vadd.f32 %v142, %v771
  %v773 = vpop.f32.mrf.mxu0
  %v774 = vadd.f32 %v147, %v773
  %775 = vdwg.mxu0
  %776 = vmatpush.bf16.msra.mxu0 0
  %777 = vmatpush.bf16.msra.mxu0 0
  %778 = vmatpush.bf16.msra.mxu0 0
  %779 = vmatpush.bf16.msra.mxu0 0
  %780 = vmatpush.bf16.msra.mxu0 %v628
  %781 = vmatpush.bf16.msra.mxu0 %v618
  %782 = vmatpush.bf16.msra.mxu0 %v608
  %783 = vmatpush.bf16.msra.mxu0 %v598
  %784 = vmatmul.bf16.gmra.mxu0 %v760
  %v785 = vpop.f32.mrf.mxu0
  %v786 = vadd.f32 %v772, %v785
  %v787 = vpop.f32.mrf.mxu0
  %v788 = vadd.f32 %v774, %v787
  %789 = vdwg.mxu0
  %790 = vmatpush.bf16.msra.mxu0 %v589
  %791 = vmatpush.bf16.msra.mxu0 %v579
  %792 = vmatpush.bf16.msra.mxu0 %v569
  %793 = vmatpush.bf16.msra.mxu0 %v559
  %794 = vmatpush.bf16.msra.mxu0 %v549
  %795 = vmatpush.bf16.msra.mxu0 %v539
  %796 = vmatpush.bf16.msra.mxu0 %v529
  %797 = vmatpush.bf16.msra.mxu0 %v519
  %798 = vmatmul.bf16.gmra.mxu0 %v155
  %v799 = vpop.f32.mrf.mxu0
  %v800 = vadd.f32 %v142, %v799
  %v801 = vpop.f32.mrf.mxu0
  %v802 = vadd.f32 %v147, %v801
  %803 = vdwg.mxu0
  %804 = vmatpush.bf16.msra.mxu0 0
  %805 = vmatpush.bf16.msra.mxu0 0
  %806 = vmatpush.bf16.msra.mxu0 0
  %807 = vmatpush.bf16.msra.mxu0 0
  %808 = vmatpush.bf16.msra.mxu0 %v629
  %809 = vmatpush.bf16.msra.mxu0 %v619
  %810 = vmatpush.bf16.msra.mxu0 %v609
  %811 = vmatpush.bf16.msra.mxu0 %v599
  %812 = vmatmul.bf16.gmra.mxu0 %v760
  %v813 = vpop.f32.mrf.mxu0
  %v814 = vadd.f32 %v800, %v813
  %v815 = vpop.f32.mrf.mxu0
  %v816 = vadd.f32 %v802, %v815
  %817 = vdwg.mxu0
  %818 = vmatpush.bf16.msra.mxu0 %v590
  %819 = vmatpush.bf16.msra.mxu0 %v580
  %820 = vmatpush.bf16.msra.mxu0 %v570
  %821 = vmatpush.bf16.msra.mxu0 %v560
  %822 = vmatpush.bf16.msra.mxu0 %v550
  %823 = vmatpush.bf16.msra.mxu0 %v540
  %824 = vmatpush.bf16.msra.mxu0 %v530
  %825 = vmatpush.bf16.msra.mxu0 %v520
  %826 = vmatmul.bf16.gmra.mxu0 %v155
  %v827 = vpop.f32.mrf.mxu0
  %v828 = vadd.f32 %v142, %v827
  %v829 = vpop.f32.mrf.mxu0
  %v830 = vadd.f32 %v147, %v829
  %831 = vdwg.mxu0
  %832 = vmatpush.bf16.msra.mxu0 0
  %833 = vmatpush.bf16.msra.mxu0 0
  %834 = vmatpush.bf16.msra.mxu0 0
  %835 = vmatpush.bf16.msra.mxu0 0
  %836 = vmatpush.bf16.msra.mxu0 %v630
  %837 = vmatpush.bf16.msra.mxu0 %v620
  %838 = vmatpush.bf16.msra.mxu0 %v610
  %839 = vmatpush.bf16.msra.mxu0 %v600
  %840 = vmatmul.bf16.gmra.mxu0 %v760
  %v841 = vpop.f32.mrf.mxu0
  %v842 = vadd.f32 %v828, %v841
  %v843 = vpop.f32.mrf.mxu0
  %v844 = vadd.f32 %v830, %v843
  %845 = vdwg.mxu0
  %846 = vmatpush.bf16.msra.mxu0 %v591
  %847 = vmatpush.bf16.msra.mxu0 %v581
  %848 = vmatpush.bf16.msra.mxu0 %v571
  %849 = vmatpush.bf16.msra.mxu0 %v561
  %850 = vmatpush.bf16.msra.mxu0 %v551
  %851 = vmatpush.bf16.msra.mxu0 %v541
  %852 = vmatpush.bf16.msra.mxu0 %v531
  %853 = vmatpush.bf16.msra.mxu0 %v521
  %854 = vmatmul.bf16.gmra.mxu0 %v155
  %v855 = vpop.f32.mrf.mxu0
  %v856 = vadd.f32 %v142, %v855
  %v857 = vpop.f32.mrf.mxu0
  %v858 = vadd.f32 %v147, %v857
  %859 = vdwg.mxu0
  %860 = vmatpush.bf16.msra.mxu0 0
  %861 = vmatpush.bf16.msra.mxu0 0
  %862 = vmatpush.bf16.msra.mxu0 0
  %863 = vmatpush.bf16.msra.mxu0 0
  %864 = vmatpush.bf16.msra.mxu0 %v631
  %865 = vmatpush.bf16.msra.mxu0 %v621
  %866 = vmatpush.bf16.msra.mxu0 %v611
  %867 = vmatpush.bf16.msra.mxu0 %v601
  %868 = vmatmul.bf16.gmra.mxu0 %v760
  %v869 = vpop.f32.mrf.mxu0
  %v870 = vadd.f32 %v856, %v869
  %v871 = vpop.f32.mrf.mxu0
  %v872 = vadd.f32 %v858, %v871
  %873 = vdwg.mxu0
  %874 = vmatpush.bf16.msra.mxu0 %v592
  %875 = vmatpush.bf16.msra.mxu0 %v582
  %876 = vmatpush.bf16.msra.mxu0 %v572
  %877 = vmatpush.bf16.msra.mxu0 %v562
  %878 = vmatpush.bf16.msra.mxu0 %v552
  %879 = vmatpush.bf16.msra.mxu0 %v542
  %880 = vmatpush.bf16.msra.mxu0 %v532
  %881 = vmatpush.bf16.msra.mxu0 %v522
  %882 = vmatmul.bf16.gmra.mxu0 %v155
  %v883 = vpop.f32.mrf.mxu0
  %v884 = vadd.f32 %v142, %v883
  %v885 = vpop.f32.mrf.mxu0
  %v886 = vadd.f32 %v147, %v885
  %887 = vdwg.mxu0
  %888 = vmatpush.bf16.msra.mxu0 0
  %889 = vmatpush.bf16.msra.mxu0 0
  %890 = vmatpush.bf16.msra.mxu0 0
  %891 = vmatpush.bf16.msra.mxu0 0
  %892 = vmatpush.bf16.msra.mxu0 %v632
  %893 = vmatpush.bf16.msra.mxu0 %v622
  %894 = vmatpush.bf16.msra.mxu0 %v612
  %895 = vmatpush.bf16.msra.mxu0 %v602
  %896 = vmatmul.bf16.gmra.mxu0 %v760
  %v897 = vpop.f32.mrf.mxu0
  %v898 = vadd.f32 %v884, %v897
  %v899 = vpop.f32.mrf.mxu0
  %v900 = vadd.f32 %v886, %v899
  %901 = vdwg.mxu0
  %902 = vmatpush.bf16.msra.mxu0 %v593
  %903 = vmatpush.bf16.msra.mxu0 %v583
  %904 = vmatpush.bf16.msra.mxu0 %v573
  %905 = vmatpush.bf16.msra.mxu0 %v563
  %906 = vmatpush.bf16.msra.mxu0 %v553
  %907 = vmatpush.bf16.msra.mxu0 %v543
  %908 = vmatpush.bf16.msra.mxu0 %v533
  %909 = vmatpush.bf16.msra.mxu0 %v523
  %910 = vmatmul.bf16.gmra.mxu0 %v155
  %v911 = vpop.f32.mrf.mxu0
  %v912 = vadd.f32 %v142, %v911
  %v913 = vpop.f32.mrf.mxu0
  %v914 = vadd.f32 %v147, %v913
  %915 = vdwg.mxu0
  %916 = vmatpush.bf16.msra.mxu0 0
  %917 = vmatpush.bf16.msra.mxu0 0
  %918 = vmatpush.bf16.msra.mxu0 0
  %919 = vmatpush.bf16.msra.mxu0 0
  %920 = vmatpush.bf16.msra.mxu0 %v633
  %921 = vmatpush.bf16.msra.mxu0 %v623
  %922 = vmatpush.bf16.msra.mxu0 %v613
  %923 = vmatpush.bf16.msra.mxu0 %v603
  %924 = vmatmul.bf16.gmra.mxu0 %v760
  %v925 = vpop.f32.mrf.mxu0
  %v926 = vadd.f32 %v912, %v925
  %v927 = vpop.f32.mrf.mxu0
  %v928 = vadd.f32 %v914, %v927
  %929 = vdwg.mxu0
  %930 = vmatpush.bf16.msra.mxu0 %v594
  %931 = vmatpush.bf16.msra.mxu0 %v584
  %932 = vmatpush.bf16.msra.mxu0 %v574
  %933 = vmatpush.bf16.msra.mxu0 %v564
  %934 = vmatpush.bf16.msra.mxu0 %v554
  %935 = vmatpush.bf16.msra.mxu0 %v544
  %936 = vmatpush.bf16.msra.mxu0 %v534
  %937 = vmatpush.bf16.msra.mxu0 %v524
  %938 = vmatmul.bf16.gmra.mxu0 %v155
  %v939 = vpop.f32.mrf.mxu0
  %v940 = vadd.f32 %v142, %v939
  %v941 = vpop.f32.mrf.mxu0
  %v942 = vadd.f32 %v147, %v941
  %943 = vdwg.mxu0
  %944 = vmatpush.bf16.msra.mxu0 0
  %945 = vmatpush.bf16.msra.mxu0 0
  %946 = vmatpush.bf16.msra.mxu0 0
  %947 = vmatpush.bf16.msra.mxu0 0
  %948 = vmatpush.bf16.msra.mxu0 %v634
  %949 = vmatpush.bf16.msra.mxu0 %v624
  %950 = vmatpush.bf16.msra.mxu0 %v614
  %951 = vmatpush.bf16.msra.mxu0 %v604
  %952 = vmatmul.bf16.gmra.mxu0 %v760
  %v953 = vpop.f32.mrf.mxu0
  %v954 = vadd.f32 %v940, %v953
  %v955 = vpop.f32.mrf.mxu0
  %v956 = vadd.f32 %v942, %v955
  %957 = vdwg.mxu0
  %958 = vmatpush.bf16.msra.mxu0 %v595
  %959 = vmatpush.bf16.msra.mxu0 %v585
  %960 = vmatpush.bf16.msra.mxu0 %v575
  %961 = vmatpush.bf16.msra.mxu0 %v565
  %962 = vmatpush.bf16.msra.mxu0 %v555
  %963 = vmatpush.bf16.msra.mxu0 %v545
  %964 = vmatpush.bf16.msra.mxu0 %v535
  %965 = vmatpush.bf16.msra.mxu0 %v525
  %966 = vmatmul.bf16.gmra.mxu0 %v155
  %v967 = vpop.f32.mrf.mxu0
  %v968 = vadd.f32 %v142, %v967
  %v969 = vpop.f32.mrf.mxu0
  %v970 = vadd.f32 %v147, %v969
  %971 = vdwg.mxu0
  %972 = vmatpush.bf16.msra.mxu0 0
  %973 = vmatpush.bf16.msra.mxu0 0
  %974 = vmatpush.bf16.msra.mxu0 0
  %975 = vmatpush.bf16.msra.mxu0 0
  %976 = vmatpush.bf16.msra.mxu0 %v635
  %977 = vmatpush.bf16.msra.mxu0 %v625
  %978 = vmatpush.bf16.msra.mxu0 %v615
  %979 = vmatpush.bf16.msra.mxu0 %v605
  %980 = vmatmul.bf16.gmra.mxu0 %v760
  %v981 = vpop.f32.mrf.mxu0
  %v982 = vadd.f32 %v968, %v981
  %v983 = vpop.f32.mrf.mxu0
  %v984 = vadd.f32 %v970, %v983
  %985 = vdwg.mxu0
  %986 = vmatpush.bf16.msra.mxu0 %v596
  %987 = vmatpush.bf16.msra.mxu0 %v586
  %988 = vmatpush.bf16.msra.mxu0 %v576
  %989 = vmatpush.bf16.msra.mxu0 %v566
  %990 = vmatpush.bf16.msra.mxu0 %v556
  %991 = vmatpush.bf16.msra.mxu0 %v546
  %992 = vmatpush.bf16.msra.mxu0 %v536
  %993 = vmatpush.bf16.msra.mxu0 %v526
  %994 = vmatmul.bf16.gmra.mxu0 %v155
  %v995 = vpop.f32.mrf.mxu0
  %v996 = vadd.f32 %v142, %v995
  %v997 = vpop.f32.mrf.mxu0
  %v998 = vadd.f32 %v147, %v997
  %999 = vdwg.mxu0
  %1000 = vmatpush.bf16.msra.mxu0 0
  %1001 = vmatpush.bf16.msra.mxu0 0
  %1002 = vmatpush.bf16.msra.mxu0 0
  %1003 = vmatpush.bf16.msra.mxu0 0
  %1004 = vmatpush.bf16.msra.mxu0 %v636
  %1005 = vmatpush.bf16.msra.mxu0 %v626
  %1006 = vmatpush.bf16.msra.mxu0 %v616
  %1007 = vmatpush.bf16.msra.mxu0 %v606
  %1008 = vmatmul.bf16.gmra.mxu0 %v760
  %v1009 = vpop.f32.mrf.mxu0
  %v1010 = vadd.f32 %v996, %v1009
  %v1011 = vpop.f32.mrf.mxu0
  %v1012 = vadd.f32 %v998, %v1011
  %1013 = vdwg.mxu0
  %1014 = vmatpush.bf16.msra.mxu0 %v597
  %1015 = vmatpush.bf16.msra.mxu0 %v587
  %1016 = vmatpush.bf16.msra.mxu0 %v577
  %1017 = vmatpush.bf16.msra.mxu0 %v567
  %1018 = vmatpush.bf16.msra.mxu0 %v557
  %1019 = vmatpush.bf16.msra.mxu0 %v547
  %1020 = vmatpush.bf16.msra.mxu0 %v537
  %1021 = vmatpush.bf16.msra.mxu0 %v527
  %1022 = vmatmul.bf16.gmra.mxu0 %v155
  %v1023 = vpop.f32.mrf.mxu0
  %v1024 = vadd.f32 %v142, %v1023
  %v1025 = vpop.f32.mrf.mxu0
  %v1026 = vadd.f32 %v147, %v1025
  %1027 = vdwg.mxu0
  %1028 = vmatpush.bf16.msra.mxu0 0
  %1029 = vmatpush.bf16.msra.mxu0 0
  %1030 = vmatpush.bf16.msra.mxu0 0
  %1031 = vmatpush.bf16.msra.mxu0 0
  %1032 = vmatpush.bf16.msra.mxu0 %v637
  %1033 = vmatpush.bf16.msra.mxu0 %v627
  %1034 = vmatpush.bf16.msra.mxu0 %v617
  %1035 = vmatpush.bf16.msra.mxu0 %v607
  %1036 = vmatmul.bf16.gmra.mxu0 %v760
  %v1037 = vpop.f32.mrf.mxu0
  %v1038 = vadd.f32 %v1024, %v1037
  %v1039 = vpop.f32.mrf.mxu0
  %v1040 = vadd.f32 %v1026, %v1039
  %1041 = vdwg.mxu0
  %vm1042 = vcmp.ge.f32.partialorder %v786, 0.0
  %vm1043 = vcmp.ge.f32.partialorder %v814, 0.0
  %vm1044 = vcmp.ge.f32.partialorder %v842, 0.0
  %vm1045 = vcmp.ge.f32.partialorder %v870, 0.0
  %vm1046 = vcmp.ge.f32.partialorder %v898, 0.0
  %vm1047 = vcmp.ge.f32.partialorder %v926, 0.0
  %vm1048 = vcmp.ge.f32.partialorder %v954, 0.0
  %vm1049 = vcmp.ge.f32.partialorder %v982, 0.0
  %vm1050 = vcmp.ge.f32.partialorder %v1010, 0.0
  %vm1051 = vcmp.ge.f32.partialorder %v1038, 0.0
  %vm1052 = vcmp.ge.f32.partialorder %v788, 0.0
  %vm1053 = vcmp.ge.f32.partialorder %v816, 0.0
  %vm1054 = vcmp.ge.f32.partialorder %v844, 0.0
  %vm1055 = vcmp.ge.f32.partialorder %v872, 0.0
  %vm1056 = vcmp.ge.f32.partialorder %v900, 0.0
  %vm1057 = vcmp.ge.f32.partialorder %v928, 0.0
  %vm1058 = vcmp.ge.f32.partialorder %v956, 0.0
  %vm1059 = vcmp.ge.f32.partialorder %v984, 0.0
  %vm1060 = vcmp.ge.f32.partialorder %v1012, 0.0
  %vm1061 = vcmp.ge.f32.partialorder %v1040, 0.0
  %v1062 = vmul.f32 %v786, 0.2
  %v1063 = vmul.f32 %v814, 0.2
  %v1064 = vmul.f32 %v842, 0.2
  %v1065 = vmul.f32 %v870, 0.2
  %v1066 = vmul.f32 %v898, 0.2
  %v1067 = vmul.f32 %v926, 0.2
  %v1068 = vmul.f32 %v954, 0.2
  %v1069 = vmul.f32 %v982, 0.2
  %v1070 = vmul.f32 %v1010, 0.2
  %v1071 = vmul.f32 %v1038, 0.2
  %v1072 = vmul.f32 %v788, 0.2
  %v1073 = vmul.f32 %v816, 0.2
  %v1074 = vmul.f32 %v844, 0.2
  %v1075 = vmul.f32 %v872, 0.2
  %v1076 = vmul.f32 %v900, 0.2
  %v1077 = vmul.f32 %v928, 0.2
  %v1078 = vmul.f32 %v956, 0.2
  %v1079 = vmul.f32 %v984, 0.2
  %v1080 = vmul.f32 %v1012, 0.2
  %v1081 = vmul.f32 %v1040, 0.2
  %v1082 = vsel %vm1042, %v786, %v1062
  %v1083 = vsel %vm1043, %v814, %v1063
  %v1084 = vsel %vm1044, %v842, %v1064
  %v1085 = vsel %vm1045, %v870, %v1065
  %v1086 = vsel %vm1046, %v898, %v1066
  %v1087 = vsel %vm1047, %v926, %v1067
  %v1088 = vsel %vm1048, %v954, %v1068
  %v1089 = vsel %vm1049, %v982, %v1069
  %v1090 = vsel %vm1050, %v1010, %v1070
  %v1091 = vsel %vm1051, %v1038, %v1071
  %v1092 = vsel %vm1052, %v788, %v1072
  %v1093 = vsel %vm1053, %v816, %v1073
  %v1094 = vsel %vm1054, %v844, %v1074
  %v1095 = vsel %vm1055, %v872, %v1075
  %v1096 = vsel %vm1056, %v900, %v1076
  %v1097 = vsel %vm1057, %v928, %v1077
  %v1098 = vsel %vm1058, %v956, %v1078
  %v1099 = vsel %vm1059, %v984, %v1079
  %v1100 = vsel %vm1060, %v1012, %v1080
  %v1101 = vsel %vm1061, %v1040, %v1081
  %v1102 = vpack.c.bf16 %v1083, %v1082
  %v1103 = vpack.c.bf16 %v1085, %v1084
  %v1104 = vpack.c.bf16 %v1087, %v1086
  %v1105 = vpack.c.bf16 %v1089, %v1088
  %v1106 = vpack.c.bf16 %v1091, %v1090
  %v1107 = vpack.c.bf16 %v1093, %v1092
  %v1108 = vpack.c.bf16 %v1095, %v1094
  %v1109 = vpack.c.bf16 %v1097, %v1096
  %v1110 = vpack.c.bf16 %v1099, %v1098
  %v1111 = vpack.c.bf16 %v1101, %v1100
  %1112 = vst [vmem:[%s3] sm:$0xff] %v1102
  %1113 = vst [vmem:[%s3 + $0x8] sm:$0xff] %v1103
  %1114 = vst [vmem:[%s3 + $0x10] sm:$0xff] %v1104
  %1115 = vst [vmem:[%s3 + $0x18] sm:$0xff] %v1105
  %1116 = vst [vmem:[%s3 + $0x20] sm:$0xff] %v1106
  %1117 = vst [vmem:[%s3 + $0x28] sm:$0xff] %v1107
  %1118 = vst [vmem:[%s3 + $0x30] sm:$0xff] %v1108
  %1119 = vst [vmem:[%s3 + $0x38] sm:$0xff] %v1109
  %1120 = vst [vmem:[%s3 + $0x40] sm:$0xff] %v1110
  %1121 = vst [vmem:[%s3 + $0x48] sm:$0xff] %v1111
  // Predicated region
  $region14: #{_lambda_.4} parent=0 // pred_check
    _
  $region15: #{_lambda_.4} parent=0 // pred_check_branch
    %1123 = sbr.rel (0) target = $region17
  $region16: #{_lambda_.4} parent=0 // pred_region
    _
  $region17: #{_lambda_.4} parent=0 // pred_fallthru
    _
  // Predicated region
  $region18: #{_lambda_.4} parent=0 // pred_check
    _
  $region19: #{_lambda_.4} parent=0 // pred_check_branch
    %1125 = sbr.rel (0) target = $region21
  $region20: #{_lambda_.4} parent=0 // pred_region
    _
  $region21: #{_lambda_.4} parent=0 // pred_fallthru
    _

// kernel: _lambda_.5
$region0: #{_lambda_.5}
  #allocation0 [shape = 'u32[]', space=smem, size = 0x4, offset = 0x4, fixed_abs, tag = 'smem constant byte address 0x4 - core index']
  #allocation1 [shape = 'u32[72,128]{1,0:T(1,128)}', space=vmem, size = 0x9000, scoped, tag = 'internal scratch']
  %s0 = inlined_call_operand.vmem [shape: bf16[32,1024], index: 0, kind: input, shape index: {}]
  %s1 = inlined_call_operand.vmem [shape: bf16[1024,224], index: 1, kind: input, shape index: {}]
  %s2 = inlined_call_operand.vmem [shape: f32[32,1], index: 2, kind: input, shape index: {}]
  %s3 = inlined_call_operand.vmem [shape: f32[32,1], index: 3, kind: input, shape index: {}]
  %s4 = inlined_call_operand.vmem [shape: f32[32,1], index: 4, kind: input, shape index: {}]
  %s5 = inlined_call_operand.vmem [shape: bf16[32,224], index: 5, kind: output, shape index: {}]
  %s6 = sld [smem:[#allocation0]]
  $region30: #{_lambda_.5} parent=0
    _
  %s8 = ssub.s32 1, %s6
  %s9 = scalar_select 0, %s8, %s6
  // Predicated region
  $region2: #{_lambda_.5} parent=0 // pred_check
    _
  $region3: #{_lambda_.5} parent=0 // pred_check_branch
    %11 = sbr.rel (0) target = $region5
  $region4: #{_lambda_.5} parent=0 // pred_region
    _
  $region5: #{_lambda_.5} parent=0 // pred_fallthru
    _
  // Predicated region
  $region6: #{_lambda_.5} parent=0 // pred_check
    _
  $region7: #{_lambda_.5} parent=0 // pred_check_branch
    %13 = sbr.rel (0) target = $region9
  $region8: #{_lambda_.5} parent=0 // pred_region
    _
  $region9: #{_lambda_.5} parent=0 // pred_fallthru
    _
  // Predicated region
  $region10: #{_lambda_.5} parent=0 // pred_check
    _
  $region11: #{_lambda_.5} parent=0 // pred_check_branch
    %15 = sbr.rel (0) target = $region13
  $region12: #{_lambda_.5} parent=0 // pred_region
    _
  $region13: #{_lambda_.5} parent=0 // pred_fallthru
    _
  // Predicated region
  $region14: #{_lambda_.5} parent=0 // pred_check
    _
  $region15: #{_lambda_.5} parent=0 // pred_check_branch
    %17 = sbr.rel (0) target = $region17
  $region16: #{_lambda_.5} parent=0 // pred_region
    _
  $region17: #{_lambda_.5} parent=0 // pred_fallthru
    _
  // Predicated region
  $region18: #{_lambda_.5} parent=0 // pred_check
    _
  $region19: #{_lambda_.5} parent=0 // pred_check_branch
    %19 = sbr.rel (0) target = $region21
  $region20: #{_lambda_.5} parent=0 // pred_region
    _
  $region21: #{_lambda_.5} parent=0 // pred_fallthru
    _
  %v20 = vld [vmem:[%s0] sm:$0xff]
  %v21 = vld [vmem:[%s0 + $0x8] sm:$0xff]
  %v22 = vld [vmem:[%s0 + $0x10] sm:$0xff]
  %v23 = vld [vmem:[%s0 + $0x18] sm:$0xff]
  %v24 = vld [vmem:[%s0 + $0x20] sm:$0xff]
  %v25 = vld [vmem:[%s0 + $0x28] sm:$0xff]
  %v26 = vld [vmem:[%s0 + $0x30] sm:$0xff]
  %v27 = vld [vmem:[%s0 + $0x38] sm:$0xff]
  %v28 = vld [vmem:[%s0 + $0x40] sm:$0xff]
  %v29 = vld [vmem:[%s0 + $0x48] sm:$0xff]
  %v30 = vld [vmem:[%s0 + $0x50] sm:$0xff]
  %v31 = vld [vmem:[%s0 + $0x58] sm:$0xff]
  %v32 = vld [vmem:[%s0 + $0x60] sm:$0xff]
  %v33 = vld [vmem:[%s0 + $0x68] sm:$0xff]
  %v34 = vld [vmem:[%s0 + $0x70] sm:$0xff]
  %v35 = vld [vmem:[%s0 + $0x78] sm:$0xff]
  %v36 = vld [vmem:[%s1] sm:$0xff]
  %v37 = vld [vmem:[%s1 + $0x8] sm:$0xff]
  %v38 = vld [vmem:[%s1 + $0x10] sm:$0xff]
  %v39 = vld [vmem:[%s1 + $0x18] sm:$0xff]
  %v40 = vld [vmem:[%s1 + $0x20] sm:$0xff]
  %v41 = vld [vmem:[%s1 + $0x28] sm:$0xff]
  %v42 = vld [vmem:[%s1 + $0x30] sm:$0xff]
  %v43 = vld [vmem:[%s1 + $0x38] sm:$0xff]
  %v44 = vld [vmem:[%s1 + $0x40] sm:$0xff]
  %v45 = vld [vmem:[%s1 + $0x48] sm:$0xff]
  %v46 = vld [vmem:[%s1 + $0x50] sm:$0xff]
  %v47 = vld [vmem:[%s1 + $0x58] sm:$0xff]
  %v48 = vld [vmem:[%s1 + $0x60] sm:$0xff]
  %v49 = vld [vmem:[%s1 + $0x68] sm:$0xff]
  %v50 = vld [vmem:[%s1 + $0x70] sm:$0xff]
  %v51 = vld [vmem:[%s1 + $0x78] sm:$0xff]
  %v52 = vld [vmem:[%s1 + $0x80] sm:$0xff]
  %v53 = vld [vmem:[%s1 + $0x88] sm:$0xff]
  %v54 = vld [vmem:[%s1 + $0x90] sm:$0xff]
  %v55 = vld [vmem:[%s1 + $0x98] sm:$0xff]
  %v56 = vld [vmem:[%s1 + $0xa0] sm:$0xff]
  %v57 = vld [vmem:[%s1 + $0xa8] sm:$0xff]
  %v58 = vld [vmem:[%s1 + $0xb0] sm:$0xff]
  %v59 = vld [vmem:[%s1 + $0xb8] sm:$0xff]
  %v60 = vld [vmem:[%s1 + $0xc0] sm:$0xff]
  %v61 = vld [vmem:[%s1 + $0xc8] sm:$0xff]
  %v62 = vld [vmem:[%s1 + $0xd0] sm:$0xff]
  %v63 = vld [vmem:[%s1 + $0xd8] sm:$0xff]
  %v64 = vld [vmem:[%s1 + $0xe0] sm:$0xff]
  %v65 = vld [vmem:[%s1 + $0xe8] sm:$0xff]
  %v66 = vld [vmem:[%s1 + $0xf0] sm:$0xff]
  %v67 = vld [vmem:[%s1 + $0xf8] sm:$0xff]
  %v68 = vld [vmem:[%s1 + $0x100] sm:$0xff]
  %v69 = vld [vmem:[%s1 + $0x108] sm:$0xff]
  %v70 = vld [vmem:[%s1 + $0x110] sm:$0xff]
  %v71 = vld [vmem:[%s1 + $0x118] sm:$0xff]
  %v72 = vld [vmem:[%s1 + $0x120] sm:$0xff]
  %v73 = vld [vmem:[%s1 + $0x128] sm:$0xff]
  %v74 = vld [vmem:[%s1 + $0x130] sm:$0xff]
  %v75 = vld [vmem:[%s1 + $0x138] sm:$0xff]
  %v76 = vld [vmem:[%s1 + $0x140] sm:$0xff]
  %v77 = vld [vmem:[%s1 + $0x148] sm:$0xff]
  %v78 = vld [vmem:[%s1 + $0x150] sm:$0xff]
  %v79 = vld [vmem:[%s1 + $0x158] sm:$0xff]
  %v80 = vld [vmem:[%s1 + $0x160] sm:$0xff]
  %v81 = vld [vmem:[%s1 + $0x168] sm:$0xff]
  %v82 = vld [vmem:[%s1 + $0x170] sm:$0xff]
  %v83 = vld [vmem:[%s1 + $0x178] sm:$0xff]
  %v84 = vld [vmem:[%s1 + $0x180] sm:$0xff]
  %v85 = vld [vmem:[%s1 + $0x188] sm:$0xff]
  %v86 = vld [vmem:[%s1 + $0x190] sm:$0xff]
  %v87 = vld [vmem:[%s1 + $0x198] sm:$0xff]
  %v88 = vld [vmem:[%s1 + $0x1a0] sm:$0xff]
  %v89 = vld [vmem:[%s1 + $0x1a8] sm:$0xff]
  %v90 = vld [vmem:[%s1 + $0x1b0] sm:$0xff]
  %v91 = vld [vmem:[%s1 + $0x1b8] sm:$0xff]
  %v92 = vld [vmem:[%s1 + $0x1c0] sm:$0xff]
  %v93 = vld [vmem:[%s1 + $0x1c8] sm:$0xff]
  %v94 = vld [vmem:[%s1 + $0x1d0] sm:$0xff]
  %v95 = vld [vmem:[%s1 + $0x1d8] sm:$0xff]
  %v96 = vld [vmem:[%s1 + $0x1e0] sm:$0xff]
  %v97 = vld [vmem:[%s1 + $0x1e8] sm:$0xff]
  %v98 = vld [vmem:[%s1 + $0x1f0] sm:$0xff]
  %v99 = vld [vmem:[%s1 + $0x1f8] sm:$0xff]
  %v100 = vld [vmem:[%s1 + $0x200] sm:$0xff]
  %v101 = vld [vmem:[%s1 + $0x208] sm:$0xff]
  %v102 = vld [vmem:[%s1 + $0x210] sm:$0xff]
  %v103 = vld [vmem:[%s1 + $0x218] sm:$0xff]
  %v104 = vld [vmem:[%s1 + $0x220] sm:$0xff]
  %v105 = vld [vmem:[%s1 + $0x228] sm:$0xff]
  %v106 = vld [vmem:[%s1 + $0x230] sm:$0xff]
  %v107 = vld [vmem:[%s1 + $0x238] sm:$0xff]
  %v108 = vld [vmem:[%s1 + $0x240] sm:$0xff]
  %v109 = vld [vmem:[%s1 + $0x248] sm:$0xff]
  %v110 = vld [vmem:[%s1 + $0x250] sm:$0xff]
  %v111 = vld [vmem:[%s1 + $0x258] sm:$0xff]
  %v112 = vld [vmem:[%s1 + $0x260] sm:$0xff]
  %v113 = vld [vmem:[%s1 + $0x268] sm:$0xff]
  %v114 = vld [vmem:[%s1 + $0x270] sm:$0xff]
  %v115 = vld [vmem:[%s1 + $0x278] sm:$0xff]
  %v116 = vld [vmem:[%s1 + $0x280] sm:$0xff]
  %v117 = vld [vmem:[%s1 + $0x288] sm:$0xff]
  %v118 = vld [vmem:[%s1 + $0x290] sm:$0xff]
  %v119 = vld [vmem:[%s1 + $0x298] sm:$0xff]
  %v120 = vld [vmem:[%s1 + $0x2a0] sm:$0xff]
  %v121 = vld [vmem:[%s1 + $0x2a8] sm:$0xff]
  %v122 = vld [vmem:[%s1 + $0x2b0] sm:$0xff]
  %v123 = vld [vmem:[%s1 + $0x2b8] sm:$0xff]
  %v124 = vld [vmem:[%s1 + $0x2c0] sm:$0xff]
  %v125 = vld [vmem:[%s1 + $0x2c8] sm:$0xff]
  %v126 = vld [vmem:[%s1 + $0x2d0] sm:$0xff]
  %v127 = vld [vmem:[%s1 + $0x2d8] sm:$0xff]
  %v128 = vld [vmem:[%s1 + $0x2e0] sm:$0xff]
  %v129 = vld [vmem:[%s1 + $0x2e8] sm:$0xff]
  %v130 = vld [vmem:[%s1 + $0x2f0] sm:$0xff]
  %v131 = vld [vmem:[%s1 + $0x2f8] sm:$0xff]
  %v132 = vld [vmem:[%s1 + $0x300] sm:$0xff]
  %v133 = vld [vmem:[%s1 + $0x308] sm:$0xff]
  %v134 = vld [vmem:[%s1 + $0x310] sm:$0xff]
  %v135 = vld [vmem:[%s1 + $0x318] sm:$0xff]
  %v136 = vld [vmem:[%s1 + $0x320] sm:$0xff]
  %v137 = vld [vmem:[%s1 + $0x328] sm:$0xff]
  %v138 = vld [vmem:[%s1 + $0x330] sm:$0xff]
  %v139 = vld [vmem:[%s1 + $0x338] sm:$0xff]
  %v140 = vld [vmem:[%s1 + $0x340] sm:$0xff]
  %v141 = vld [vmem:[%s1 + $0x348] sm:$0xff]
  %v142 = vld [vmem:[%s1 + $0x350] sm:$0xff]
  %v143 = vld [vmem:[%s1 + $0x358] sm:$0xff]
  %v144 = vld [vmem:[%s1 + $0x360] sm:$0xff]
  %v145 = vld [vmem:[%s1 + $0x368] sm:$0xff]
  %v146 = vld [vmem:[%s1 + $0x370] sm:$0xff]
  %v147 = vld [vmem:[%s1 + $0x378] sm:$0xff]
  %v148 = vld [vmem:[%s1 + $0x380] sm:$0xff]
  %v149 = vld [vmem:[%s1 + $0x388] sm:$0xff]
  %v150 = vld [vmem:[%s1 + $0x390] sm:$0xff]
  %v151 = vld [vmem:[%s1 + $0x398] sm:$0xff]
  %v152 = vld [vmem:[%s1 + $0x3a0] sm:$0xff]
  %v153 = vld [vmem:[%s1 + $0x3a8] sm:$0xff]
  %v154 = vld [vmem:[%s1 + $0x3b0] sm:$0xff]
  %v155 = vld [vmem:[%s1 + $0x3b8] sm:$0xff]
  %v156 = vld [vmem:[%s1 + $0x3c0] sm:$0xff]
  %v157 = vld [vmem:[%s1 + $0x3c8] sm:$0xff]
  %v158 = vld [vmem:[%s1 + $0x3d0] sm:$0xff]
  %v159 = vld [vmem:[%s1 + $0x3d8] sm:$0xff]
  %v160 = vld [vmem:[%s1 + $0x3e0] sm:$0xff]
  %v161 = vld [vmem:[%s1 + $0x3e8] sm:$0xff]
  %v162 = vld [vmem:[%s1 + $0x3f0] sm:$0xff]
  %v163 = vld [vmem:[%s1 + $0x3f8] sm:$0xff]
  %v164 = vld [vmem:[%s2] sm:$0xff]
  %v165 = vld [vmem:[%s2 + $0x8] sm:$0xff]
  %v166 = vld [vmem:[%s2 + $0x10] sm:$0xff]
  %v167 = vld [vmem:[%s2 + $0x18] sm:$0xff]
  %169 = vset.pattern.permute.xlu0 0
  %170 = vperm.xlu0 %169, %v164
  %v171 = vpop.permute.xlu0 %170
  %174 = vset.pattern.permute.xlu0 0
  %175 = vperm.xlu0 %174, %v165
  %v176 = vpop.permute.xlu0 %175
  %179 = vset.pattern.permute.xlu0 0
  %180 = vperm.xlu0 %179, %v166
  %v181 = vpop.permute.xlu0 %180
  %184 = vset.pattern.permute.xlu0 0
  %185 = vperm.xlu0 %184, %v167
  %v186 = vpop.permute.xlu0 %185
  %v204 = vunpack.c.l.b16 %v20
  %v205 = vunpack.c.h.b16 %v20
  %v206 = vunpack.c.l.b16 %v21
  %v207 = vunpack.c.h.b16 %v21
  %v208 = vunpack.c.l.b16 %v22
  %v209 = vunpack.c.h.b16 %v22
  %v210 = vunpack.c.l.b16 %v23
  %v211 = vunpack.c.h.b16 %v23
  %v212 = vunpack.c.l.b16 %v24
  %v213 = vunpack.c.h.b16 %v24
  %v214 = vunpack.c.l.b16 %v25
  %v215 = vunpack.c.h.b16 %v25
  %v216 = vunpack.c.l.b16 %v26
  %v217 = vunpack.c.h.b16 %v26
  %v218 = vunpack.c.l.b16 %v27
  %v219 = vunpack.c.h.b16 %v27
  %v220 = vunpack.c.l.b16 %v28
  %v221 = vunpack.c.h.b16 %v28
  %v222 = vunpack.c.l.b16 %v29
  %v223 = vunpack.c.h.b16 %v29
  %v224 = vunpack.c.l.b16 %v30
  %v225 = vunpack.c.h.b16 %v30
  %v226 = vunpack.c.l.b16 %v31
  %v227 = vunpack.c.h.b16 %v31
  %v228 = vunpack.c.l.b16 %v32
  %v229 = vunpack.c.h.b16 %v32
  %v230 = vunpack.c.l.b16 %v33
  %v231 = vunpack.c.h.b16 %v33
  %v232 = vunpack.c.l.b16 %v34
  %v233 = vunpack.c.h.b16 %v34
  %v234 = vunpack.c.l.b16 %v35
  %v235 = vunpack.c.h.b16 %v35
  %v236 = vpack.c.b16 %v212, %v204
  %v237 = vpack.c.b16 %v213, %v205
  %v238 = vpack.c.b16 %v214, %v206
  %v239 = vpack.c.b16 %v215, %v207
  %v240 = vpack.c.b16 %v216, %v208
  %v241 = vpack.c.b16 %v217, %v209
  %v242 = vpack.c.b16 %v218, %v210
  %v243 = vpack.c.b16 %v219, %v211
  %v244 = vpack.c.b16 %v228, %v220
  %v245 = vpack.c.b16 %v229, %v221
  %v246 = vpack.c.b16 %v230, %v222
  %v247 = vpack.c.b16 %v231, %v223
  %v248 = vpack.c.b16 %v232, %v224
  %v249 = vpack.c.b16 %v233, %v225
  %v250 = vpack.c.b16 %v234, %v226
  %v251 = vpack.c.b16 %v235, %v227
  %v396 = vunpack.c.l.b16 %v36
  %v397 = vunpack.c.h.b16 %v36
  %v398 = vunpack.c.l.b16 %v37
  %v399 = vunpack.c.h.b16 %v37
  %v400 = vunpack.c.l.b16 %v38
  %v401 = vunpack.c.h.b16 %v38
  %v402 = vunpack.c.l.b16 %v39
  %v403 = vunpack.c.h.b16 %v39
  %v404 = vunpack.c.l.b16 %v40
  %v405 = vunpack.c.h.b16 %v40
  %v406 = vunpack.c.l.b16 %v41
  %v407 = vunpack.c.h.b16 %v41
  %v408 = vunpack.c.l.b16 %v42
  %v409 = vunpack.c.h.b16 %v42
  %v410 = vunpack.c.l.b16 %v43
  %v411 = vunpack.c.h.b16 %v43
  %v412 = vunpack.c.l.b16 %v44
  %v413 = vunpack.c.h.b16 %v44
  %v414 = vunpack.c.l.b16 %v45
  %v415 = vunpack.c.h.b16 %v45
  %v416 = vunpack.c.l.b16 %v46
  %v417 = vunpack.c.h.b16 %v46
  %v418 = vunpack.c.l.b16 %v47
  %v419 = vunpack.c.h.b16 %v47
  %v420 = vunpack.c.l.b16 %v48
  %v421 = vunpack.c.h.b16 %v48
  %v422 = vunpack.c.l.b16 %v49
  %v423 = vunpack.c.h.b16 %v49
  %v424 = vunpack.c.l.b16 %v50
  %v425 = vunpack.c.h.b16 %v50
  %v426 = vunpack.c.l.b16 %v51
  %v427 = vunpack.c.h.b16 %v51
  %v428 = vunpack.c.l.b16 %v52
  %v429 = vunpack.c.h.b16 %v52
  %v430 = vunpack.c.l.b16 %v53
  %v431 = vunpack.c.h.b16 %v53
  %v432 = vunpack.c.l.b16 %v54
  %v433 = vunpack.c.h.b16 %v54
  %v434 = vunpack.c.l.b16 %v55
  %v435 = vunpack.c.h.b16 %v55
  %v436 = vunpack.c.l.b16 %v56
  %v437 = vunpack.c.h.b16 %v56
  %v438 = vunpack.c.l.b16 %v57
  %v439 = vunpack.c.h.b16 %v57
  %v440 = vunpack.c.l.b16 %v58
  %v441 = vunpack.c.h.b16 %v58
  %v442 = vunpack.c.l.b16 %v59
  %v443 = vunpack.c.h.b16 %v59
  %v444 = vunpack.c.l.b16 %v60
  %v445 = vunpack.c.h.b16 %v60
  %v446 = vunpack.c.l.b16 %v61
  %v447 = vunpack.c.h.b16 %v61
  %v448 = vunpack.c.l.b16 %v62
  %v449 = vunpack.c.h.b16 %v62
  %v450 = vunpack.c.l.b16 %v63
  %v451 = vunpack.c.h.b16 %v63
  %v452 = vunpack.c.l.b16 %v64
  %v453 = vunpack.c.h.b16 %v64
  %v454 = vunpack.c.l.b16 %v65
  %v455 = vunpack.c.h.b16 %v65
  %v456 = vunpack.c.l.b16 %v66
  %v457 = vunpack.c.h.b16 %v66
  %v458 = vunpack.c.l.b16 %v67
  %v459 = vunpack.c.h.b16 %v67
  %v460 = vunpack.c.l.b16 %v68
  %v461 = vunpack.c.h.b16 %v68
  %v462 = vunpack.c.l.b16 %v69
  %v463 = vunpack.c.h.b16 %v69
  %v464 = vunpack.c.l.b16 %v70
  %v465 = vunpack.c.h.b16 %v70
  %v466 = vunpack.c.l.b16 %v71
  %v467 = vunpack.c.h.b16 %v71
  %v468 = vunpack.c.l.b16 %v72
  %v469 = vunpack.c.h.b16 %v72
  %v470 = vunpack.c.l.b16 %v73
  %v471 = vunpack.c.h.b16 %v73
  %v472 = vunpack.c.l.b16 %v74
  %v473 = vunpack.c.h.b16 %v74
  %v474 = vunpack.c.l.b16 %v75
  %v475 = vunpack.c.h.b16 %v75
  %v476 = vunpack.c.l.b16 %v76
  %v477 = vunpack.c.h.b16 %v76
  %v478 = vunpack.c.l.b16 %v77
  %v479 = vunpack.c.h.b16 %v77
  %v480 = vunpack.c.l.b16 %v78
  %v481 = vunpack.c.h.b16 %v78
  %v482 = vunpack.c.l.b16 %v79
  %v483 = vunpack.c.h.b16 %v79
  %v484 = vunpack.c.l.b16 %v80
  %v485 = vunpack.c.h.b16 %v80
  %v486 = vunpack.c.l.b16 %v81
  %v487 = vunpack.c.h.b16 %v81
  %v488 = vunpack.c.l.b16 %v82
  %v489 = vunpack.c.h.b16 %v82
  %v490 = vunpack.c.l.b16 %v83
  %v491 = vunpack.c.h.b16 %v83
  %v492 = vunpack.c.l.b16 %v84
  %v493 = vunpack.c.h.b16 %v84
  %v494 = vunpack.c.l.b16 %v85
  %v495 = vunpack.c.h.b16 %v85
  %v496 = vunpack.c.l.b16 %v86
  %v497 = vunpack.c.h.b16 %v86
  %v498 = vunpack.c.l.b16 %v87
  %v499 = vunpack.c.h.b16 %v87
  %v500 = vunpack.c.l.b16 %v88
  %v501 = vunpack.c.h.b16 %v88
  %v502 = vunpack.c.l.b16 %v89
  %v503 = vunpack.c.h.b16 %v89
  %v504 = vunpack.c.l.b16 %v90
  %v505 = vunpack.c.h.b16 %v90
  %v506 = vunpack.c.l.b16 %v91
  %v507 = vunpack.c.h.b16 %v91
  %v508 = vunpack.c.l.b16 %v92
  %v509 = vunpack.c.h.b16 %v92
  %v510 = vunpack.c.l.b16 %v93
  %v511 = vunpack.c.h.b16 %v93
  %v512 = vunpack.c.l.b16 %v94
  %v513 = vunpack.c.h.b16 %v94
  %v514 = vunpack.c.l.b16 %v95
  %v515 = vunpack.c.h.b16 %v95
  %v516 = vunpack.c.l.b16 %v96
  %v517 = vunpack.c.h.b16 %v96
  %v518 = vunpack.c.l.b16 %v97
  %v519 = vunpack.c.h.b16 %v97
  %v520 = vunpack.c.l.b16 %v98
  %v521 = vunpack.c.h.b16 %v98
  %v522 = vunpack.c.l.b16 %v99
  %v523 = vunpack.c.h.b16 %v99
  %v524 = vunpack.c.l.b16 %v100
  %v525 = vunpack.c.h.b16 %v100
  %v526 = vunpack.c.l.b16 %v101
  %v527 = vunpack.c.h.b16 %v101
  %v528 = vunpack.c.l.b16 %v102
  %v529 = vunpack.c.h.b16 %v102
  %v530 = vunpack.c.l.b16 %v103
  %v531 = vunpack.c.h.b16 %v103
  %v532 = vunpack.c.l.b16 %v104
  %v533 = vunpack.c.h.b16 %v104
  %v534 = vunpack.c.l.b16 %v105
  %v535 = vunpack.c.h.b16 %v105
  %v536 = vunpack.c.l.b16 %v106
  %v537 = vunpack.c.h.b16 %v106
  %v538 = vunpack.c.l.b16 %v107
  %v539 = vunpack.c.h.b16 %v107
  %v540 = vunpack.c.l.b16 %v108
  %v541 = vunpack.c.h.b16 %v108
  %v542 = vunpack.c.l.b16 %v109
  %v543 = vunpack.c.h.b16 %v109
  %v544 = vunpack.c.l.b16 %v110
  %v545 = vunpack.c.h.b16 %v110
  %v546 = vunpack.c.l.b16 %v111
  %v547 = vunpack.c.h.b16 %v111
  %v548 = vunpack.c.l.b16 %v112
  %v549 = vunpack.c.h.b16 %v112
  %v550 = vunpack.c.l.b16 %v113
  %v551 = vunpack.c.h.b16 %v113
  %v552 = vunpack.c.l.b16 %v114
  %v553 = vunpack.c.h.b16 %v114
  %v554 = vunpack.c.l.b16 %v115
  %v555 = vunpack.c.h.b16 %v115
  %v556 = vunpack.c.l.b16 %v116
  %v557 = vunpack.c.h.b16 %v116
  %v558 = vunpack.c.l.b16 %v117
  %v559 = vunpack.c.h.b16 %v117
  %v560 = vunpack.c.l.b16 %v118
  %v561 = vunpack.c.h.b16 %v118
  %v562 = vunpack.c.l.b16 %v119
  %v563 = vunpack.c.h.b16 %v119
  %v564 = vunpack.c.l.b16 %v120
  %v565 = vunpack.c.h.b16 %v120
  %v566 = vunpack.c.l.b16 %v121
  %v567 = vunpack.c.h.b16 %v121
  %v568 = vunpack.c.l.b16 %v122
  %v569 = vunpack.c.h.b16 %v122
  %v570 = vunpack.c.l.b16 %v123
  %v571 = vunpack.c.h.b16 %v123
  %v572 = vunpack.c.l.b16 %v124
  %v573 = vunpack.c.h.b16 %v124
  %v574 = vunpack.c.l.b16 %v125
  %v575 = vunpack.c.h.b16 %v125
  %v576 = vunpack.c.l.b16 %v126
  %v577 = vunpack.c.h.b16 %v126
  %v578 = vunpack.c.l.b16 %v127
  %v579 = vunpack.c.h.b16 %v127
  %v580 = vunpack.c.l.b16 %v128
  %v581 = vunpack.c.h.b16 %v128
  %v582 = vunpack.c.l.b16 %v129
  %v583 = vunpack.c.h.b16 %v129
  %v584 = vunpack.c.l.b16 %v130
  %v585 = vunpack.c.h.b16 %v130
  %v586 = vunpack.c.l.b16 %v131
  %v587 = vunpack.c.h.b16 %v131
  %v588 = vunpack.c.l.b16 %v132
  %v589 = vunpack.c.h.b16 %v132
  %v590 = vunpack.c.l.b16 %v133
  %v591 = vunpack.c.h.b16 %v133
  %v592 = vunpack.c.l.b16 %v134
  %v593 = vunpack.c.h.b16 %v134
  %v594 = vunpack.c.l.b16 %v135
  %v595 = vunpack.c.h.b16 %v135
  %v596 = vunpack.c.l.b16 %v136
  %v597 = vunpack.c.h.b16 %v136
  %v598 = vunpack.c.l.b16 %v137
  %v599 = vunpack.c.h.b16 %v137
  %v600 = vunpack.c.l.b16 %v138
  %v601 = vunpack.c.h.b16 %v138
  %v602 = vunpack.c.l.b16 %v139
  %v603 = vunpack.c.h.b16 %v139
  %v604 = vunpack.c.l.b16 %v140
  %v605 = vunpack.c.h.b16 %v140
  %v606 = vunpack.c.l.b16 %v141
  %v607 = vunpack.c.h.b16 %v141
  %v608 = vunpack.c.l.b16 %v142
  %v609 = vunpack.c.h.b16 %v142
  %v610 = vunpack.c.l.b16 %v143
  %v611 = vunpack.c.h.b16 %v143
  %v612 = vunpack.c.l.b16 %v144
  %v613 = vunpack.c.h.b16 %v144
  %v614 = vunpack.c.l.b16 %v145
  %v615 = vunpack.c.h.b16 %v145
  %v616 = vunpack.c.l.b16 %v146
  %v617 = vunpack.c.h.b16 %v146
  %v618 = vunpack.c.l.b16 %v147
  %v619 = vunpack.c.h.b16 %v147
  %v620 = vunpack.c.l.b16 %v148
  %v621 = vunpack.c.h.b16 %v148
  %v622 = vunpack.c.l.b16 %v149
  %v623 = vunpack.c.h.b16 %v149
  %v624 = vunpack.c.l.b16 %v150
  %v625 = vunpack.c.h.b16 %v150
  %v626 = vunpack.c.l.b16 %v151
  %v627 = vunpack.c.h.b16 %v151
  %v628 = vunpack.c.l.b16 %v152
  %v629 = vunpack.c.h.b16 %v152
  %v630 = vunpack.c.l.b16 %v153
  %v631 = vunpack.c.h.b16 %v153
  %v632 = vunpack.c.l.b16 %v154
  %v633 = vunpack.c.h.b16 %v154
  %v634 = vunpack.c.l.b16 %v155
  %v635 = vunpack.c.h.b16 %v155
  %v636 = vunpack.c.l.b16 %v156
  %v637 = vunpack.c.h.b16 %v156
  %v638 = vunpack.c.l.b16 %v157
  %v639 = vunpack.c.h.b16 %v157
  %v640 = vunpack.c.l.b16 %v158
  %v641 = vunpack.c.h.b16 %v158
  %v642 = vunpack.c.l.b16 %v159
  %v643 = vunpack.c.h.b16 %v159
  %v644 = vunpack.c.l.b16 %v160
  %v645 = vunpack.c.h.b16 %v160
  %v646 = vunpack.c.l.b16 %v161
  %v647 = vunpack.c.h.b16 %v161
  %v648 = vunpack.c.l.b16 %v162
  %v649 = vunpack.c.h.b16 %v162
  %v650 = vunpack.c.l.b16 %v163
  %v651 = vunpack.c.h.b16 %v163
  %v652 = vpack.c.b16 %v398, %v396
  %v653 = vpack.c.b16 %v399, %v397
  %v654 = vpack.c.b16 %v402, %v400
  %v655 = vpack.c.b16 %v403, %v401
  %v656 = vpack.c.b16 %v406, %v404
  %v657 = vpack.c.b16 %v407, %v405
  %v658 = vpack.c.b16 %v410, %v408
  %v659 = vpack.c.b16 %v411, %v409
  %v660 = vpack.c.b16 %v414, %v412
  %v661 = vpack.c.b16 %v415, %v413
  %v662 = vpack.c.b16 %v418, %v416
  %v663 = vpack.c.b16 %v419, %v417
  %v664 = vpack.c.b16 %v422, %v420
  %v665 = vpack.c.b16 %v423, %v421
  %v666 = vpack.c.b16 %v426, %v424
  %v667 = vpack.c.b16 %v427, %v425
  %v668 = vpack.c.b16 %v430, %v428
  %v669 = vpack.c.b16 %v431, %v429
  %v670 = vpack.c.b16 %v434, %v432
  %v671 = vpack.c.b16 %v435, %v433
  %v672 = vpack.c.b16 %v438, %v436
  %v673 = vpack.c.b16 %v439, %v437
  %v674 = vpack.c.b16 %v442, %v440
  %v675 = vpack.c.b16 %v443, %v441
  %v676 = vpack.c.b16 %v446, %v444
  %v677 = vpack.c.b16 %v447, %v445
  %v678 = vpack.c.b16 %v450, %v448
  %v679 = vpack.c.b16 %v451, %v449
  %v680 = vpack.c.b16 %v454, %v452
  %v681 = vpack.c.b16 %v455, %v453
  %v682 = vpack.c.b16 %v458, %v456
  %v683 = vpack.c.b16 %v459, %v457
  %v684 = vpack.c.b16 %v462, %v460
  %v685 = vpack.c.b16 %v463, %v461
  %v686 = vpack.c.b16 %v466, %v464
  %v687 = vpack.c.b16 %v467, %v465
  %v688 = vpack.c.b16 %v470, %v468
  %v689 = vpack.c.b16 %v471, %v469
  %v690 = vpack.c.b16 %v474, %v472
  %v691 = vpack.c.b16 %v475, %v473
  %v692 = vpack.c.b16 %v478, %v476
  %v693 = vpack.c.b16 %v479, %v477
  %v694 = vpack.c.b16 %v482, %v480
  %v695 = vpack.c.b16 %v483, %v481
  %v696 = vpack.c.b16 %v486, %v484
  %v697 = vpack.c.b16 %v487, %v485
  %v698 = vpack.c.b16 %v490, %v488
  %v699 = vpack.c.b16 %v491, %v489
  %v700 = vpack.c.b16 %v494, %v492
  %v701 = vpack.c.b16 %v495, %v493
  %v702 = vpack.c.b16 %v498, %v496
  %v703 = vpack.c.b16 %v499, %v497
  %v704 = vpack.c.b16 %v502, %v500
  %v705 = vpack.c.b16 %v503, %v501
  %v706 = vpack.c.b16 %v506, %v504
  %v707 = vpack.c.b16 %v507, %v505
  %v708 = vpack.c.b16 %v510, %v508
  %v709 = vpack.c.b16 %v511, %v509
  %v710 = vpack.c.b16 %v514, %v512
  %v711 = vpack.c.b16 %v515, %v513
  %v712 = vpack.c.b16 %v518, %v516
  %v713 = vpack.c.b16 %v519, %v517
  %v714 = vpack.c.b16 %v522, %v520
  %v715 = vpack.c.b16 %v523, %v521
  %v716 = vpack.c.b16 %v526, %v524
  %v717 = vpack.c.b16 %v527, %v525
  %v718 = vpack.c.b16 %v530, %v528
  %v719 = vpack.c.b16 %v531, %v529
  %v720 = vpack.c.b16 %v534, %v532
  %v721 = vpack.c.b16 %v535, %v533
  %v722 = vpack.c.b16 %v538, %v536
  %v723 = vpack.c.b16 %v539, %v537
  %v724 = vpack.c.b16 %v542, %v540
  %v725 = vpack.c.b16 %v543, %v541
  %v726 = vpack.c.b16 %v546, %v544
  %v727 = vpack.c.b16 %v547, %v545
  %v728 = vpack.c.b16 %v550, %v548
  %v729 = vpack.c.b16 %v551, %v549
  %v730 = vpack.c.b16 %v554, %v552
  %v731 = vpack.c.b16 %v555, %v553
  %v732 = vpack.c.b16 %v558, %v556
  %v733 = vpack.c.b16 %v559, %v557
  %v734 = vpack.c.b16 %v562, %v560
  %v735 = vpack.c.b16 %v563, %v561
  %v736 = vpack.c.b16 %v566, %v564
  %v737 = vpack.c.b16 %v567, %v565
  %v738 = vpack.c.b16 %v570, %v568
  %v739 = vpack.c.b16 %v571, %v569
  %v740 = vpack.c.b16 %v574, %v572
  %v741 = vpack.c.b16 %v575, %v573
  %v742 = vpack.c.b16 %v578, %v576
  %v743 = vpack.c.b16 %v579, %v577
  %v744 = vpack.c.b16 %v582, %v580
  %v745 = vpack.c.b16 %v583, %v581
  %v746 = vpack.c.b16 %v586, %v584
  %v747 = vpack.c.b16 %v587, %v585
  %v748 = vpack.c.b16 %v590, %v588
  %v749 = vpack.c.b16 %v591, %v589
  %v750 = vpack.c.b16 %v594, %v592
  %v751 = vpack.c.b16 %v595, %v593
  %v752 = vpack.c.b16 %v598, %v596
  %v753 = vpack.c.b16 %v599, %v597
  %v754 = vpack.c.b16 %v602, %v600
  %v755 = vpack.c.b16 %v603, %v601
  %v756 = vpack.c.b16 %v606, %v604
  %v757 = vpack.c.b16 %v607, %v605
  %v758 = vpack.c.b16 %v610, %v608
  %v759 = vpack.c.b16 %v611, %v609
  %v760 = vpack.c.b16 %v614, %v612
  %v761 = vpack.c.b16 %v615, %v613
  %v762 = vpack.c.b16 %v618, %v616
  %v763 = vpack.c.b16 %v619, %v617
  %v764 = vpack.c.b16 %v622, %v620
  %v765 = vpack.c.b16 %v623, %v621
  %v766 = vpack.c.b16 %v626, %v624
  %v767 = vpack.c.b16 %v627, %v625
  %v768 = vpack.c.b16 %v630, %v628
  %v769 = vpack.c.b16 %v631, %v629
  %v770 = vpack.c.b16 %v634, %v632
  %v771 = vpack.c.b16 %v635, %v633
  %v772 = vpack.c.b16 %v638, %v636
  %v773 = vpack.c.b16 %v639, %v637
  %v774 = vpack.c.b16 %v642, %v640
  %v775 = vpack.c.b16 %v643, %v641
  %v776 = vpack.c.b16 %v646, %v644
  %v777 = vpack.c.b16 %v647, %v645
  %v778 = vpack.c.b16 %v650, %v648
  %v779 = vpack.c.b16 %v651, %v649
  %908 = vmatpush.bf16.msra.mxu0 %v666
  %909 = vmatpush.bf16.msra.mxu0 %v664
  %910 = vmatpush.bf16.msra.mxu0 %v662
  %911 = vmatpush.bf16.msra.mxu0 %v660
  %912 = vmatpush.bf16.msra.mxu0 %v658
  %913 = vmatpush.bf16.msra.mxu0 %v656
  %914 = vmatpush.bf16.msra.mxu0 %v654
  %915 = vmatpush.bf16.msra.mxu0 %v652
  %916 = vmatmul.bf16.gmra.mxu0 %v236
  %v917 = vpop.f32.mrf.mxu0
  %v918 = vadd.f32 %v171, %v917
  %v919 = vpop.f32.mrf.mxu0
  %v920 = vadd.f32 %v176, %v919
  %921 = vmatmul.bf16.gmra.mxu0 %v244
  %v922 = vpop.f32.mrf.mxu0
  %v923 = vadd.f32 %v181, %v922
  %v924 = vpop.f32.mrf.mxu0
  %v925 = vadd.f32 %v186, %v924
  %926 = vdwg.mxu0
  %927 = vmatpush.bf16.msra.mxu0 %v682
  %928 = vmatpush.bf16.msra.mxu0 %v680
  %929 = vmatpush.bf16.msra.mxu0 %v678
  %930 = vmatpush.bf16.msra.mxu0 %v676
  %931 = vmatpush.bf16.msra.mxu0 %v674
  %932 = vmatpush.bf16.msra.mxu0 %v672
  %933 = vmatpush.bf16.msra.mxu0 %v670
  %934 = vmatpush.bf16.msra.mxu0 %v668
  %935 = vmatmul.bf16.gmra.mxu0 %v237
  %v936 = vpop.f32.mrf.mxu0
  %v937 = vadd.f32 %v918, %v936
  %v938 = vpop.f32.mrf.mxu0
  %v939 = vadd.f32 %v920, %v938
  %940 = vmatmul.bf16.gmra.mxu0 %v245
  %v941 = vpop.f32.mrf.mxu0
  %v942 = vadd.f32 %v923, %v941
  %v943 = vpop.f32.mrf.mxu0
  %v944 = vadd.f32 %v925, %v943
  %945 = vdwg.mxu0
  %946 = vmatpush.bf16.msra.mxu0 %v698
  %947 = vmatpush.bf16.msra.mxu0 %v696
  %948 = vmatpush.bf16.msra.mxu0 %v694
  %949 = vmatpush.bf16.msra.mxu0 %v692
  %950 = vmatpush.bf16.msra.mxu0 %v690
  %951 = vmatpush.bf16.msra.mxu0 %v688
  %952 = vmatpush.bf16.msra.mxu0 %v686
  %953 = vmatpush.bf16.msra.mxu0 %v684
  %954 = vmatmul.bf16.gmra.mxu0 %v238
  %v955 = vpop.f32.mrf.mxu0
  %v956 = vadd.f32 %v937, %v955
  %v957 = vpop.f32.mrf.mxu0
  %v958 = vadd.f32 %v939, %v957
  %959 = vmatmul.bf16.gmra.mxu0 %v246
  %v960 = vpop.f32.mrf.mxu0
  %v961 = vadd.f32 %v942, %v960
  %v962 = vpop.f32.mrf.mxu0
  %v963 = vadd.f32 %v944, %v962
  %964 = vdwg.mxu0
  %965 = vmatpush.bf16.msra.mxu0 %v714
  %966 = vmatpush.bf16.msra.mxu0 %v712
  %967 = vmatpush.bf16.msra.mxu0 %v710
  %968 = vmatpush.bf16.msra.mxu0 %v708
  %969 = vmatpush.bf16.msra.mxu0 %v706
  %970 = vmatpush.bf16.msra.mxu0 %v704
  %971 = vmatpush.bf16.msra.mxu0 %v702
  %972 = vmatpush.bf16.msra.mxu0 %v700
  %973 = vmatmul.bf16.gmra.mxu0 %v239
  %v974 = vpop.f32.mrf.mxu0
  %v975 = vadd.f32 %v956, %v974
  %v976 = vpop.f32.mrf.mxu0
  %v977 = vadd.f32 %v958, %v976
  %978 = vmatmul.bf16.gmra.mxu0 %v247
  %v979 = vpop.f32.mrf.mxu0
  %v980 = vadd.f32 %v961, %v979
  %v981 = vpop.f32.mrf.mxu0
  %v982 = vadd.f32 %v963, %v981
  %983 = vdwg.mxu0
  %984 = vmatpush.bf16.msra.mxu0 %v730
  %985 = vmatpush.bf16.msra.mxu0 %v728
  %986 = vmatpush.bf16.msra.mxu0 %v726
  %987 = vmatpush.bf16.msra.mxu0 %v724
  %988 = vmatpush.bf16.msra.mxu0 %v722
  %989 = vmatpush.bf16.msra.mxu0 %v720
  %990 = vmatpush.bf16.msra.mxu0 %v718
  %991 = vmatpush.bf16.msra.mxu0 %v716
  %992 = vmatmul.bf16.gmra.mxu0 %v240
  %v993 = vpop.f32.mrf.mxu0
  %v994 = vadd.f32 %v975, %v993
  %v995 = vpop.f32.mrf.mxu0
  %v996 = vadd.f32 %v977, %v995
  %997 = vmatmul.bf16.gmra.mxu0 %v248
  %v998 = vpop.f32.mrf.mxu0
  %v999 = vadd.f32 %v980, %v998
  %v1000 = vpop.f32.mrf.mxu0
  %v1001 = vadd.f32 %v982, %v1000
  %1002 = vdwg.mxu0
  %1003 = vmatpush.bf16.msra.mxu0 %v746
  %1004 = vmatpush.bf16.msra.mxu0 %v744
  %1005 = vmatpush.bf16.msra.mxu0 %v742
  %1006 = vmatpush.bf16.msra.mxu0 %v740
  %1007 = vmatpush.bf16.msra.mxu0 %v738
  %1008 = vmatpush.bf16.msra.mxu0 %v736
  %1009 = vmatpush.bf16.msra.mxu0 %v734
  %1010 = vmatpush.bf16.msra.mxu0 %v732
  %1011 = vmatmul.bf16.gmra.mxu0 %v241
  %v1012 = vpop.f32.mrf.mxu0
  %v1013 = vadd.f32 %v994, %v1012
  %v1014 = vpop.f32.mrf.mxu0
  %v1015 = vadd.f32 %v996, %v1014
  %1016 = vmatmul.bf16.gmra.mxu0 %v249
  %v1017 = vpop.f32.mrf.mxu0
  %v1018 = vadd.f32 %v999, %v1017
  %v1019 = vpop.f32.mrf.mxu0
  %v1020 = vadd.f32 %v1001, %v1019
  %1021 = vdwg.mxu0
  %1022 = vmatpush.bf16.msra.mxu0 %v762
  %1023 = vmatpush.bf16.msra.mxu0 %v760
  %1024 = vmatpush.bf16.msra.mxu0 %v758
  %1025 = vmatpush.bf16.msra.mxu0 %v756
  %1026 = vmatpush.bf16.msra.mxu0 %v754
  %1027 = vmatpush.bf16.msra.mxu0 %v752
  %1028 = vmatpush.bf16.msra.mxu0 %v750
  %1029 = vmatpush.bf16.msra.mxu0 %v748
  %1030 = vmatmul.bf16.gmra.mxu0 %v242
  %v1031 = vpop.f32.mrf.mxu0
  %v1032 = vadd.f32 %v1013, %v1031
  %v1033 = vpop.f32.mrf.mxu0
  %v1034 = vadd.f32 %v1015, %v1033
  %1035 = vmatmul.bf16.gmra.mxu0 %v250
  %v1036 = vpop.f32.mrf.mxu0
  %v1037 = vadd.f32 %v1018, %v1036
  %v1038 = vpop.f32.mrf.mxu0
  %v1039 = vadd.f32 %v1020, %v1038
  %1040 = vdwg.mxu0
  %1041 = vmatpush.bf16.msra.mxu0 %v778
  %1042 = vmatpush.bf16.msra.mxu0 %v776
  %1043 = vmatpush.bf16.msra.mxu0 %v774
  %1044 = vmatpush.bf16.msra.mxu0 %v772
  %1045 = vmatpush.bf16.msra.mxu0 %v770
  %1046 = vmatpush.bf16.msra.mxu0 %v768
  %1047 = vmatpush.bf16.msra.mxu0 %v766
  %1048 = vmatpush.bf16.msra.mxu0 %v764
  %1049 = vmatmul.bf16.gmra.mxu0 %v243
  %v1050 = vpop.f32.mrf.mxu0
  %v1051 = vadd.f32 %v1032, %v1050
  %v1052 = vpop.f32.mrf.mxu0
  %v1053 = vadd.f32 %v1034, %v1052
  %1054 = vmatmul.bf16.gmra.mxu0 %v251
  %v1055 = vpop.f32.mrf.mxu0
  %v1056 = vadd.f32 %v1037, %v1055
  %v1057 = vpop.f32.mrf.mxu0
  %v1058 = vadd.f32 %v1039, %v1057
  %1059 = vdwg.mxu0
  %1060 = vmatpush.bf16.msra.mxu0 %v667
  %1061 = vmatpush.bf16.msra.mxu0 %v665
  %1062 = vmatpush.bf16.msra.mxu0 %v663
  %1063 = vmatpush.bf16.msra.mxu0 %v661
  %1064 = vmatpush.bf16.msra.mxu0 %v659
  %1065 = vmatpush.bf16.msra.mxu0 %v657
  %1066 = vmatpush.bf16.msra.mxu0 %v655
  %1067 = vmatpush.bf16.msra.mxu0 %v653
  %1068 = vmatmul.bf16.gmra.mxu0 %v236
  %v1069 = vpop.f32.mrf.mxu0
  %v1070 = vadd.f32 %v171, %v1069
  %v1071 = vpop.f32.mrf.mxu0
  %v1072 = vadd.f32 %v176, %v1071
  %1073 = vmatmul.bf16.gmra.mxu0 %v244
  %v1074 = vpop.f32.mrf.mxu0
  %v1075 = vadd.f32 %v181, %v1074
  %v1076 = vpop.f32.mrf.mxu0
  %v1077 = vadd.f32 %v186, %v1076
  %1078 = vdwg.mxu0
  %1079 = vmatpush.bf16.msra.mxu0 %v683
  %1080 = vmatpush.bf16.msra.mxu0 %v681
  %1081 = vmatpush.bf16.msra.mxu0 %v679
  %1082 = vmatpush.bf16.msra.mxu0 %v677
  %1083 = vmatpush.bf16.msra.mxu0 %v675
  %1084 = vmatpush.bf16.msra.mxu0 %v673
  %1085 = vmatpush.bf16.msra.mxu0 %v671
  %1086 = vmatpush.bf16.msra.mxu0 %v669
  %1087 = vmatmul.bf16.gmra.mxu0 %v237
  %v1088 = vpop.f32.mrf.mxu0
  %v1089 = vadd.f32 %v1070, %v1088
  %v1090 = vpop.f32.mrf.mxu0
  %v1091 = vadd.f32 %v1072, %v1090
  %1092 = vmatmul.bf16.gmra.mxu0 %v245
  %v1093 = vpop.f32.mrf.mxu0
  %v1094 = vadd.f32 %v1075, %v1093
  %v1095 = vpop.f32.mrf.mxu0
  %v1096 = vadd.f32 %v1077, %v1095
  %1097 = vdwg.mxu0
  %1098 = vmatpush.bf16.msra.mxu0 %v699
  %1099 = vmatpush.bf16.msra.mxu0 %v697
  %1100 = vmatpush.bf16.msra.mxu0 %v695
  %1101 = vmatpush.bf16.msra.mxu0 %v693
  %1102 = vmatpush.bf16.msra.mxu0 %v691
  %1103 = vmatpush.bf16.msra.mxu0 %v689
  %1104 = vmatpush.bf16.msra.mxu0 %v687
  %1105 = vmatpush.bf16.msra.mxu0 %v685
  %1106 = vmatmul.bf16.gmra.mxu0 %v238
  %v1107 = vpop.f32.mrf.mxu0
  %v1108 = vadd.f32 %v1089, %v1107
  %v1109 = vpop.f32.mrf.mxu0
  %v1110 = vadd.f32 %v1091, %v1109
  %1111 = vmatmul.bf16.gmra.mxu0 %v246
  %v1112 = vpop.f32.mrf.mxu0
  %v1113 = vadd.f32 %v1094, %v1112
  %v1114 = vpop.f32.mrf.mxu0
  %v1115 = vadd.f32 %v1096, %v1114
  %1116 = vdwg.mxu0
  %1117 = vmatpush.bf16.msra.mxu0 %v715
  %1118 = vmatpush.bf16.msra.mxu0 %v713
  %1119 = vmatpush.bf16.msra.mxu0 %v711
  %1120 = vmatpush.bf16.msra.mxu0 %v709
  %1121 = vmatpush.bf16.msra.mxu0 %v707
  %1122 = vmatpush.bf16.msra.mxu0 %v705
  %1123 = vmatpush.bf16.msra.mxu0 %v703
  %1124 = vmatpush.bf16.msra.mxu0 %v701
  %1125 = vmatmul.bf16.gmra.mxu0 %v239
  %v1126 = vpop.f32.mrf.mxu0
  %v1127 = vadd.f32 %v1108, %v1126
  %v1128 = vpop.f32.mrf.mxu0
  %v1129 = vadd.f32 %v1110, %v1128
  %1130 = vmatmul.bf16.gmra.mxu0 %v247
  %v1131 = vpop.f32.mrf.mxu0
  %v1132 = vadd.f32 %v1113, %v1131
  %v1133 = vpop.f32.mrf.mxu0
  %v1134 = vadd.f32 %v1115, %v1133
  %1135 = vdwg.mxu0
  %1136 = vmatpush.bf16.msra.mxu0 %v731
  %1137 = vmatpush.bf16.msra.mxu0 %v729
  %1138 = vmatpush.bf16.msra.mxu0 %v727
  %1139 = vmatpush.bf16.msra.mxu0 %v725
  %1140 = vmatpush.bf16.msra.mxu0 %v723
  %1141 = vmatpush.bf16.msra.mxu0 %v721
  %1142 = vmatpush.bf16.msra.mxu0 %v719
  %1143 = vmatpush.bf16.msra.mxu0 %v717
  %1144 = vmatmul.bf16.gmra.mxu0 %v240
  %v1145 = vpop.f32.mrf.mxu0
  %v1146 = vadd.f32 %v1127, %v1145
  %v1147 = vpop.f32.mrf.mxu0
  %v1148 = vadd.f32 %v1129, %v1147
  %1149 = vmatmul.bf16.gmra.mxu0 %v248
  %v1150 = vpop.f32.mrf.mxu0
  %v1151 = vadd.f32 %v1132, %v1150
  %v1152 = vpop.f32.mrf.mxu0
  %v1153 = vadd.f32 %v1134, %v1152
  %1154 = vdwg.mxu0
  %1155 = vmatpush.bf16.msra.mxu0 %v747
  %1156 = vmatpush.bf16.msra.mxu0 %v745
  %1157 = vmatpush.bf16.msra.mxu0 %v743
  %1158 = vmatpush.bf16.msra.mxu0 %v741
  %1159 = vmatpush.bf16.msra.mxu0 %v739
  %1160 = vmatpush.bf16.msra.mxu0 %v737
  %1161 = vmatpush.bf16.msra.mxu0 %v735
  %1162 = vmatpush.bf16.msra.mxu0 %v733
  %1163 = vmatmul.bf16.gmra.mxu0 %v241
  %v1164 = vpop.f32.mrf.mxu0
  %v1165 = vadd.f32 %v1146, %v1164
  %v1166 = vpop.f32.mrf.mxu0
  %v1167 = vadd.f32 %v1148, %v1166
  %1168 = vmatmul.bf16.gmra.mxu0 %v249
  %v1169 = vpop.f32.mrf.mxu0
  %v1170 = vadd.f32 %v1151, %v1169
  %v1171 = vpop.f32.mrf.mxu0
  %v1172 = vadd.f32 %v1153, %v1171
  %1173 = vdwg.mxu0
  %1174 = vmatpush.bf16.msra.mxu0 %v763
  %1175 = vmatpush.bf16.msra.mxu0 %v761
  %1176 = vmatpush.bf16.msra.mxu0 %v759
  %1177 = vmatpush.bf16.msra.mxu0 %v757
  %1178 = vmatpush.bf16.msra.mxu0 %v755
  %1179 = vmatpush.bf16.msra.mxu0 %v753
  %1180 = vmatpush.bf16.msra.mxu0 %v751
  %1181 = vmatpush.bf16.msra.mxu0 %v749
  %1182 = vmatmul.bf16.gmra.mxu0 %v242
  %v1183 = vpop.f32.mrf.mxu0
  %v1184 = vadd.f32 %v1165, %v1183
  %v1185 = vpop.f32.mrf.mxu0
  %v1186 = vadd.f32 %v1167, %v1185
  %1187 = vmatmul.bf16.gmra.mxu0 %v250
  %v1188 = vpop.f32.mrf.mxu0
  %v1189 = vadd.f32 %v1170, %v1188
  %v1190 = vpop.f32.mrf.mxu0
  %v1191 = vadd.f32 %v1172, %v1190
  %1192 = vdwg.mxu0
  %1193 = vmatpush.bf16.msra.mxu0 %v779
  %1194 = vmatpush.bf16.msra.mxu0 %v777
  %1195 = vmatpush.bf16.msra.mxu0 %v775
  %1196 = vmatpush.bf16.msra.mxu0 %v773
  %1197 = vmatpush.bf16.msra.mxu0 %v771
  %1198 = vmatpush.bf16.msra.mxu0 %v769
  %1199 = vmatpush.bf16.msra.mxu0 %v767
  %1200 = vmatpush.bf16.msra.mxu0 %v765
  %1201 = vmatmul.bf16.gmra.mxu0 %v243
  %v1202 = vpop.f32.mrf.mxu0
  %v1203 = vadd.f32 %v1184, %v1202
  %v1204 = vpop.f32.mrf.mxu0
  %v1205 = vadd.f32 %v1186, %v1204
  %1206 = vmatmul.bf16.gmra.mxu0 %v251
  %v1207 = vpop.f32.mrf.mxu0
  %v1208 = vadd.f32 %v1189, %v1207
  %v1209 = vpop.f32.mrf.mxu0
  %v1210 = vadd.f32 %v1191, %v1209
  %1211 = vdwg.mxu0
  %vm1212 = vcmask 785408
  %v1213 = vsel %vm1212, %v1203, 0.0
  %v1214 = vadd.f32 %v1051, %v1213
  %1215 = vadd.xlane.f32.xlu0 %v1214
  %v1216 = vpop.xlane.xlu0 %1215
  %v1217 = vsel %vm1212, %v1205, 0.0
  %v1218 = vadd.f32 %v1053, %v1217
  %1219 = vadd.xlane.f32.xlu0 %v1218
  %v1220 = vpop.xlane.xlu0 %1219
  %v1221 = vsel %vm1212, %v1208, 0.0
  %v1222 = vadd.f32 %v1056, %v1221
  %1223 = vadd.xlane.f32.xlu0 %v1222
  %v1224 = vpop.xlane.xlu0 %1223
  %v1225 = vsel %vm1212, %v1210, 0.0
  %v1226 = vadd.f32 %v1058, %v1225
  %1227 = vadd.xlane.f32.xlu0 %v1226
  %v1228 = vpop.xlane.xlu0 %1227
  %v1229 = vmul.f32 %v1216, 0.004464286
  %v1230 = vmul.f32 %v1220, 0.004464286
  %v1231 = vmul.f32 %v1224, 0.004464286
  %v1232 = vmul.f32 %v1228, 0.004464286
  %v1233 = vsub.f32 %v1051, %v1229
  %v1234 = vsub.f32 %v1203, %v1229
  %v1235 = vsub.f32 %v1053, %v1230
  %v1236 = vsub.f32 %v1205, %v1230
  %v1237 = vsub.f32 %v1056, %v1231
  %v1238 = vsub.f32 %v1208, %v1231
  %v1239 = vsub.f32 %v1058, %v1232
  %v1240 = vsub.f32 %v1210, %v1232
  %v1241 = vmul.f32 %v1233, %v1233
  %v1242 = vmul.f32 %v1234, %v1234
  %v1243 = vmul.f32 %v1235, %v1235
  %v1244 = vmul.f32 %v1236, %v1236
  %v1245 = vmul.f32 %v1237, %v1237
  %v1246 = vmul.f32 %v1238, %v1238
  %v1247 = vmul.f32 %v1239, %v1239
  %v1248 = vmul.f32 %v1240, %v1240
  %v1249 = vsel %vm1212, %v1242, 0.0
  %v1250 = vadd.f32 %v1241, %v1249
  %1251 = vadd.xlane.f32.xlu0 %v1250
  %v1252 = vpop.xlane.xlu0 %1251
  %v1253 = vsel %vm1212, %v1244, 0.0
  %v1254 = vadd.f32 %v1243, %v1253
  %1255 = vadd.xlane.f32.xlu0 %v1254
  %v1256 = vpop.xlane.xlu0 %1255
  %v1257 = vsel %vm1212, %v1246, 0.0
  %v1258 = vadd.f32 %v1245, %v1257
  %1259 = vadd.xlane.f32.xlu0 %v1258
  %v1260 = vpop.xlane.xlu0 %1259
  %v1261 = vsel %vm1212, %v1248, 0.0
  %v1262 = vadd.f32 %v1247, %v1261
  %1263 = vadd.xlane.f32.xlu0 %v1262
  %v1264 = vpop.xlane.xlu0 %1263
  %v1265 = vmul.f32 %v1252, 0.004464286
  %v1266 = vmul.f32 %v1256, 0.004464286
  %v1267 = vmul.f32 %v1260, 0.004464286
  %v1268 = vmul.f32 %v1264, 0.004464286
  %v1269 = vld [vmem:[%s3] sm:$0xff]
  %v1270 = vld [vmem:[%s3 + $0x8] sm:$0xff]
  %v1271 = vld [vmem:[%s3 + $0x10] sm:$0xff]
  %v1272 = vld [vmem:[%s3 + $0x18] sm:$0xff]
  %v1273 = vadd.f32 %v1265, 1e-05
  %v1274 = vadd.f32 %v1266, 1e-05
  %v1275 = vadd.f32 %v1267, 1e-05
  %v1276 = vadd.f32 %v1268, 1e-05
  %v1277 = vrsqrt.pop %v1273
  %v1278 = vmul.f32 %v1277, %v1273
  %v1279 = vmul.f32 %v1278, %v1277
  %v1280 = vmul.f32 0.5, %v1279
  %v1281 = vsub.f32 1.5, %v1280
  %v1282 = vmul.f32 %v1277, %v1281
  %vm1283 = vweird.f32 %v1273
  %vm1284 = vweird.f32 %v1277
  %vm1285 = vmor %vm1283, %vm1284
  %v1286 = vsel %vm1285, %v1277, %v1282
  %v1287 = vrsqrt.pop %v1274
  %v1288 = vmul.f32 %v1287, %v1274
  %v1289 = vmul.f32 %v1288, %v1287
  %v1290 = vmul.f32 0.5, %v1289
  %v1291 = vsub.f32 1.5, %v1290
  %v1292 = vmul.f32 %v1287, %v1291
  %vm1293 = vweird.f32 %v1274
  %vm1294 = vweird.f32 %v1287
  %vm1295 = vmor %vm1293, %vm1294
  %v1296 = vsel %vm1295, %v1287, %v1292
  %v1297 = vrsqrt.pop %v1275
  %v1298 = vmul.f32 %v1297, %v1275
  %v1299 = vmul.f32 %v1298, %v1297
  %v1300 = vmul.f32 0.5, %v1299
  %v1301 = vsub.f32 1.5, %v1300
  %v1302 = vmul.f32 %v1297, %v1301
  %vm1303 = vweird.f32 %v1275
  %vm1304 = vweird.f32 %v1297
  %vm1305 = vmor %vm1303, %vm1304
  %v1306 = vsel %vm1305, %v1297, %v1302
  %v1307 = vrsqrt.pop %v1276
  %v1308 = vmul.f32 %v1307, %v1276
  %v1309 = vmul.f32 %v1308, %v1307
  %v1310 = vmul.f32 0.5, %v1309
  %v1311 = vsub.f32 1.5, %v1310
  %v1312 = vmul.f32 %v1307, %v1311
  %vm1313 = vweird.f32 %v1276
  %vm1314 = vweird.f32 %v1307
  %vm1315 = vmor %vm1313, %vm1314
  %v1316 = vsel %vm1315, %v1307, %v1312
  %v1317 = vmul.f32 %v1269, %v1286
  %v1318 = vmul.f32 %v1270, %v1296
  %v1319 = vmul.f32 %v1271, %v1306
  %v1320 = vmul.f32 %v1272, %v1316
  %1322 = vset.pattern.permute.xlu0 0
  %1323 = vperm.xlu0 %1322, %v1317
  %v1324 = vpop.permute.xlu0 %1323
  %1327 = vset.pattern.permute.xlu0 0
  %1328 = vperm.xlu0 %1327, %v1318
  %v1329 = vpop.permute.xlu0 %1328
  %1332 = vset.pattern.permute.xlu0 0
  %1333 = vperm.xlu0 %1332, %v1319
  %v1334 = vpop.permute.xlu0 %1333
  %1337 = vset.pattern.permute.xlu0 0
  %1338 = vperm.xlu0 %1337, %v1320
  %v1339 = vpop.permute.xlu0 %1338
  %v1341 = vmul.f32 %v1233, %v1324
  %v1342 = vmul.f32 %v1234, %v1324
  %v1343 = vmul.f32 %v1235, %v1329
  %v1344 = vmul.f32 %v1236, %v1329
  %v1345 = vmul.f32 %v1237, %v1334
  %v1346 = vmul.f32 %v1238, %v1334
  %v1347 = vmul.f32 %v1239, %v1339
  %v1348 = vmul.f32 %v1240, %v1339
  %v1349 = vld [vmem:[%s4] sm:$0xff]
  %v1350 = vld [vmem:[%s4 + $0x8] sm:$0xff]
  %v1351 = vld [vmem:[%s4 + $0x10] sm:$0xff]
  %v1352 = vld [vmem:[%s4 + $0x18] sm:$0xff]
  %1354 = vset.pattern.permute.xlu0 0
  %1355 = vperm.xlu0 %1354, %v1349
  %v1356 = vpop.permute.xlu0 %1355
  %1359 = vset.pattern.permute.xlu0 0
  %1360 = vperm.xlu0 %1359, %v1350
  %v1361 = vpop.permute.xlu0 %1360
  %1364 = vset.pattern.permute.xlu0 0
  %1365 = vperm.xlu0 %1364, %v1351
  %v1366 = vpop.permute.xlu0 %1365
  %1369 = vset.pattern.permute.xlu0 0
  %1370 = vperm.xlu0 %1369, %v1352
  %v1371 = vpop.permute.xlu0 %1370
  %v1373 = vadd.f32 %v1341, %v1356
  %v1374 = vadd.f32 %v1342, %v1356
  %v1375 = vadd.f32 %v1343, %v1361
  %v1376 = vadd.f32 %v1344, %v1361
  %v1377 = vadd.f32 %v1345, %v1366
  %v1378 = vadd.f32 %v1346, %v1366
  %v1379 = vadd.f32 %v1347, %v1371
  %v1380 = vadd.f32 %v1348, %v1371
  %vm1381 = vcmp.ge.f32.partialorder %v1373, 0.0
  %vm1382 = vcmp.ge.f32.partialorder %v1374, 0.0
  %vm1383 = vcmp.ge.f32.partialorder %v1375, 0.0
  %vm1384 = vcmp.ge.f32.partialorder %v1376, 0.0
  %vm1385 = vcmp.ge.f32.partialorder %v1377, 0.0
  %vm1386 = vcmp.ge.f32.partialorder %v1378, 0.0
  %vm1387 = vcmp.ge.f32.partialorder %v1379, 0.0
  %vm1388 = vcmp.ge.f32.partialorder %v1380, 0.0
  %v1389 = vmul.f32 %v1373, 0.2
  %v1390 = vmul.f32 %v1374, 0.2
  %v1391 = vmul.f32 %v1375, 0.2
  %v1392 = vmul.f32 %v1376, 0.2
  %v1393 = vmul.f32 %v1377, 0.2
  %v1394 = vmul.f32 %v1378, 0.2
  %v1395 = vmul.f32 %v1379, 0.2
  %v1396 = vmul.f32 %v1380, 0.2
  %v1397 = vsel %vm1381, %v1373, %v1389
  %v1398 = vsel %vm1382, %v1374, %v1390
  %v1399 = vsel %vm1383, %v1375, %v1391
  %v1400 = vsel %vm1384, %v1376, %v1392
  %v1401 = vsel %vm1385, %v1377, %v1393
  %v1402 = vsel %vm1386, %v1378, %v1394
  %v1403 = vsel %vm1387, %v1379, %v1395
  %v1404 = vsel %vm1388, %v1380, %v1396
  %v1405 = vpack.c.bf16 %v1398, %v1397
  %v1406 = vpack.c.bf16 %v1400, %v1399
  %v1407 = vpack.c.bf16 %v1402, %v1401
  %v1408 = vpack.c.bf16 %v1404, %v1403
  %vm1409 = vcmask 1043456
  %vm1410 = vcmask 785412
  %vm1411 = vmor %vm1410, %vm1409
  %1412 = vst.msk [vmem:[%s5] sm:$0xff] %vm1411, %v1405
  %1413 = vst.msk [vmem:[%s5 + $0x8] sm:$0xff] %vm1411, %v1406
  %1414 = vst.msk [vmem:[%s5 + $0x10] sm:$0xff] %vm1411, %v1407
  %1415 = vst.msk [vmem:[%s5 + $0x18] sm:$0xff] %vm1411, %v1408
  // Predicated region
  $region22: #{_lambda_.5} parent=0 // pred_check
    _
  $region23: #{_lambda_.5} parent=0 // pred_check_branch
    %1417 = sbr.rel (0) target = $region25
  $region24: #{_lambda_.5} parent=0 // pred_region
    _
  $region25: #{_lambda_.5} parent=0 // pred_fallthru
    _
  // Predicated region
  $region26: #{_lambda_.5} parent=0 // pred_check
    _
  $region27: #{_lambda_.5} parent=0 // pred_check_branch
    %1419 = sbr.rel (0) target = $region29
  $region28: #{_lambda_.5} parent=0 // pred_region
    _
  $region29: #{_lambda_.5} parent=0 // pred_fallthru
    _

// kernel: _lambda_.6
$region0: #{_lambda_.6}
  #allocation0 [shape = 'u32[]', space=smem, size = 0x4, offset = 0x4, fixed_abs, tag = 'smem constant byte address 0x4 - core index']
  #allocation1 [shape = 'u32[72,128]{1,0:T(1,128)}', space=vmem, size = 0x9000, scoped, tag = 'internal scratch']
  %s0 = inlined_call_operand.vmem [shape: bf16[64,2048], index: 0, kind: input, shape index: {}]
  %s1 = inlined_call_operand.vmem [shape: bf16[2048,32], index: 1, kind: input, shape index: {}]
  %s2 = inlined_call_operand.vmem [shape: f32[64,1], index: 2, kind: input, shape index: {}]
  %s3 = inlined_call_operand.vmem [shape: f32[64,1], index: 3, kind: input, shape index: {}]
  %s4 = inlined_call_operand.vmem [shape: f32[64,1], index: 4, kind: input, shape index: {}]
  %s5 = inlined_call_operand.vmem [shape: bf16[64,32], index: 5, kind: output, shape index: {}]
  %s6 = sld [smem:[#allocation0]]
  $region30: #{_lambda_.6} parent=0
    _
  %s8 = ssub.s32 1, %s6
  %s9 = scalar_select 0, %s8, %s6
  // Predicated region
  $region2: #{_lambda_.6} parent=0 // pred_check
    _
  $region3: #{_lambda_.6} parent=0 // pred_check_branch
    %11 = sbr.rel (0) target = $region5
  $region4: #{_lambda_.6} parent=0 // pred_region
    _
  $region5: #{_lambda_.6} parent=0 // pred_fallthru
    _
  // Predicated region
  $region6: #{_lambda_.6} parent=0 // pred_check
    _
  $region7: #{_lambda_.6} parent=0 // pred_check_branch
    %13 = sbr.rel (0) target = $region9
  $region8: #{_lambda_.6} parent=0 // pred_region
    _
  $region9: #{_lambda_.6} parent=0 // pred_fallthru
    _
  // Predicated region
  $region10: #{_lambda_.6} parent=0 // pred_check
    _
  $region11: #{_lambda_.6} parent=0 // pred_check_branch
    %15 = sbr.rel (0) target = $region13
  $region12: #{_lambda_.6} parent=0 // pred_region
    _
  $region13: #{_lambda_.6} parent=0 // pred_fallthru
    _
  // Predicated region
  $region14: #{_lambda_.6} parent=0 // pred_check
    _
  $region15: #{_lambda_.6} parent=0 // pred_check_branch
    %17 = sbr.rel (0) target = $region17
  $region16: #{_lambda_.6} parent=0 // pred_region
    _
  $region17: #{_lambda_.6} parent=0 // pred_fallthru
    _
  // Predicated region
  $region18: #{_lambda_.6} parent=0 // pred_check
    _
  $region19: #{_lambda_.6} parent=0 // pred_check_branch
    %19 = sbr.rel (0) target = $region21
  $region20: #{_lambda_.6} parent=0 // pred_region
    _
  $region21: #{_lambda_.6} parent=0 // pred_fallthru
    _
  %v20 = vld [vmem:[%s0] sm:$0xff]
  %v21 = vld [vmem:[%s0 + $0x8] sm:$0xff]
  %v22 = vld [vmem:[%s0 + $0x10] sm:$0xff]
  %v23 = vld [vmem:[%s0 + $0x18] sm:$0xff]
  %v24 = vld [vmem:[%s0 + $0x20] sm:$0xff]
  %v25 = vld [vmem:[%s0 + $0x28] sm:$0xff]
  %v26 = vld [vmem:[%s0 + $0x30] sm:$0xff]
  %v27 = vld [vmem:[%s0 + $0x38] sm:$0xff]
  %v28 = vld [vmem:[%s0 + $0x40] sm:$0xff]
  %v29 = vld [vmem:[%s0 + $0x48] sm:$0xff]
  %v30 = vld [vmem:[%s0 + $0x50] sm:$0xff]
  %v31 = vld [vmem:[%s0 + $0x58] sm:$0xff]
  %v32 = vld [vmem:[%s0 + $0x60] sm:$0xff]
  %v33 = vld [vmem:[%s0 + $0x68] sm:$0xff]
  %v34 = vld [vmem:[%s0 + $0x70] sm:$0xff]
  %v35 = vld [vmem:[%s0 + $0x78] sm:$0xff]
  %v36 = vld [vmem:[%s0 + $0x80] sm:$0xff]
  %v37 = vld [vmem:[%s0 + $0x88] sm:$0xff]
  %v38 = vld [vmem:[%s0 + $0x90] sm:$0xff]
  %v39 = vld [vmem:[%s0 + $0x98] sm:$0xff]
  %v40 = vld [vmem:[%s0 + $0xa0] sm:$0xff]
  %v41 = vld [vmem:[%s0 + $0xa8] sm:$0xff]
  %v42 = vld [vmem:[%s0 + $0xb0] sm:$0xff]
  %v43 = vld [vmem:[%s0 + $0xb8] sm:$0xff]
  %v44 = vld [vmem:[%s0 + $0xc0] sm:$0xff]
  %v45 = vld [vmem:[%s0 + $0xc8] sm:$0xff]
  %v46 = vld [vmem:[%s0 + $0xd0] sm:$0xff]
  %v47 = vld [vmem:[%s0 + $0xd8] sm:$0xff]
  %v48 = vld [vmem:[%s0 + $0xe0] sm:$0xff]
  %v49 = vld [vmem:[%s0 + $0xe8] sm:$0xff]
  %v50 = vld [vmem:[%s0 + $0xf0] sm:$0xff]
  %v51 = vld [vmem:[%s0 + $0xf8] sm:$0xff]
  %v52 = vld [vmem:[%s0 + $0x100] sm:$0xff]
  %v53 = vld [vmem:[%s0 + $0x108] sm:$0xff]
  %v54 = vld [vmem:[%s0 + $0x110] sm:$0xff]
  %v55 = vld [vmem:[%s0 + $0x118] sm:$0xff]
  %v56 = vld [vmem:[%s0 + $0x120] sm:$0xff]
  %v57 = vld [vmem:[%s0 + $0x128] sm:$0xff]
  %v58 = vld [vmem:[%s0 + $0x130] sm:$0xff]
  %v59 = vld [vmem:[%s0 + $0x138] sm:$0xff]
  %v60 = vld [vmem:[%s0 + $0x140] sm:$0xff]
  %v61 = vld [vmem:[%s0 + $0x148] sm:$0xff]
  %v62 = vld [vmem:[%s0 + $0x150] sm:$0xff]
  %v63 = vld [vmem:[%s0 + $0x158] sm:$0xff]
  %v64 = vld [vmem:[%s0 + $0x160] sm:$0xff]
  %v65 = vld [vmem:[%s0 + $0x168] sm:$0xff]
  %v66 = vld [vmem:[%s0 + $0x170] sm:$0xff]
  %v67 = vld [vmem:[%s0 + $0x178] sm:$0xff]
  %v68 = vld [vmem:[%s0 + $0x180] sm:$0xff]
  %v69 = vld [vmem:[%s0 + $0x188] sm:$0xff]
  %v70 = vld [vmem:[%s0 + $0x190] sm:$0xff]
  %v71 = vld [vmem:[%s0 + $0x198] sm:$0xff]
  %v72 = vld [vmem:[%s0 + $0x1a0] sm:$0xff]
  %v73 = vld [vmem:[%s0 + $0x1a8] sm:$0xff]
  %v74 = vld [vmem:[%s0 + $0x1b0] sm:$0xff]
  %v75 = vld [vmem:[%s0 + $0x1b8] sm:$0xff]
  %v76 = vld [vmem:[%s0 + $0x1c0] sm:$0xff]
  %v77 = vld [vmem:[%s0 + $0x1c8] sm:$0xff]
  %v78 = vld [vmem:[%s0 + $0x1d0] sm:$0xff]
  %v79 = vld [vmem:[%s0 + $0x1d8] sm:$0xff]
  %v80 = vld [vmem:[%s0 + $0x1e0] sm:$0xff]
  %v81 = vld [vmem:[%s0 + $0x1e8] sm:$0xff]
  %v82 = vld [vmem:[%s0 + $0x1f0] sm:$0xff]
  %v83 = vld [vmem:[%s0 + $0x1f8] sm:$0xff]
  %v84 = vld [vmem:[%s1] sm:$0xf]
  %v85 = vld [vmem:[%s1 + $0x4] sm:$0xf]
  %v86 = vld [vmem:[%s1 + $0x8] sm:$0xf]
  %v87 = vld [vmem:[%s1 + $0xc] sm:$0xf]
  %v88 = vld [vmem:[%s1 + $0x10] sm:$0xf]
  %v89 = vld [vmem:[%s1 + $0x14] sm:$0xf]
  %v90 = vld [vmem:[%s1 + $0x18] sm:$0xf]
  %v91 = vld [vmem:[%s1 + $0x1c] sm:$0xf]
  %v92 = vld [vmem:[%s1 + $0x20] sm:$0xf]
  %v93 = vld [vmem:[%s1 + $0x24] sm:$0xf]
  %v94 = vld [vmem:[%s1 + $0x28] sm:$0xf]
  %v95 = vld [vmem:[%s1 + $0x2c] sm:$0xf]
  %v96 = vld [vmem:[%s1 + $0x30] sm:$0xf]
  %v97 = vld [vmem:[%s1 + $0x34] sm:$0xf]
  %v98 = vld [vmem:[%s1 + $0x38] sm:$0xf]
  %v99 = vld [vmem:[%s1 + $0x3c] sm:$0xf]
  %v100 = vld [vmem:[%s1 + $0x40] sm:$0xf]
  %v101 = vld [vmem:[%s1 + $0x44] sm:$0xf]
  %v102 = vld [vmem:[%s1 + $0x48] sm:$0xf]
  %v103 = vld [vmem:[%s1 + $0x4c] sm:$0xf]
  %v104 = vld [vmem:[%s1 + $0x50] sm:$0xf]
  %v105 = vld [vmem:[%s1 + $0x54] sm:$0xf]
  %v106 = vld [vmem:[%s1 + $0x58] sm:$0xf]
  %v107 = vld [vmem:[%s1 + $0x5c] sm:$0xf]
  %v108 = vld [vmem:[%s1 + $0x60] sm:$0xf]
  %v109 = vld [vmem:[%s1 + $0x64] sm:$0xf]
  %v110 = vld [vmem:[%s1 + $0x68] sm:$0xf]
  %v111 = vld [vmem:[%s1 + $0x6c] sm:$0xf]
  %v112 = vld [vmem:[%s1 + $0x70] sm:$0xf]
  %v113 = vld [vmem:[%s1 + $0x74] sm:$0xf]
  %v114 = vld [vmem:[%s1 + $0x78] sm:$0xf]
  %v115 = vld [vmem:[%s1 + $0x7c] sm:$0xf]
  %v116 = vld [vmem:[%s1 + $0x80] sm:$0xf]
  %v117 = vld [vmem:[%s1 + $0x84] sm:$0xf]
  %v118 = vld [vmem:[%s1 + $0x88] sm:$0xf]
  %v119 = vld [vmem:[%s1 + $0x8c] sm:$0xf]
  %v120 = vld [vmem:[%s1 + $0x90] sm:$0xf]
  %v121 = vld [vmem:[%s1 + $0x94] sm:$0xf]
  %v122 = vld [vmem:[%s1 + $0x98] sm:$0xf]
  %v123 = vld [vmem:[%s1 + $0x9c] sm:$0xf]
  %v124 = vld [vmem:[%s1 + $0xa0] sm:$0xf]
  %v125 = vld [vmem:[%s1 + $0xa4] sm:$0xf]
  %v126 = vld [vmem:[%s1 + $0xa8] sm:$0xf]
  %v127 = vld [vmem:[%s1 + $0xac] sm:$0xf]
  %v128 = vld [vmem:[%s1 + $0xb0] sm:$0xf]
  %v129 = vld [vmem:[%s1 + $0xb4] sm:$0xf]
  %v130 = vld [vmem:[%s1 + $0xb8] sm:$0xf]
  %v131 = vld [vmem:[%s1 + $0xbc] sm:$0xf]
  %v132 = vld [vmem:[%s1 + $0xc0] sm:$0xf]
  %v133 = vld [vmem:[%s1 + $0xc4] sm:$0xf]
  %v134 = vld [vmem:[%s1 + $0xc8] sm:$0xf]
  %v135 = vld [vmem:[%s1 + $0xcc] sm:$0xf]
  %v136 = vld [vmem:[%s1 + $0xd0] sm:$0xf]
  %v137 = vld [vmem:[%s1 + $0xd4] sm:$0xf]
  %v138 = vld [vmem:[%s1 + $0xd8] sm:$0xf]
  %v139 = vld [vmem:[%s1 + $0xdc] sm:$0xf]
  %v140 = vld [vmem:[%s1 + $0xe0] sm:$0xf]
  %v141 = vld [vmem:[%s1 + $0xe4] sm:$0xf]
  %v142 = vld [vmem:[%s1 + $0xe8] sm:$0xf]
  %v143 = vld [vmem:[%s1 + $0xec] sm:$0xf]
  %v144 = vld [vmem:[%s1 + $0xf0] sm:$0xf]
  %v145 = vld [vmem:[%s1 + $0xf4] sm:$0xf]
  %v146 = vld [vmem:[%s1 + $0xf8] sm:$0xf]
  %v147 = vld [vmem:[%s1 + $0xfc] sm:$0xf]
  %v148 = vld [vmem:[%s1 + $0x100] sm:$0xf]
  %v149 = vld [vmem:[%s1 + $0x104] sm:$0xf]
  %v150 = vld [vmem:[%s1 + $0x108] sm:$0xf]
  %v151 = vld [vmem:[%s1 + $0x10c] sm:$0xf]
  %v152 = vld [vmem:[%s1 + $0x110] sm:$0xf]
  %v153 = vld [vmem:[%s1 + $0x114] sm:$0xf]
  %v154 = vld [vmem:[%s1 + $0x118] sm:$0xf]
  %v155 = vld [vmem:[%s1 + $0x11c] sm:$0xf]
  %v156 = vld [vmem:[%s1 + $0x120] sm:$0xf]
  %v157 = vld [vmem:[%s1 + $0x124] sm:$0xf]
  %v158 = vld [vmem:[%s1 + $0x128] sm:$0xf]
  %v159 = vld [vmem:[%s1 + $0x12c] sm:$0xf]
  %v160 = vld [vmem:[%s1 + $0x130] sm:$0xf]
  %v161 = vld [vmem:[%s1 + $0x134] sm:$0xf]
  %v162 = vld [vmem:[%s1 + $0x138] sm:$0xf]
  %v163 = vld [vmem:[%s1 + $0x13c] sm:$0xf]
  %v164 = vld [vmem:[%s1 + $0x140] sm:$0xf]
  %v165 = vld [vmem:[%s1 + $0x144] sm:$0xf]
  %v166 = vld [vmem:[%s1 + $0x148] sm:$0xf]
  %v167 = vld [vmem:[%s1 + $0x14c] sm:$0xf]
  %v168 = vld [vmem:[%s1 + $0x150] sm:$0xf]
  %v169 = vld [vmem:[%s1 + $0x154] sm:$0xf]
  %v170 = vld [vmem:[%s1 + $0x158] sm:$0xf]
  %v171 = vld [vmem:[%s1 + $0x15c] sm:$0xf]
  %v172 = vld [vmem:[%s1 + $0x160] sm:$0xf]
  %v173 = vld [vmem:[%s1 + $0x164] sm:$0xf]
  %v174 = vld [vmem:[%s1 + $0x168] sm:$0xf]
  %v175 = vld [vmem:[%s1 + $0x16c] sm:$0xf]
  %v176 = vld [vmem:[%s1 + $0x170] sm:$0xf]
  %v177 = vld [vmem:[%s1 + $0x174] sm:$0xf]
  %v178 = vld [vmem:[%s1 + $0x178] sm:$0xf]
  %v179 = vld [vmem:[%s1 + $0x17c] sm:$0xf]
  %v180 = vld [vmem:[%s1 + $0x180] sm:$0xf]
  %v181 = vld [vmem:[%s1 + $0x184] sm:$0xf]
  %v182 = vld [vmem:[%s1 + $0x188] sm:$0xf]
  %v183 = vld [vmem:[%s1 + $0x18c] sm:$0xf]
  %v184 = vld [vmem:[%s1 + $0x190] sm:$0xf]
  %v185 = vld [vmem:[%s1 + $0x194] sm:$0xf]
  %v186 = vld [vmem:[%s1 + $0x198] sm:$0xf]
  %v187 = vld [vmem:[%s1 + $0x19c] sm:$0xf]
  %v188 = vld [vmem:[%s1 + $0x1a0] sm:$0xf]
  %v189 = vld [vmem:[%s1 + $0x1a4] sm:$0xf]
  %v190 = vld [vmem:[%s1 + $0x1a8] sm:$0xf]
  %v191 = vld [vmem:[%s1 + $0x1ac] sm:$0xf]
  %v192 = vld [vmem:[%s1 + $0x1b0] sm:$0xf]
  %v193 = vld [vmem:[%s1 + $0x1b4] sm:$0xf]
  %v194 = vld [vmem:[%s1 + $0x1b8] sm:$0xf]
  %v195 = vld [vmem:[%s1 + $0x1bc] sm:$0xf]
  %v196 = vld [vmem:[%s1 + $0x1c0] sm:$0xf]
  %v197 = vld [vmem:[%s1 + $0x1c4] sm:$0xf]
  %v198 = vld [vmem:[%s1 + $0x1c8] sm:$0xf]
  %v199 = vld [vmem:[%s1 + $0x1cc] sm:$0xf]
  %v200 = vld [vmem:[%s1 + $0x1d0] sm:$0xf]
  %v201 = vld [vmem:[%s1 + $0x1d4] sm:$0xf]
  %v202 = vld [vmem:[%s1 + $0x1d8] sm:$0xf]
  %v203 = vld [vmem:[%s1 + $0x1dc] sm:$0xf]
  %v204 = vld [vmem:[%s1 + $0x1e0] sm:$0xf]
  %v205 = vld [vmem:[%s1 + $0x1e4] sm:$0xf]
  %v206 = vld [vmem:[%s1 + $0x1e8] sm:$0xf]
  %v207 = vld [vmem:[%s1 + $0x1ec] sm:$0xf]
  %v208 = vld [vmem:[%s1 + $0x1f0] sm:$0xf]
  %v209 = vld [vmem:[%s1 + $0x1f4] sm:$0xf]
  %v210 = vld [vmem:[%s1 + $0x1f8] sm:$0xf]
  %v211 = vld [vmem:[%s1 + $0x1fc] sm:$0xf]
  %v212 = vld [vmem:[%s1 + $0x200] sm:$0xf]
  %v213 = vld [vmem:[%s1 + $0x204] sm:$0xf]
  %v214 = vld [vmem:[%s1 + $0x208] sm:$0xf]
  %v215 = vld [vmem:[%s1 + $0x20c] sm:$0xf]
  %v216 = vld [vmem:[%s1 + $0x210] sm:$0xf]
  %v217 = vld [vmem:[%s1 + $0x214] sm:$0xf]
  %v218 = vld [vmem:[%s1 + $0x218] sm:$0xf]
  %v219 = vld [vmem:[%s1 + $0x21c] sm:$0xf]
  %v220 = vld [vmem:[%s1 + $0x220] sm:$0xf]
  %v221 = vld [vmem:[%s1 + $0x224] sm:$0xf]
  %v222 = vld [vmem:[%s1 + $0x228] sm:$0xf]
  %v223 = vld [vmem:[%s1 + $0x22c] sm:$0xf]
  %v224 = vld [vmem:[%s1 + $0x230] sm:$0xf]
  %v225 = vld [vmem:[%s1 + $0x234] sm:$0xf]
  %v226 = vld [vmem:[%s1 + $0x238] sm:$0xf]
  %v227 = vld [vmem:[%s1 + $0x23c] sm:$0xf]
  %v228 = vld [vmem:[%s1 + $0x240] sm:$0xf]
  %v229 = vld [vmem:[%s1 + $0x244] sm:$0xf]
  %v230 = vld [vmem:[%s1 + $0x248] sm:$0xf]
  %v231 = vld [vmem:[%s1 + $0x24c] sm:$0xf]
  %v232 = vld [vmem:[%s1 + $0x250] sm:$0xf]
  %v233 = vld [vmem:[%s1 + $0x254] sm:$0xf]
  %v234 = vld [vmem:[%s1 + $0x258] sm:$0xf]
  %v235 = vld [vmem:[%s1 + $0x25c] sm:$0xf]
  %v236 = vld [vmem:[%s1 + $0x260] sm:$0xf]
  %v237 = vld [vmem:[%s1 + $0x264] sm:$0xf]
  %v238 = vld [vmem:[%s1 + $0x268] sm:$0xf]
  %v239 = vld [vmem:[%s1 + $0x26c] sm:$0xf]
  %v240 = vld [vmem:[%s1 + $0x270] sm:$0xf]
  %v241 = vld [vmem:[%s1 + $0x274] sm:$0xf]
  %v242 = vld [vmem:[%s1 + $0x278] sm:$0xf]
  %v243 = vld [vmem:[%s1 + $0x27c] sm:$0xf]
  %v244 = vld [vmem:[%s1 + $0x280] sm:$0xf]
  %v245 = vld [vmem:[%s1 + $0x284] sm:$0xf]
  %v246 = vld [vmem:[%s1 + $0x288] sm:$0xf]
  %v247 = vld [vmem:[%s1 + $0x28c] sm:$0xf]
  %v248 = vld [vmem:[%s1 + $0x290] sm:$0xf]
  %v249 = vld [vmem:[%s1 + $0x294] sm:$0xf]
  %v250 = vld [vmem:[%s1 + $0x298] sm:$0xf]
  %v251 = vld [vmem:[%s1 + $0x29c] sm:$0xf]
  %v252 = vld [vmem:[%s1 + $0x2a0] sm:$0xf]
  %v253 = vld [vmem:[%s1 + $0x2a4] sm:$0xf]
  %v254 = vld [vmem:[%s1 + $0x2a8] sm:$0xf]
  %v255 = vld [vmem:[%s1 + $0x2ac] sm:$0xf]
  %v256 = vld [vmem:[%s1 + $0x2b0] sm:$0xf]
  %v257 = vld [vmem:[%s1 + $0x2b4] sm:$0xf]
  %v258 = vld [vmem:[%s1 + $0x2b8] sm:$0xf]
  %v259 = vld [vmem:[%s1 + $0x2bc] sm:$0xf]
  %v260 = vld [vmem:[%s1 + $0x2c0] sm:$0xf]
  %v261 = vld [vmem:[%s1 + $0x2c4] sm:$0xf]
  %v262 = vld [vmem:[%s1 + $0x2c8] sm:$0xf]
  %v263 = vld [vmem:[%s1 + $0x2cc] sm:$0xf]
  %v264 = vld [vmem:[%s1 + $0x2d0] sm:$0xf]
  %v265 = vld [vmem:[%s1 + $0x2d4] sm:$0xf]
  %v266 = vld [vmem:[%s1 + $0x2d8] sm:$0xf]
  %v267 = vld [vmem:[%s1 + $0x2dc] sm:$0xf]
  %v268 = vld [vmem:[%s1 + $0x2e0] sm:$0xf]
  %v269 = vld [vmem:[%s1 + $0x2e4] sm:$0xf]
  %v270 = vld [vmem:[%s1 + $0x2e8] sm:$0xf]
  %v271 = vld [vmem:[%s1 + $0x2ec] sm:$0xf]
  %v272 = vld [vmem:[%s1 + $0x2f0] sm:$0xf]
  %v273 = vld [vmem:[%s1 + $0x2f4] sm:$0xf]
  %v274 = vld [vmem:[%s1 + $0x2f8] sm:$0xf]
  %v275 = vld [vmem:[%s1 + $0x2fc] sm:$0xf]
  %v276 = vld [vmem:[%s1 + $0x300] sm:$0xf]
  %v277 = vld [vmem:[%s1 + $0x304] sm:$0xf]
  %v278 = vld [vmem:[%s1 + $0x308] sm:$0xf]
  %v279 = vld [vmem:[%s1 + $0x30c] sm:$0xf]
  %v280 = vld [vmem:[%s1 + $0x310] sm:$0xf]
  %v281 = vld [vmem:[%s1 + $0x314] sm:$0xf]
  %v282 = vld [vmem:[%s1 + $0x318] sm:$0xf]
  %v283 = vld [vmem:[%s1 + $0x31c] sm:$0xf]
  %v284 = vld [vmem:[%s1 + $0x320] sm:$0xf]
  %v285 = vld [vmem:[%s1 + $0x324] sm:$0xf]
  %v286 = vld [vmem:[%s1 + $0x328] sm:$0xf]
  %v287 = vld [vmem:[%s1 + $0x32c] sm:$0xf]
  %v288 = vld [vmem:[%s1 + $0x330] sm:$0xf]
  %v289 = vld [vmem:[%s1 + $0x334] sm:$0xf]
  %v290 = vld [vmem:[%s1 + $0x338] sm:$0xf]
  %v291 = vld [vmem:[%s1 + $0x33c] sm:$0xf]
  %v292 = vld [vmem:[%s1 + $0x340] sm:$0xf]
  %v293 = vld [vmem:[%s1 + $0x344] sm:$0xf]
  %v294 = vld [vmem:[%s1 + $0x348] sm:$0xf]
  %v295 = vld [vmem:[%s1 + $0x34c] sm:$0xf]
  %v296 = vld [vmem:[%s1 + $0x350] sm:$0xf]
  %v297 = vld [vmem:[%s1 + $0x354] sm:$0xf]
  %v298 = vld [vmem:[%s1 + $0x358] sm:$0xf]
  %v299 = vld [vmem:[%s1 + $0x35c] sm:$0xf]
  %v300 = vld [vmem:[%s1 + $0x360] sm:$0xf]
  %v301 = vld [vmem:[%s1 + $0x364] sm:$0xf]
  %v302 = vld [vmem:[%s1 + $0x368] sm:$0xf]
  %v303 = vld [vmem:[%s1 + $0x36c] sm:$0xf]
  %v304 = vld [vmem:[%s1 + $0x370] sm:$0xf]
  %v305 = vld [vmem:[%s1 + $0x374] sm:$0xf]
  %v306 = vld [vmem:[%s1 + $0x378] sm:$0xf]
  %v307 = vld [vmem:[%s1 + $0x37c] sm:$0xf]
  %v308 = vld [vmem:[%s1 + $0x380] sm:$0xf]
  %v309 = vld [vmem:[%s1 + $0x384] sm:$0xf]
  %v310 = vld [vmem:[%s1 + $0x388] sm:$0xf]
  %v311 = vld [vmem:[%s1 + $0x38c] sm:$0xf]
  %v312 = vld [vmem:[%s1 + $0x390] sm:$0xf]
  %v313 = vld [vmem:[%s1 + $0x394] sm:$0xf]
  %v314 = vld [vmem:[%s1 + $0x398] sm:$0xf]
  %v315 = vld [vmem:[%s1 + $0x39c] sm:$0xf]
  %v316 = vld [vmem:[%s1 + $0x3a0] sm:$0xf]
  %v317 = vld [vmem:[%s1 + $0x3a4] sm:$0xf]
  %v318 = vld [vmem:[%s1 + $0x3a8] sm:$0xf]
  %v319 = vld [vmem:[%s1 + $0x3ac] sm:$0xf]
  %v320 = vld [vmem:[%s1 + $0x3b0] sm:$0xf]
  %v321 = vld [vmem:[%s1 + $0x3b4] sm:$0xf]
  %v322 = vld [vmem:[%s1 + $0x3b8] sm:$0xf]
  %v323 = vld [vmem:[%s1 + $0x3bc] sm:$0xf]
  %v324 = vld [vmem:[%s1 + $0x3c0] sm:$0xf]
  %v325 = vld [vmem:[%s1 + $0x3c4] sm:$0xf]
  %v326 = vld [vmem:[%s1 + $0x3c8] sm:$0xf]
  %v327 = vld [vmem:[%s1 + $0x3cc] sm:$0xf]
  %v328 = vld [vmem:[%s1 + $0x3d0] sm:$0xf]
  %v329 = vld [vmem:[%s1 + $0x3d4] sm:$0xf]
  %v330 = vld [vmem:[%s1 + $0x3d8] sm:$0xf]
  %v331 = vld [vmem:[%s1 + $0x3dc] sm:$0xf]
  %v332 = vld [vmem:[%s1 + $0x3e0] sm:$0xf]
  %v333 = vld [vmem:[%s1 + $0x3e4] sm:$0xf]
  %v334 = vld [vmem:[%s1 + $0x3e8] sm:$0xf]
  %v335 = vld [vmem:[%s1 + $0x3ec] sm:$0xf]
  %v336 = vld [vmem:[%s1 + $0x3f0] sm:$0xf]
  %v337 = vld [vmem:[%s1 + $0x3f4] sm:$0xf]
  %v338 = vld [vmem:[%s1 + $0x3f8] sm:$0xf]
  %v339 = vld [vmem:[%s1 + $0x3fc] sm:$0xf]
  %v340 = vld [vmem:[%s2] sm:$0xff]
  %v341 = vld [vmem:[%s2 + $0x8] sm:$0xff]
  %v342 = vld [vmem:[%s2 + $0x10] sm:$0xff]
  %v343 = vld [vmem:[%s2 + $0x18] sm:$0xff]
  %v344 = vld [vmem:[%s2 + $0x20] sm:$0xff]
  %v345 = vld [vmem:[%s2 + $0x28] sm:$0xff]
  %v346 = vld [vmem:[%s2 + $0x30] sm:$0xff]
  %v347 = vld [vmem:[%s2 + $0x38] sm:$0xff]
  %349 = vset.pattern.permute.xlu0 0
  %350 = vperm.xlu0 %349, %v340
  %v351 = vpop.permute.xlu0 %350
  %354 = vset.pattern.permute.xlu0 0
  %355 = vperm.xlu0 %354, %v341
  %v356 = vpop.permute.xlu0 %355
  %359 = vset.pattern.permute.xlu0 0
  %360 = vperm.xlu0 %359, %v342
  %v361 = vpop.permute.xlu0 %360
  %364 = vset.pattern.permute.xlu0 0
  %365 = vperm.xlu0 %364, %v343
  %v366 = vpop.permute.xlu0 %365
  %369 = vset.pattern.permute.xlu0 0
  %370 = vperm.xlu0 %369, %v344
  %v371 = vpop.permute.xlu0 %370
  %374 = vset.pattern.permute.xlu0 0
  %375 = vperm.xlu0 %374, %v345
  %v376 = vpop.permute.xlu0 %375
  %379 = vset.pattern.permute.xlu0 0
  %380 = vperm.xlu0 %379, %v346
  %v381 = vpop.permute.xlu0 %380
  %384 = vset.pattern.permute.xlu0 0
  %385 = vperm.xlu0 %384, %v347
  %v386 = vpop.permute.xlu0 %385
  %v452 = vunpack.c.l.b16 %v20
  %v453 = vunpack.c.h.b16 %v20
  %v454 = vunpack.c.l.b16 %v21
  %v455 = vunpack.c.h.b16 %v21
  %v456 = vunpack.c.l.b16 %v22
  %v457 = vunpack.c.h.b16 %v22
  %v458 = vunpack.c.l.b16 %v23
  %v459 = vunpack.c.h.b16 %v23
  %v460 = vunpack.c.l.b16 %v24
  %v461 = vunpack.c.h.b16 %v24
  %v462 = vunpack.c.l.b16 %v25
  %v463 = vunpack.c.h.b16 %v25
  %v464 = vunpack.c.l.b16 %v26
  %v465 = vunpack.c.h.b16 %v26
  %v466 = vunpack.c.l.b16 %v27
  %v467 = vunpack.c.h.b16 %v27
  %v468 = vunpack.c.l.b16 %v28
  %v469 = vunpack.c.h.b16 %v28
  %v470 = vunpack.c.l.b16 %v29
  %v471 = vunpack.c.h.b16 %v29
  %v472 = vunpack.c.l.b16 %v30
  %v473 = vunpack.c.h.b16 %v30
  %v474 = vunpack.c.l.b16 %v31
  %v475 = vunpack.c.h.b16 %v31
  %v476 = vunpack.c.l.b16 %v32
  %v477 = vunpack.c.h.b16 %v32
  %v478 = vunpack.c.l.b16 %v33
  %v479 = vunpack.c.h.b16 %v33
  %v480 = vunpack.c.l.b16 %v34
  %v481 = vunpack.c.h.b16 %v34
  %v482 = vunpack.c.l.b16 %v35
  %v483 = vunpack.c.h.b16 %v35
  %v484 = vunpack.c.l.b16 %v36
  %v485 = vunpack.c.h.b16 %v36
  %v486 = vunpack.c.l.b16 %v37
  %v487 = vunpack.c.h.b16 %v37
  %v488 = vunpack.c.l.b16 %v38
  %v489 = vunpack.c.h.b16 %v38
  %v490 = vunpack.c.l.b16 %v39
  %v491 = vunpack.c.h.b16 %v39
  %v492 = vunpack.c.l.b16 %v40
  %v493 = vunpack.c.h.b16 %v40
  %v494 = vunpack.c.l.b16 %v41
  %v495 = vunpack.c.h.b16 %v41
  %v496 = vunpack.c.l.b16 %v42
  %v497 = vunpack.c.h.b16 %v42
  %v498 = vunpack.c.l.b16 %v43
  %v499 = vunpack.c.h.b16 %v43
  %v500 = vunpack.c.l.b16 %v44
  %v501 = vunpack.c.h.b16 %v44
  %v502 = vunpack.c.l.b16 %v45
  %v503 = vunpack.c.h.b16 %v45
  %v504 = vunpack.c.l.b16 %v46
  %v505 = vunpack.c.h.b16 %v46
  %v506 = vunpack.c.l.b16 %v47
  %v507 = vunpack.c.h.b16 %v47
  %v508 = vunpack.c.l.b16 %v48
  %v509 = vunpack.c.h.b16 %v48
  %v510 = vunpack.c.l.b16 %v49
  %v511 = vunpack.c.h.b16 %v49
  %v512 = vunpack.c.l.b16 %v50
  %v513 = vunpack.c.h.b16 %v50
  %v514 = vunpack.c.l.b16 %v51
  %v515 = vunpack.c.h.b16 %v51
  %v516 = vunpack.c.l.b16 %v52
  %v517 = vunpack.c.h.b16 %v52
  %v518 = vunpack.c.l.b16 %v53
  %v519 = vunpack.c.h.b16 %v53
  %v520 = vunpack.c.l.b16 %v54
  %v521 = vunpack.c.h.b16 %v54
  %v522 = vunpack.c.l.b16 %v55
  %v523 = vunpack.c.h.b16 %v55
  %v524 = vunpack.c.l.b16 %v56
  %v525 = vunpack.c.h.b16 %v56
  %v526 = vunpack.c.l.b16 %v57
  %v527 = vunpack.c.h.b16 %v57
  %v528 = vunpack.c.l.b16 %v58
  %v529 = vunpack.c.h.b16 %v58
  %v530 = vunpack.c.l.b16 %v59
  %v531 = vunpack.c.h.b16 %v59
  %v532 = vunpack.c.l.b16 %v60
  %v533 = vunpack.c.h.b16 %v60
  %v534 = vunpack.c.l.b16 %v61
  %v535 = vunpack.c.h.b16 %v61
  %v536 = vunpack.c.l.b16 %v62
  %v537 = vunpack.c.h.b16 %v62
  %v538 = vunpack.c.l.b16 %v63
  %v539 = vunpack.c.h.b16 %v63
  %v540 = vunpack.c.l.b16 %v64
  %v541 = vunpack.c.h.b16 %v64
  %v542 = vunpack.c.l.b16 %v65
  %v543 = vunpack.c.h.b16 %v65
  %v544 = vunpack.c.l.b16 %v66
  %v545 = vunpack.c.h.b16 %v66
  %v546 = vunpack.c.l.b16 %v67
  %v547 = vunpack.c.h.b16 %v67
  %v548 = vunpack.c.l.b16 %v68
  %v549 = vunpack.c.h.b16 %v68
  %v550 = vunpack.c.l.b16 %v69
  %v551 = vunpack.c.h.b16 %v69
  %v552 = vunpack.c.l.b16 %v70
  %v553 = vunpack.c.h.b16 %v70
  %v554 = vunpack.c.l.b16 %v71
  %v555 = vunpack.c.h.b16 %v71
  %v556 = vunpack.c.l.b16 %v72
  %v557 = vunpack.c.h.b16 %v72
  %v558 = vunpack.c.l.b16 %v73
  %v559 = vunpack.c.h.b16 %v73
  %v560 = vunpack.c.l.b16 %v74
  %v561 = vunpack.c.h.b16 %v74
  %v562 = vunpack.c.l.b16 %v75
  %v563 = vunpack.c.h.b16 %v75
  %v564 = vunpack.c.l.b16 %v76
  %v565 = vunpack.c.h.b16 %v76
  %v566 = vunpack.c.l.b16 %v77
  %v567 = vunpack.c.h.b16 %v77
  %v568 = vunpack.c.l.b16 %v78
  %v569 = vunpack.c.h.b16 %v78
  %v570 = vunpack.c.l.b16 %v79
  %v571 = vunpack.c.h.b16 %v79
  %v572 = vunpack.c.l.b16 %v80
  %v573 = vunpack.c.h.b16 %v80
  %v574 = vunpack.c.l.b16 %v81
  %v575 = vunpack.c.h.b16 %v81
  %v576 = vunpack.c.l.b16 %v82
  %v577 = vunpack.c.h.b16 %v82
  %v578 = vunpack.c.l.b16 %v83
  %v579 = vunpack.c.h.b16 %v83
  %v580 = vpack.c.b16 %v468, %v452
  %v581 = vpack.c.b16 %v469, %v453
  %v582 = vpack.c.b16 %v470, %v454
  %v583 = vpack.c.b16 %v471, %v455
  %v584 = vpack.c.b16 %v472, %v456
  %v585 = vpack.c.b16 %v473, %v457
  %v586 = vpack.c.b16 %v474, %v458
  %v587 = vpack.c.b16 %v475, %v459
  %v588 = vpack.c.b16 %v476, %v460
  %v589 = vpack.c.b16 %v477, %v461
  %v590 = vpack.c.b16 %v478, %v462
  %v591 = vpack.c.b16 %v479, %v463
  %v592 = vpack.c.b16 %v480, %v464
  %v593 = vpack.c.b16 %v481, %v465
  %v594 = vpack.c.b16 %v482, %v466
  %v595 = vpack.c.b16 %v483, %v467
  %v596 = vpack.c.b16 %v500, %v484
  %v597 = vpack.c.b16 %v501, %v485
  %v598 = vpack.c.b16 %v502, %v486
  %v599 = vpack.c.b16 %v503, %v487
  %v600 = vpack.c.b16 %v504, %v488
  %v601 = vpack.c.b16 %v505, %v489
  %v602 = vpack.c.b16 %v506, %v490
  %v603 = vpack.c.b16 %v507, %v491
  %v604 = vpack.c.b16 %v508, %v492
  %v605 = vpack.c.b16 %v509, %v493
  %v606 = vpack.c.b16 %v510, %v494
  %v607 = vpack.c.b16 %v511, %v495
  %v608 = vpack.c.b16 %v512, %v496
  %v609 = vpack.c.b16 %v513, %v497
  %v610 = vpack.c.b16 %v514, %v498
  %v611 = vpack.c.b16 %v515, %v499
  %v612 = vpack.c.b16 %v532, %v516
  %v613 = vpack.c.b16 %v533, %v517
  %v614 = vpack.c.b16 %v534, %v518
  %v615 = vpack.c.b16 %v535, %v519
  %v616 = vpack.c.b16 %v536, %v520
  %v617 = vpack.c.b16 %v537, %v521
  %v618 = vpack.c.b16 %v538, %v522
  %v619 = vpack.c.b16 %v539, %v523
  %v620 = vpack.c.b16 %v540, %v524
  %v621 = vpack.c.b16 %v541, %v525
  %v622 = vpack.c.b16 %v542, %v526
  %v623 = vpack.c.b16 %v543, %v527
  %v624 = vpack.c.b16 %v544, %v528
  %v625 = vpack.c.b16 %v545, %v529
  %v626 = vpack.c.b16 %v546, %v530
  %v627 = vpack.c.b16 %v547, %v531
  %v628 = vpack.c.b16 %v564, %v548
  %v629 = vpack.c.b16 %v565, %v549
  %v630 = vpack.c.b16 %v566, %v550
  %v631 = vpack.c.b16 %v567, %v551
  %v632 = vpack.c.b16 %v568, %v552
  %v633 = vpack.c.b16 %v569, %v553
  %v634 = vpack.c.b16 %v570, %v554
  %v635 = vpack.c.b16 %v571, %v555
  %v636 = vpack.c.b16 %v572, %v556
  %v637 = vpack.c.b16 %v573, %v557
  %v638 = vpack.c.b16 %v574, %v558
  %v639 = vpack.c.b16 %v575, %v559
  %v640 = vpack.c.b16 %v576, %v560
  %v641 = vpack.c.b16 %v577, %v561
  %v642 = vpack.c.b16 %v578, %v562
  %v643 = vpack.c.b16 %v579, %v563
  %v964 = vunpack.c.l.b16 %v84
  %v965 = vunpack.c.l.b16 %v85
  %v966 = vunpack.c.l.b16 %v86
  %v967 = vunpack.c.l.b16 %v87
  %v968 = vunpack.c.l.b16 %v88
  %v969 = vunpack.c.l.b16 %v89
  %v970 = vunpack.c.l.b16 %v90
  %v971 = vunpack.c.l.b16 %v91
  %v972 = vunpack.c.l.b16 %v92
  %v973 = vunpack.c.l.b16 %v93
  %v974 = vunpack.c.l.b16 %v94
  %v975 = vunpack.c.l.b16 %v95
  %v976 = vunpack.c.l.b16 %v96
  %v977 = vunpack.c.l.b16 %v97
  %v978 = vunpack.c.l.b16 %v98
  %v979 = vunpack.c.l.b16 %v99
  %v980 = vunpack.c.l.b16 %v100
  %v981 = vunpack.c.l.b16 %v101
  %v982 = vunpack.c.l.b16 %v102
  %v983 = vunpack.c.l.b16 %v103
  %v984 = vunpack.c.l.b16 %v104
  %v985 = vunpack.c.l.b16 %v105
  %v986 = vunpack.c.l.b16 %v106
  %v987 = vunpack.c.l.b16 %v107
  %v988 = vunpack.c.l.b16 %v108
  %v989 = vunpack.c.l.b16 %v109
  %v990 = vunpack.c.l.b16 %v110
  %v991 = vunpack.c.l.b16 %v111
  %v992 = vunpack.c.l.b16 %v112
  %v993 = vunpack.c.l.b16 %v113
  %v994 = vunpack.c.l.b16 %v114
  %v995 = vunpack.c.l.b16 %v115
  %v996 = vunpack.c.l.b16 %v116
  %v997 = vunpack.c.l.b16 %v117
  %v998 = vunpack.c.l.b16 %v118
  %v999 = vunpack.c.l.b16 %v119
  %v1000 = vunpack.c.l.b16 %v120
  %v1001 = vunpack.c.l.b16 %v121
  %v1002 = vunpack.c.l.b16 %v122
  %v1003 = vunpack.c.l.b16 %v123
  %v1004 = vunpack.c.l.b16 %v124
  %v1005 = vunpack.c.l.b16 %v125
  %v1006 = vunpack.c.l.b16 %v126
  %v1007 = vunpack.c.l.b16 %v127
  %v1008 = vunpack.c.l.b16 %v128
  %v1009 = vunpack.c.l.b16 %v129
  %v1010 = vunpack.c.l.b16 %v130
  %v1011 = vunpack.c.l.b16 %v131
  %v1012 = vunpack.c.l.b16 %v132
  %v1013 = vunpack.c.l.b16 %v133
  %v1014 = vunpack.c.l.b16 %v134
  %v1015 = vunpack.c.l.b16 %v135
  %v1016 = vunpack.c.l.b16 %v136
  %v1017 = vunpack.c.l.b16 %v137
  %v1018 = vunpack.c.l.b16 %v138
  %v1019 = vunpack.c.l.b16 %v139
  %v1020 = vunpack.c.l.b16 %v140
  %v1021 = vunpack.c.l.b16 %v141
  %v1022 = vunpack.c.l.b16 %v142
  %v1023 = vunpack.c.l.b16 %v143
  %v1024 = vunpack.c.l.b16 %v144
  %v1025 = vunpack.c.l.b16 %v145
  %v1026 = vunpack.c.l.b16 %v146
  %v1027 = vunpack.c.l.b16 %v147
  %v1028 = vunpack.c.l.b16 %v148
  %v1029 = vunpack.c.l.b16 %v149
  %v1030 = vunpack.c.l.b16 %v150
  %v1031 = vunpack.c.l.b16 %v151
  %v1032 = vunpack.c.l.b16 %v152
  %v1033 = vunpack.c.l.b16 %v153
  %v1034 = vunpack.c.l.b16 %v154
  %v1035 = vunpack.c.l.b16 %v155
  %v1036 = vunpack.c.l.b16 %v156
  %v1037 = vunpack.c.l.b16 %v157
  %v1038 = vunpack.c.l.b16 %v158
  %v1039 = vunpack.c.l.b16 %v159
  %v1040 = vunpack.c.l.b16 %v160
  %v1041 = vunpack.c.l.b16 %v161
  %v1042 = vunpack.c.l.b16 %v162
  %v1043 = vunpack.c.l.b16 %v163
  %v1044 = vunpack.c.l.b16 %v164
  %v1045 = vunpack.c.l.b16 %v165
  %v1046 = vunpack.c.l.b16 %v166
  %v1047 = vunpack.c.l.b16 %v167
  %v1048 = vunpack.c.l.b16 %v168
  %v1049 = vunpack.c.l.b16 %v169
  %v1050 = vunpack.c.l.b16 %v170
  %v1051 = vunpack.c.l.b16 %v171
  %v1052 = vunpack.c.l.b16 %v172
  %v1053 = vunpack.c.l.b16 %v173
  %v1054 = vunpack.c.l.b16 %v174
  %v1055 = vunpack.c.l.b16 %v175
  %v1056 = vunpack.c.l.b16 %v176
  %v1057 = vunpack.c.l.b16 %v177
  %v1058 = vunpack.c.l.b16 %v178
  %v1059 = vunpack.c.l.b16 %v179
  %v1060 = vunpack.c.l.b16 %v180
  %v1061 = vunpack.c.l.b16 %v181
  %v1062 = vunpack.c.l.b16 %v182
  %v1063 = vunpack.c.l.b16 %v183
  %v1064 = vunpack.c.l.b16 %v184
  %v1065 = vunpack.c.l.b16 %v185
  %v1066 = vunpack.c.l.b16 %v186
  %v1067 = vunpack.c.l.b16 %v187
  %v1068 = vunpack.c.l.b16 %v188
  %v1069 = vunpack.c.l.b16 %v189
  %v1070 = vunpack.c.l.b16 %v190
  %v1071 = vunpack.c.l.b16 %v191
  %v1072 = vunpack.c.l.b16 %v192
  %v1073 = vunpack.c.l.b16 %v193
  %v1074 = vunpack.c.l.b16 %v194
  %v1075 = vunpack.c.l.b16 %v195
  %v1076 = vunpack.c.l.b16 %v196
  %v1077 = vunpack.c.l.b16 %v197
  %v1078 = vunpack.c.l.b16 %v198
  %v1079 = vunpack.c.l.b16 %v199
  %v1080 = vunpack.c.l.b16 %v200
  %v1081 = vunpack.c.l.b16 %v201
  %v1082 = vunpack.c.l.b16 %v202
  %v1083 = vunpack.c.l.b16 %v203
  %v1084 = vunpack.c.l.b16 %v204
  %v1085 = vunpack.c.l.b16 %v205
  %v1086 = vunpack.c.l.b16 %v206
  %v1087 = vunpack.c.l.b16 %v207
  %v1088 = vunpack.c.l.b16 %v208
  %v1089 = vunpack.c.l.b16 %v209
  %v1090 = vunpack.c.l.b16 %v210
  %v1091 = vunpack.c.l.b16 %v211
  %v1092 = vunpack.c.l.b16 %v212
  %v1093 = vunpack.c.l.b16 %v213
  %v1094 = vunpack.c.l.b16 %v214
  %v1095 = vunpack.c.l.b16 %v215
  %v1096 = vunpack.c.l.b16 %v216
  %v1097 = vunpack.c.l.b16 %v217
  %v1098 = vunpack.c.l.b16 %v218
  %v1099 = vunpack.c.l.b16 %v219
  %v1100 = vunpack.c.l.b16 %v220
  %v1101 = vunpack.c.l.b16 %v221
  %v1102 = vunpack.c.l.b16 %v222
  %v1103 = vunpack.c.l.b16 %v223
  %v1104 = vunpack.c.l.b16 %v224
  %v1105 = vunpack.c.l.b16 %v225
  %v1106 = vunpack.c.l.b16 %v226
  %v1107 = vunpack.c.l.b16 %v227
  %v1108 = vunpack.c.l.b16 %v228
  %v1109 = vunpack.c.l.b16 %v229
  %v1110 = vunpack.c.l.b16 %v230
  %v1111 = vunpack.c.l.b16 %v231
  %v1112 = vunpack.c.l.b16 %v232
  %v1113 = vunpack.c.l.b16 %v233
  %v1114 = vunpack.c.l.b16 %v234
  %v1115 = vunpack.c.l.b16 %v235
  %v1116 = vunpack.c.l.b16 %v236
  %v1117 = vunpack.c.l.b16 %v237
  %v1118 = vunpack.c.l.b16 %v238
  %v1119 = vunpack.c.l.b16 %v239
  %v1120 = vunpack.c.l.b16 %v240
  %v1121 = vunpack.c.l.b16 %v241
  %v1122 = vunpack.c.l.b16 %v242
  %v1123 = vunpack.c.l.b16 %v243
  %v1124 = vunpack.c.l.b16 %v244
  %v1125 = vunpack.c.l.b16 %v245
  %v1126 = vunpack.c.l.b16 %v246
  %v1127 = vunpack.c.l.b16 %v247
  %v1128 = vunpack.c.l.b16 %v248
  %v1129 = vunpack.c.l.b16 %v249
  %v1130 = vunpack.c.l.b16 %v250
  %v1131 = vunpack.c.l.b16 %v251
  %v1132 = vunpack.c.l.b16 %v252
  %v1133 = vunpack.c.l.b16 %v253
  %v1134 = vunpack.c.l.b16 %v254
  %v1135 = vunpack.c.l.b16 %v255
  %v1136 = vunpack.c.l.b16 %v256
  %v1137 = vunpack.c.l.b16 %v257
  %v1138 = vunpack.c.l.b16 %v258
  %v1139 = vunpack.c.l.b16 %v259
  %v1140 = vunpack.c.l.b16 %v260
  %v1141 = vunpack.c.l.b16 %v261
  %v1142 = vunpack.c.l.b16 %v262
  %v1143 = vunpack.c.l.b16 %v263
  %v1144 = vunpack.c.l.b16 %v264
  %v1145 = vunpack.c.l.b16 %v265
  %v1146 = vunpack.c.l.b16 %v266
  %v1147 = vunpack.c.l.b16 %v267
  %v1148 = vunpack.c.l.b16 %v268
  %v1149 = vunpack.c.l.b16 %v269
  %v1150 = vunpack.c.l.b16 %v270
  %v1151 = vunpack.c.l.b16 %v271
  %v1152 = vunpack.c.l.b16 %v272
  %v1153 = vunpack.c.l.b16 %v273
  %v1154 = vunpack.c.l.b16 %v274
  %v1155 = vunpack.c.l.b16 %v275
  %v1156 = vunpack.c.l.b16 %v276
  %v1157 = vunpack.c.l.b16 %v277
  %v1158 = vunpack.c.l.b16 %v278
  %v1159 = vunpack.c.l.b16 %v279
  %v1160 = vunpack.c.l.b16 %v280
  %v1161 = vunpack.c.l.b16 %v281
  %v1162 = vunpack.c.l.b16 %v282
  %v1163 = vunpack.c.l.b16 %v283
  %v1164 = vunpack.c.l.b16 %v284
  %v1165 = vunpack.c.l.b16 %v285
  %v1166 = vunpack.c.l.b16 %v286
  %v1167 = vunpack.c.l.b16 %v287
  %v1168 = vunpack.c.l.b16 %v288
  %v1169 = vunpack.c.l.b16 %v289
  %v1170 = vunpack.c.l.b16 %v290
  %v1171 = vunpack.c.l.b16 %v291
  %v1172 = vunpack.c.l.b16 %v292
  %v1173 = vunpack.c.l.b16 %v293
  %v1174 = vunpack.c.l.b16 %v294
  %v1175 = vunpack.c.l.b16 %v295
  %v1176 = vunpack.c.l.b16 %v296
  %v1177 = vunpack.c.l.b16 %v297
  %v1178 = vunpack.c.l.b16 %v298
  %v1179 = vunpack.c.l.b16 %v299
  %v1180 = vunpack.c.l.b16 %v300
  %v1181 = vunpack.c.l.b16 %v301
  %v1182 = vunpack.c.l.b16 %v302
  %v1183 = vunpack.c.l.b16 %v303
  %v1184 = vunpack.c.l.b16 %v304
  %v1185 = vunpack.c.l.b16 %v305
  %v1186 = vunpack.c.l.b16 %v306
  %v1187 = vunpack.c.l.b16 %v307
  %v1188 = vunpack.c.l.b16 %v308
  %v1189 = vunpack.c.l.b16 %v309
  %v1190 = vunpack.c.l.b16 %v310
  %v1191 = vunpack.c.l.b16 %v311
  %v1192 = vunpack.c.l.b16 %v312
  %v1193 = vunpack.c.l.b16 %v313
  %v1194 = vunpack.c.l.b16 %v314
  %v1195 = vunpack.c.l.b16 %v315
  %v1196 = vunpack.c.l.b16 %v316
  %v1197 = vunpack.c.l.b16 %v317
  %v1198 = vunpack.c.l.b16 %v318
  %v1199 = vunpack.c.l.b16 %v319
  %v1200 = vunpack.c.l.b16 %v320
  %v1201 = vunpack.c.l.b16 %v321
  %v1202 = vunpack.c.l.b16 %v322
  %v1203 = vunpack.c.l.b16 %v323
  %v1204 = vunpack.c.l.b16 %v324
  %v1205 = vunpack.c.l.b16 %v325
  %v1206 = vunpack.c.l.b16 %v326
  %v1207 = vunpack.c.l.b16 %v327
  %v1208 = vunpack.c.l.b16 %v328
  %v1209 = vunpack.c.l.b16 %v329
  %v1210 = vunpack.c.l.b16 %v330
  %v1211 = vunpack.c.l.b16 %v331
  %v1212 = vunpack.c.l.b16 %v332
  %v1213 = vunpack.c.l.b16 %v333
  %v1214 = vunpack.c.l.b16 %v334
  %v1215 = vunpack.c.l.b16 %v335
  %v1216 = vunpack.c.l.b16 %v336
  %v1217 = vunpack.c.l.b16 %v337
  %v1218 = vunpack.c.l.b16 %v338
  %v1219 = vunpack.c.l.b16 %v339
  %v1220 = vpack.c.b16 %v965, %v964
  %v1221 = vpack.c.b16 %v967, %v966
  %v1222 = vpack.c.b16 %v969, %v968
  %v1223 = vpack.c.b16 %v971, %v970
  %v1224 = vpack.c.b16 %v973, %v972
  %v1225 = vpack.c.b16 %v975, %v974
  %v1226 = vpack.c.b16 %v977, %v976
  %v1227 = vpack.c.b16 %v979, %v978
  %v1228 = vpack.c.b16 %v981, %v980
  %v1229 = vpack.c.b16 %v983, %v982
  %v1230 = vpack.c.b16 %v985, %v984
  %v1231 = vpack.c.b16 %v987, %v986
  %v1232 = vpack.c.b16 %v989, %v988
  %v1233 = vpack.c.b16 %v991, %v990
  %v1234 = vpack.c.b16 %v993, %v992
  %v1235 = vpack.c.b16 %v995, %v994
  %v1236 = vpack.c.b16 %v997, %v996
  %v1237 = vpack.c.b16 %v999, %v998
  %v1238 = vpack.c.b16 %v1001, %v1000
  %v1239 = vpack.c.b16 %v1003, %v1002
  %v1240 = vpack.c.b16 %v1005, %v1004
  %v1241 = vpack.c.b16 %v1007, %v1006
  %v1242 = vpack.c.b16 %v1009, %v1008
  %v1243 = vpack.c.b16 %v1011, %v1010
  %v1244 = vpack.c.b16 %v1013, %v1012
  %v1245 = vpack.c.b16 %v1015, %v1014
  %v1246 = vpack.c.b16 %v1017, %v1016
  %v1247 = vpack.c.b16 %v1019, %v1018
  %v1248 = vpack.c.b16 %v1021, %v1020
  %v1249 = vpack.c.b16 %v1023, %v1022
  %v1250 = vpack.c.b16 %v1025, %v1024
  %v1251 = vpack.c.b16 %v1027, %v1026
  %v1252 = vpack.c.b16 %v1029, %v1028
  %v1253 = vpack.c.b16 %v1031, %v1030
  %v1254 = vpack.c.b16 %v1033, %v1032
  %v1255 = vpack.c.b16 %v1035, %v1034
  %v1256 = vpack.c.b16 %v1037, %v1036
  %v1257 = vpack.c.b16 %v1039, %v1038
  %v1258 = vpack.c.b16 %v1041, %v1040
  %v1259 = vpack.c.b16 %v1043, %v1042
  %v1260 = vpack.c.b16 %v1045, %v1044
  %v1261 = vpack.c.b16 %v1047, %v1046
  %v1262 = vpack.c.b16 %v1049, %v1048
  %v1263 = vpack.c.b16 %v1051, %v1050
  %v1264 = vpack.c.b16 %v1053, %v1052
  %v1265 = vpack.c.b16 %v1055, %v1054
  %v1266 = vpack.c.b16 %v1057, %v1056
  %v1267 = vpack.c.b16 %v1059, %v1058
  %v1268 = vpack.c.b16 %v1061, %v1060
  %v1269 = vpack.c.b16 %v1063, %v1062
  %v1270 = vpack.c.b16 %v1065, %v1064
  %v1271 = vpack.c.b16 %v1067, %v1066
  %v1272 = vpack.c.b16 %v1069, %v1068
  %v1273 = vpack.c.b16 %v1071, %v1070
  %v1274 = vpack.c.b16 %v1073, %v1072
  %v1275 = vpack.c.b16 %v1075, %v1074
  %v1276 = vpack.c.b16 %v1077, %v1076
  %v1277 = vpack.c.b16 %v1079, %v1078
  %v1278 = vpack.c.b16 %v1081, %v1080
  %v1279 = vpack.c.b16 %v1083, %v1082
  %v1280 = vpack.c.b16 %v1085, %v1084
  %v1281 = vpack.c.b16 %v1087, %v1086
  %v1282 = vpack.c.b16 %v1089, %v1088
  %v1283 = vpack.c.b16 %v1091, %v1090
  %v1284 = vpack.c.b16 %v1093, %v1092
  %v1285 = vpack.c.b16 %v1095, %v1094
  %v1286 = vpack.c.b16 %v1097, %v1096
  %v1287 = vpack.c.b16 %v1099, %v1098
  %v1288 = vpack.c.b16 %v1101, %v1100
  %v1289 = vpack.c.b16 %v1103, %v1102
  %v1290 = vpack.c.b16 %v1105, %v1104
  %v1291 = vpack.c.b16 %v1107, %v1106
  %v1292 = vpack.c.b16 %v1109, %v1108
  %v1293 = vpack.c.b16 %v1111, %v1110
  %v1294 = vpack.c.b16 %v1113, %v1112
  %v1295 = vpack.c.b16 %v1115, %v1114
  %v1296 = vpack.c.b16 %v1117, %v1116
  %v1297 = vpack.c.b16 %v1119, %v1118
  %v1298 = vpack.c.b16 %v1121, %v1120
  %v1299 = vpack.c.b16 %v1123, %v1122
  %v1300 = vpack.c.b16 %v1125, %v1124
  %v1301 = vpack.c.b16 %v1127, %v1126
  %v1302 = vpack.c.b16 %v1129, %v1128
  %v1303 = vpack.c.b16 %v1131, %v1130
  %v1304 = vpack.c.b16 %v1133, %v1132
  %v1305 = vpack.c.b16 %v1135, %v1134
  %v1306 = vpack.c.b16 %v1137, %v1136
  %v1307 = vpack.c.b16 %v1139, %v1138
  %v1308 = vpack.c.b16 %v1141, %v1140
  %v1309 = vpack.c.b16 %v1143, %v1142
  %v1310 = vpack.c.b16 %v1145, %v1144
  %v1311 = vpack.c.b16 %v1147, %v1146
  %v1312 = vpack.c.b16 %v1149, %v1148
  %v1313 = vpack.c.b16 %v1151, %v1150
  %v1314 = vpack.c.b16 %v1153, %v1152
  %v1315 = vpack.c.b16 %v1155, %v1154
  %v1316 = vpack.c.b16 %v1157, %v1156
  %v1317 = vpack.c.b16 %v1159, %v1158
  %v1318 = vpack.c.b16 %v1161, %v1160
  %v1319 = vpack.c.b16 %v1163, %v1162
  %v1320 = vpack.c.b16 %v1165, %v1164
  %v1321 = vpack.c.b16 %v1167, %v1166
  %v1322 = vpack.c.b16 %v1169, %v1168
  %v1323 = vpack.c.b16 %v1171, %v1170
  %v1324 = vpack.c.b16 %v1173, %v1172
  %v1325 = vpack.c.b16 %v1175, %v1174
  %v1326 = vpack.c.b16 %v1177, %v1176
  %v1327 = vpack.c.b16 %v1179, %v1178
  %v1328 = vpack.c.b16 %v1181, %v1180
  %v1329 = vpack.c.b16 %v1183, %v1182
  %v1330 = vpack.c.b16 %v1185, %v1184
  %v1331 = vpack.c.b16 %v1187, %v1186
  %v1332 = vpack.c.b16 %v1189, %v1188
  %v1333 = vpack.c.b16 %v1191, %v1190
  %v1334 = vpack.c.b16 %v1193, %v1192
  %v1335 = vpack.c.b16 %v1195, %v1194
  %v1336 = vpack.c.b16 %v1197, %v1196
  %v1337 = vpack.c.b16 %v1199, %v1198
  %v1338 = vpack.c.b16 %v1201, %v1200
  %v1339 = vpack.c.b16 %v1203, %v1202
  %v1340 = vpack.c.b16 %v1205, %v1204
  %v1341 = vpack.c.b16 %v1207, %v1206
  %v1342 = vpack.c.b16 %v1209, %v1208
  %v1343 = vpack.c.b16 %v1211, %v1210
  %v1344 = vpack.c.b16 %v1213, %v1212
  %v1345 = vpack.c.b16 %v1215, %v1214
  %v1346 = vpack.c.b16 %v1217, %v1216
  %v1347 = vpack.c.b16 %v1219, %v1218
  %1476 = vmatpush.bf16.msra.mxu0 %v1227
  %1477 = vmatpush.bf16.msra.mxu0 %v1226
  %1478 = vmatpush.bf16.msra.mxu0 %v1225
  %1479 = vmatpush.bf16.msra.mxu0 %v1224
  %1480 = vmatpush.bf16.msra.mxu0 %v1223
  %1481 = vmatpush.bf16.msra.mxu0 %v1222
  %1482 = vmatpush.bf16.msra.mxu0 %v1221
  %1483 = vmatpush.bf16.msra.mxu0 %v1220
  %1484 = vmatmul.bf16.gmra.mxu0 %v580
  %v1485 = vpop.f32.mrf.mxu0
  %v1486 = vadd.f32 %v351, %v1485
  %v1487 = vpop.f32.mrf.mxu0
  %v1488 = vadd.f32 %v356, %v1487
  %1489 = vmatmul.bf16.gmra.mxu0 %v596
  %v1490 = vpop.f32.mrf.mxu0
  %v1491 = vadd.f32 %v361, %v1490
  %v1492 = vpop.f32.mrf.mxu0
  %v1493 = vadd.f32 %v366, %v1492
  %1494 = vmatmul.bf16.gmra.mxu0 %v612
  %v1495 = vpop.f32.mrf.mxu0
  %v1496 = vadd.f32 %v371, %v1495
  %v1497 = vpop.f32.mrf.mxu0
  %v1498 = vadd.f32 %v376, %v1497
  %1499 = vmatmul.bf16.gmra.mxu0 %v628
  %v1500 = vpop.f32.mrf.mxu0
  %v1501 = vadd.f32 %v381, %v1500
  %v1502 = vpop.f32.mrf.mxu0
  %v1503 = vadd.f32 %v386, %v1502
  %1504 = vdwg.mxu0
  %1505 = vmatpush.bf16.msra.mxu0 %v1235
  %1506 = vmatpush.bf16.msra.mxu0 %v1234
  %1507 = vmatpush.bf16.msra.mxu0 %v1233
  %1508 = vmatpush.bf16.msra.mxu0 %v1232
  %1509 = vmatpush.bf16.msra.mxu0 %v1231
  %1510 = vmatpush.bf16.msra.mxu0 %v1230
  %1511 = vmatpush.bf16.msra.mxu0 %v1229
  %1512 = vmatpush.bf16.msra.mxu0 %v1228
  %1513 = vmatmul.bf16.gmra.mxu0 %v581
  %v1514 = vpop.f32.mrf.mxu0
  %v1515 = vadd.f32 %v1486, %v1514
  %v1516 = vpop.f32.mrf.mxu0
  %v1517 = vadd.f32 %v1488, %v1516
  %1518 = vmatmul.bf16.gmra.mxu0 %v597
  %v1519 = vpop.f32.mrf.mxu0
  %v1520 = vadd.f32 %v1491, %v1519
  %v1521 = vpop.f32.mrf.mxu0
  %v1522 = vadd.f32 %v1493, %v1521
  %1523 = vmatmul.bf16.gmra.mxu0 %v613
  %v1524 = vpop.f32.mrf.mxu0
  %v1525 = vadd.f32 %v1496, %v1524
  %v1526 = vpop.f32.mrf.mxu0
  %v1527 = vadd.f32 %v1498, %v1526
  %1528 = vmatmul.bf16.gmra.mxu0 %v629
  %v1529 = vpop.f32.mrf.mxu0
  %v1530 = vadd.f32 %v1501, %v1529
  %v1531 = vpop.f32.mrf.mxu0
  %v1532 = vadd.f32 %v1503, %v1531
  %1533 = vdwg.mxu0
  %1534 = vmatpush.bf16.msra.mxu0 %v1243
  %1535 = vmatpush.bf16.msra.mxu0 %v1242
  %1536 = vmatpush.bf16.msra.mxu0 %v1241
  %1537 = vmatpush.bf16.msra.mxu0 %v1240
  %1538 = vmatpush.bf16.msra.mxu0 %v1239
  %1539 = vmatpush.bf16.msra.mxu0 %v1238
  %1540 = vmatpush.bf16.msra.mxu0 %v1237
  %1541 = vmatpush.bf16.msra.mxu0 %v1236
  %1542 = vmatmul.bf16.gmra.mxu0 %v582
  %v1543 = vpop.f32.mrf.mxu0
  %v1544 = vadd.f32 %v1515, %v1543
  %v1545 = vpop.f32.mrf.mxu0
  %v1546 = vadd.f32 %v1517, %v1545
  %1547 = vmatmul.bf16.gmra.mxu0 %v598
  %v1548 = vpop.f32.mrf.mxu0
  %v1549 = vadd.f32 %v1520, %v1548
  %v1550 = vpop.f32.mrf.mxu0
  %v1551 = vadd.f32 %v1522, %v1550
  %1552 = vmatmul.bf16.gmra.mxu0 %v614
  %v1553 = vpop.f32.mrf.mxu0
  %v1554 = vadd.f32 %v1525, %v1553
  %v1555 = vpop.f32.mrf.mxu0
  %v1556 = vadd.f32 %v1527, %v1555
  %1557 = vmatmul.bf16.gmra.mxu0 %v630
  %v1558 = vpop.f32.mrf.mxu0
  %v1559 = vadd.f32 %v1530, %v1558
  %v1560 = vpop.f32.mrf.mxu0
  %v1561 = vadd.f32 %v1532, %v1560
  %1562 = vdwg.mxu0
  %1563 = vmatpush.bf16.msra.mxu0 %v1251
  %1564 = vmatpush.bf16.msra.mxu0 %v1250
  %1565 = vmatpush.bf16.msra.mxu0 %v1249
  %1566 = vmatpush.bf16.msra.mxu0 %v1248
  %1567 = vmatpush.bf16.msra.mxu0 %v1247
  %1568 = vmatpush.bf16.msra.mxu0 %v1246
  %1569 = vmatpush.bf16.msra.mxu0 %v1245
  %1570 = vmatpush.bf16.msra.mxu0 %v1244
  %1571 = vmatmul.bf16.gmra.mxu0 %v583
  %v1572 = vpop.f32.mrf.mxu0
  %v1573 = vadd.f32 %v1544, %v1572
  %v1574 = vpop.f32.mrf.mxu0
  %v1575 = vadd.f32 %v1546, %v1574
  %1576 = vmatmul.bf16.gmra.mxu0 %v599
  %v1577 = vpop.f32.mrf.mxu0
  %v1578 = vadd.f32 %v1549, %v1577
  %v1579 = vpop.f32.mrf.mxu0
  %v1580 = vadd.f32 %v1551, %v1579
  %1581 = vmatmul.bf16.gmra.mxu0 %v615
  %v1582 = vpop.f32.mrf.mxu0
  %v1583 = vadd.f32 %v1554, %v1582
  %v1584 = vpop.f32.mrf.mxu0
  %v1585 = vadd.f32 %v1556, %v1584
  %1586 = vmatmul.bf16.gmra.mxu0 %v631
  %v1587 = vpop.f32.mrf.mxu0
  %v1588 = vadd.f32 %v1559, %v1587
  %v1589 = vpop.f32.mrf.mxu0
  %v1590 = vadd.f32 %v1561, %v1589
  %1591 = vdwg.mxu0
  %1592 = vmatpush.bf16.msra.mxu0 %v1259
  %1593 = vmatpush.bf16.msra.mxu0 %v1258
  %1594 = vmatpush.bf16.msra.mxu0 %v1257
  %1595 = vmatpush.bf16.msra.mxu0 %v1256
  %1596 = vmatpush.bf16.msra.mxu0 %v1255
  %1597 = vmatpush.bf16.msra.mxu0 %v1254
  %1598 = vmatpush.bf16.msra.mxu0 %v1253
  %1599 = vmatpush.bf16.msra.mxu0 %v1252
  %1600 = vmatmul.bf16.gmra.mxu0 %v584
  %v1601 = vpop.f32.mrf.mxu0
  %v1602 = vadd.f32 %v1573, %v1601
  %v1603 = vpop.f32.mrf.mxu0
  %v1604 = vadd.f32 %v1575, %v1603
  %1605 = vmatmul.bf16.gmra.mxu0 %v600
  %v1606 = vpop.f32.mrf.mxu0
  %v1607 = vadd.f32 %v1578, %v1606
  %v1608 = vpop.f32.mrf.mxu0
  %v1609 = vadd.f32 %v1580, %v1608
  %1610 = vmatmul.bf16.gmra.mxu0 %v616
  %v1611 = vpop.f32.mrf.mxu0
  %v1612 = vadd.f32 %v1583, %v1611
  %v1613 = vpop.f32.mrf.mxu0
  %v1614 = vadd.f32 %v1585, %v1613
  %1615 = vmatmul.bf16.gmra.mxu0 %v632
  %v1616 = vpop.f32.mrf.mxu0
  %v1617 = vadd.f32 %v1588, %v1616
  %v1618 = vpop.f32.mrf.mxu0
  %v1619 = vadd.f32 %v1590, %v1618
  %1620 = vdwg.mxu0
  %1621 = vmatpush.bf16.msra.mxu0 %v1267
  %1622 = vmatpush.bf16.msra.mxu0 %v1266
  %1623 = vmatpush.bf16.msra.mxu0 %v1265
  %1624 = vmatpush.bf16.msra.mxu0 %v1264
  %1625 = vmatpush.bf16.msra.mxu0 %v1263
  %1626 = vmatpush.bf16.msra.mxu0 %v1262
  %1627 = vmatpush.bf16.msra.mxu0 %v1261
  %1628 = vmatpush.bf16.msra.mxu0 %v1260
  %1629 = vmatmul.bf16.gmra.mxu0 %v585
  %v1630 = vpop.f32.mrf.mxu0
  %v1631 = vadd.f32 %v1602, %v1630
  %v1632 = vpop.f32.mrf.mxu0
  %v1633 = vadd.f32 %v1604, %v1632
  %1634 = vmatmul.bf16.gmra.mxu0 %v601
  %v1635 = vpop.f32.mrf.mxu0
  %v1636 = vadd.f32 %v1607, %v1635
  %v1637 = vpop.f32.mrf.mxu0
  %v1638 = vadd.f32 %v1609, %v1637
  %1639 = vmatmul.bf16.gmra.mxu0 %v617
  %v1640 = vpop.f32.mrf.mxu0
  %v1641 = vadd.f32 %v1612, %v1640
  %v1642 = vpop.f32.mrf.mxu0
  %v1643 = vadd.f32 %v1614, %v1642
  %1644 = vmatmul.bf16.gmra.mxu0 %v633
  %v1645 = vpop.f32.mrf.mxu0
  %v1646 = vadd.f32 %v1617, %v1645
  %v1647 = vpop.f32.mrf.mxu0
  %v1648 = vadd.f32 %v1619, %v1647
  %1649 = vdwg.mxu0
  %1650 = vmatpush.bf16.msra.mxu0 %v1275
  %1651 = vmatpush.bf16.msra.mxu0 %v1274
  %1652 = vmatpush.bf16.msra.mxu0 %v1273
  %1653 = vmatpush.bf16.msra.mxu0 %v1272
  %1654 = vmatpush.bf16.msra.mxu0 %v1271
  %1655 = vmatpush.bf16.msra.mxu0 %v1270
  %1656 = vmatpush.bf16.msra.mxu0 %v1269
  %1657 = vmatpush.bf16.msra.mxu0 %v1268
  %1658 = vmatmul.bf16.gmra.mxu0 %v586
  %v1659 = vpop.f32.mrf.mxu0
  %v1660 = vadd.f32 %v1631, %v1659
  %v1661 = vpop.f32.mrf.mxu0
  %v1662 = vadd.f32 %v1633, %v1661
  %1663 = vmatmul.bf16.gmra.mxu0 %v602
  %v1664 = vpop.f32.mrf.mxu0
  %v1665 = vadd.f32 %v1636, %v1664
  %v1666 = vpop.f32.mrf.mxu0
  %v1667 = vadd.f32 %v1638, %v1666
  %1668 = vmatmul.bf16.gmra.mxu0 %v618
  %v1669 = vpop.f32.mrf.mxu0
  %v1670 = vadd.f32 %v1641, %v1669
  %v1671 = vpop.f32.mrf.mxu0
  %v1672 = vadd.f32 %v1643, %v1671
  %1673 = vmatmul.bf16.gmra.mxu0 %v634
  %v1674 = vpop.f32.mrf.mxu0
  %v1675 = vadd.f32 %v1646, %v1674
  %v1676 = vpop.f32.mrf.mxu0
  %v1677 = vadd.f32 %v1648, %v1676
  %1678 = vdwg.mxu0
  %1679 = vmatpush.bf16.msra.mxu0 %v1283
  %1680 = vmatpush.bf16.msra.mxu0 %v1282
  %1681 = vmatpush.bf16.msra.mxu0 %v1281
  %1682 = vmatpush.bf16.msra.mxu0 %v1280
  %1683 = vmatpush.bf16.msra.mxu0 %v1279
  %1684 = vmatpush.bf16.msra.mxu0 %v1278
  %1685 = vmatpush.bf16.msra.mxu0 %v1277
  %1686 = vmatpush.bf16.msra.mxu0 %v1276
  %1687 = vmatmul.bf16.gmra.mxu0 %v587
  %v1688 = vpop.f32.mrf.mxu0
  %v1689 = vadd.f32 %v1660, %v1688
  %v1690 = vpop.f32.mrf.mxu0
  %v1691 = vadd.f32 %v1662, %v1690
  %1692 = vmatmul.bf16.gmra.mxu0 %v603
  %v1693 = vpop.f32.mrf.mxu0
  %v1694 = vadd.f32 %v1665, %v1693
  %v1695 = vpop.f32.mrf.mxu0
  %v1696 = vadd.f32 %v1667, %v1695
  %1697 = vmatmul.bf16.gmra.mxu0 %v619
  %v1698 = vpop.f32.mrf.mxu0
  %v1699 = vadd.f32 %v1670, %v1698
  %v1700 = vpop.f32.mrf.mxu0
  %v1701 = vadd.f32 %v1672, %v1700
  %1702 = vmatmul.bf16.gmra.mxu0 %v635
  %v1703 = vpop.f32.mrf.mxu0
  %v1704 = vadd.f32 %v1675, %v1703
  %v1705 = vpop.f32.mrf.mxu0
  %v1706 = vadd.f32 %v1677, %v1705
  %1707 = vdwg.mxu0
  %1708 = vmatpush.bf16.msra.mxu0 %v1291
  %1709 = vmatpush.bf16.msra.mxu0 %v1290
  %1710 = vmatpush.bf16.msra.mxu0 %v1289
  %1711 = vmatpush.bf16.msra.mxu0 %v1288
  %1712 = vmatpush.bf16.msra.mxu0 %v1287
  %1713 = vmatpush.bf16.msra.mxu0 %v1286
  %1714 = vmatpush.bf16.msra.mxu0 %v1285
  %1715 = vmatpush.bf16.msra.mxu0 %v1284
  %1716 = vmatmul.bf16.gmra.mxu0 %v588
  %v1717 = vpop.f32.mrf.mxu0
  %v1718 = vadd.f32 %v1689, %v1717
  %v1719 = vpop.f32.mrf.mxu0
  %v1720 = vadd.f32 %v1691, %v1719
  %1721 = vmatmul.bf16.gmra.mxu0 %v604
  %v1722 = vpop.f32.mrf.mxu0
  %v1723 = vadd.f32 %v1694, %v1722
  %v1724 = vpop.f32.mrf.mxu0
  %v1725 = vadd.f32 %v1696, %v1724
  %1726 = vmatmul.bf16.gmra.mxu0 %v620
  %v1727 = vpop.f32.mrf.mxu0
  %v1728 = vadd.f32 %v1699, %v1727
  %v1729 = vpop.f32.mrf.mxu0
  %v1730 = vadd.f32 %v1701, %v1729
  %1731 = vmatmul.bf16.gmra.mxu0 %v636
  %v1732 = vpop.f32.mrf.mxu0
  %v1733 = vadd.f32 %v1704, %v1732
  %v1734 = vpop.f32.mrf.mxu0
  %v1735 = vadd.f32 %v1706, %v1734
  %1736 = vdwg.mxu0
  %1737 = vmatpush.bf16.msra.mxu0 %v1299
  %1738 = vmatpush.bf16.msra.mxu0 %v1298
  %1739 = vmatpush.bf16.msra.mxu0 %v1297
  %1740 = vmatpush.bf16.msra.mxu0 %v1296
  %1741 = vmatpush.bf16.msra.mxu0 %v1295
  %1742 = vmatpush.bf16.msra.mxu0 %v1294
  %1743 = vmatpush.bf16.msra.mxu0 %v1293
  %1744 = vmatpush.bf16.msra.mxu0 %v1292
  %1745 = vmatmul.bf16.gmra.mxu0 %v589
  %v1746 = vpop.f32.mrf.mxu0
  %v1747 = vadd.f32 %v1718, %v1746
  %v1748 = vpop.f32.mrf.mxu0
  %v1749 = vadd.f32 %v1720, %v1748
  %1750 = vmatmul.bf16.gmra.mxu0 %v605
  %v1751 = vpop.f32.mrf.mxu0
  %v1752 = vadd.f32 %v1723, %v1751
  %v1753 = vpop.f32.mrf.mxu0
  %v1754 = vadd.f32 %v1725, %v1753
  %1755 = vmatmul.bf16.gmra.mxu0 %v621
  %v1756 = vpop.f32.mrf.mxu0
  %v1757 = vadd.f32 %v1728, %v1756
  %v1758 = vpop.f32.mrf.mxu0
  %v1759 = vadd.f32 %v1730, %v1758
  %1760 = vmatmul.bf16.gmra.mxu0 %v637
  %v1761 = vpop.f32.mrf.mxu0
  %v1762 = vadd.f32 %v1733, %v1761
  %v1763 = vpop.f32.mrf.mxu0
  %v1764 = vadd.f32 %v1735, %v1763
  %1765 = vdwg.mxu0
  %1766 = vmatpush.bf16.msra.mxu0 %v1307
  %1767 = vmatpush.bf16.msra.mxu0 %v1306
  %1768 = vmatpush.bf16.msra.mxu0 %v1305
  %1769 = vmatpush.bf16.msra.mxu0 %v1304
  %1770 = vmatpush.bf16.msra.mxu0 %v1303
  %1771 = vmatpush.bf16.msra.mxu0 %v1302
  %1772 = vmatpush.bf16.msra.mxu0 %v1301
  %1773 = vmatpush.bf16.msra.mxu0 %v1300
  %1774 = vmatmul.bf16.gmra.mxu0 %v590
  %v1775 = vpop.f32.mrf.mxu0
  %v1776 = vadd.f32 %v1747, %v1775
  %v1777 = vpop.f32.mrf.mxu0
  %v1778 = vadd.f32 %v1749, %v1777
  %1779 = vmatmul.bf16.gmra.mxu0 %v606
  %v1780 = vpop.f32.mrf.mxu0
  %v1781 = vadd.f32 %v1752, %v1780
  %v1782 = vpop.f32.mrf.mxu0
  %v1783 = vadd.f32 %v1754, %v1782
  %1784 = vmatmul.bf16.gmra.mxu0 %v622
  %v1785 = vpop.f32.mrf.mxu0
  %v1786 = vadd.f32 %v1757, %v1785
  %v1787 = vpop.f32.mrf.mxu0
  %v1788 = vadd.f32 %v1759, %v1787
  %1789 = vmatmul.bf16.gmra.mxu0 %v638
  %v1790 = vpop.f32.mrf.mxu0
  %v1791 = vadd.f32 %v1762, %v1790
  %v1792 = vpop.f32.mrf.mxu0
  %v1793 = vadd.f32 %v1764, %v1792
  %1794 = vdwg.mxu0
  %1795 = vmatpush.bf16.msra.mxu0 %v1315
  %1796 = vmatpush.bf16.msra.mxu0 %v1314
  %1797 = vmatpush.bf16.msra.mxu0 %v1313
  %1798 = vmatpush.bf16.msra.mxu0 %v1312
  %1799 = vmatpush.bf16.msra.mxu0 %v1311
  %1800 = vmatpush.bf16.msra.mxu0 %v1310
  %1801 = vmatpush.bf16.msra.mxu0 %v1309
  %1802 = vmatpush.bf16.msra.mxu0 %v1308
  %1803 = vmatmul.bf16.gmra.mxu0 %v591
  %v1804 = vpop.f32.mrf.mxu0
  %v1805 = vadd.f32 %v1776, %v1804
  %v1806 = vpop.f32.mrf.mxu0
  %v1807 = vadd.f32 %v1778, %v1806
  %1808 = vmatmul.bf16.gmra.mxu0 %v607
  %v1809 = vpop.f32.mrf.mxu0
  %v1810 = vadd.f32 %v1781, %v1809
  %v1811 = vpop.f32.mrf.mxu0
  %v1812 = vadd.f32 %v1783, %v1811
  %1813 = vmatmul.bf16.gmra.mxu0 %v623
  %v1814 = vpop.f32.mrf.mxu0
  %v1815 = vadd.f32 %v1786, %v1814
  %v1816 = vpop.f32.mrf.mxu0
  %v1817 = vadd.f32 %v1788, %v1816
  %1818 = vmatmul.bf16.gmra.mxu0 %v639
  %v1819 = vpop.f32.mrf.mxu0
  %v1820 = vadd.f32 %v1791, %v1819
  %v1821 = vpop.f32.mrf.mxu0
  %v1822 = vadd.f32 %v1793, %v1821
  %1823 = vdwg.mxu0
  %1824 = vmatpush.bf16.msra.mxu0 %v1323
  %1825 = vmatpush.bf16.msra.mxu0 %v1322
  %1826 = vmatpush.bf16.msra.mxu0 %v1321
  %1827 = vmatpush.bf16.msra.mxu0 %v1320
  %1828 = vmatpush.bf16.msra.mxu0 %v1319
  %1829 = vmatpush.bf16.msra.mxu0 %v1318
  %1830 = vmatpush.bf16.msra.mxu0 %v1317
  %1831 = vmatpush.bf16.msra.mxu0 %v1316
  %1832 = vmatmul.bf16.gmra.mxu0 %v592
  %v1833 = vpop.f32.mrf.mxu0
  %v1834 = vadd.f32 %v1805, %v1833
  %v1835 = vpop.f32.mrf.mxu0
  %v1836 = vadd.f32 %v1807, %v1835
  %1837 = vmatmul.bf16.gmra.mxu0 %v608
  %v1838 = vpop.f32.mrf.mxu0
  %v1839 = vadd.f32 %v1810, %v1838
  %v1840 = vpop.f32.mrf.mxu0
  %v1841 = vadd.f32 %v1812, %v1840
  %1842 = vmatmul.bf16.gmra.mxu0 %v624
  %v1843 = vpop.f32.mrf.mxu0
  %v1844 = vadd.f32 %v1815, %v1843
  %v1845 = vpop.f32.mrf.mxu0
  %v1846 = vadd.f32 %v1817, %v1845
  %1847 = vmatmul.bf16.gmra.mxu0 %v640
  %v1848 = vpop.f32.mrf.mxu0
  %v1849 = vadd.f32 %v1820, %v1848
  %v1850 = vpop.f32.mrf.mxu0
  %v1851 = vadd.f32 %v1822, %v1850
  %1852 = vdwg.mxu0
  %1853 = vmatpush.bf16.msra.mxu0 %v1331
  %1854 = vmatpush.bf16.msra.mxu0 %v1330
  %1855 = vmatpush.bf16.msra.mxu0 %v1329
  %1856 = vmatpush.bf16.msra.mxu0 %v1328
  %1857 = vmatpush.bf16.msra.mxu0 %v1327
  %1858 = vmatpush.bf16.msra.mxu0 %v1326
  %1859 = vmatpush.bf16.msra.mxu0 %v1325
  %1860 = vmatpush.bf16.msra.mxu0 %v1324
  %1861 = vmatmul.bf16.gmra.mxu0 %v593
  %v1862 = vpop.f32.mrf.mxu0
  %v1863 = vadd.f32 %v1834, %v1862
  %v1864 = vpop.f32.mrf.mxu0
  %v1865 = vadd.f32 %v1836, %v1864
  %1866 = vmatmul.bf16.gmra.mxu0 %v609
  %v1867 = vpop.f32.mrf.mxu0
  %v1868 = vadd.f32 %v1839, %v1867
  %v1869 = vpop.f32.mrf.mxu0
  %v1870 = vadd.f32 %v1841, %v1869
  %1871 = vmatmul.bf16.gmra.mxu0 %v625
  %v1872 = vpop.f32.mrf.mxu0
  %v1873 = vadd.f32 %v1844, %v1872
  %v1874 = vpop.f32.mrf.mxu0
  %v1875 = vadd.f32 %v1846, %v1874
  %1876 = vmatmul.bf16.gmra.mxu0 %v641
  %v1877 = vpop.f32.mrf.mxu0
  %v1878 = vadd.f32 %v1849, %v1877
  %v1879 = vpop.f32.mrf.mxu0
  %v1880 = vadd.f32 %v1851, %v1879
  %1881 = vdwg.mxu0
  %1882 = vmatpush.bf16.msra.mxu0 %v1339
  %1883 = vmatpush.bf16.msra.mxu0 %v1338
  %1884 = vmatpush.bf16.msra.mxu0 %v1337
  %1885 = vmatpush.bf16.msra.mxu0 %v1336
  %1886 = vmatpush.bf16.msra.mxu0 %v1335
  %1887 = vmatpush.bf16.msra.mxu0 %v1334
  %1888 = vmatpush.bf16.msra.mxu0 %v1333
  %1889 = vmatpush.bf16.msra.mxu0 %v1332
  %1890 = vmatmul.bf16.gmra.mxu0 %v594
  %v1891 = vpop.f32.mrf.mxu0
  %v1892 = vadd.f32 %v1863, %v1891
  %v1893 = vpop.f32.mrf.mxu0
  %v1894 = vadd.f32 %v1865, %v1893
  %1895 = vmatmul.bf16.gmra.mxu0 %v610
  %v1896 = vpop.f32.mrf.mxu0
  %v1897 = vadd.f32 %v1868, %v1896
  %v1898 = vpop.f32.mrf.mxu0
  %v1899 = vadd.f32 %v1870, %v1898
  %1900 = vmatmul.bf16.gmra.mxu0 %v626
  %v1901 = vpop.f32.mrf.mxu0
  %v1902 = vadd.f32 %v1873, %v1901
  %v1903 = vpop.f32.mrf.mxu0
  %v1904 = vadd.f32 %v1875, %v1903
  %1905 = vmatmul.bf16.gmra.mxu0 %v642
  %v1906 = vpop.f32.mrf.mxu0
  %v1907 = vadd.f32 %v1878, %v1906
  %v1908 = vpop.f32.mrf.mxu0
  %v1909 = vadd.f32 %v1880, %v1908
  %1910 = vdwg.mxu0
  %1911 = vmatpush.bf16.msra.mxu0 %v1347
  %1912 = vmatpush.bf16.msra.mxu0 %v1346
  %1913 = vmatpush.bf16.msra.mxu0 %v1345
  %1914 = vmatpush.bf16.msra.mxu0 %v1344
  %1915 = vmatpush.bf16.msra.mxu0 %v1343
  %1916 = vmatpush.bf16.msra.mxu0 %v1342
  %1917 = vmatpush.bf16.msra.mxu0 %v1341
  %1918 = vmatpush.bf16.msra.mxu0 %v1340
  %1919 = vmatmul.bf16.gmra.mxu0 %v595
  %v1920 = vpop.f32.mrf.mxu0
  %v1921 = vadd.f32 %v1892, %v1920
  %v1922 = vpop.f32.mrf.mxu0
  %v1923 = vadd.f32 %v1894, %v1922
  %1924 = vmatmul.bf16.gmra.mxu0 %v611
  %v1925 = vpop.f32.mrf.mxu0
  %v1926 = vadd.f32 %v1897, %v1925
  %v1927 = vpop.f32.mrf.mxu0
  %v1928 = vadd.f32 %v1899, %v1927
  %1929 = vmatmul.bf16.gmra.mxu0 %v627
  %v1930 = vpop.f32.mrf.mxu0
  %v1931 = vadd.f32 %v1902, %v1930
  %v1932 = vpop.f32.mrf.mxu0
  %v1933 = vadd.f32 %v1904, %v1932
  %1934 = vmatmul.bf16.gmra.mxu0 %v643
  %v1935 = vpop.f32.mrf.mxu0
  %v1936 = vadd.f32 %v1907, %v1935
  %v1937 = vpop.f32.mrf.mxu0
  %v1938 = vadd.f32 %v1909, %v1937
  %1939 = vdwg.mxu0
  %vm1940 = vcmask 261120
  %v1941 = vsel %vm1940, %v1921, 0.0
  %1942 = vadd.xlane.f32.xlu0 %v1941
  %v1943 = vpop.xlane.xlu0 %1942
  %v1944 = vsel %vm1940, %v1923, 0.0
  %1945 = vadd.xlane.f32.xlu0 %v1944
  %v1946 = vpop.xlane.xlu0 %1945
  %v1947 = vsel %vm1940, %v1926, 0.0
  %1948 = vadd.xlane.f32.xlu0 %v1947
  %v1949 = vpop.xlane.xlu0 %1948
  %v1950 = vsel %vm1940, %v1928, 0.0
  %1951 = vadd.xlane.f32.xlu0 %v1950
  %v1952 = vpop.xlane.xlu0 %1951
  %v1953 = vsel %vm1940, %v1931, 0.0
  %1954 = vadd.xlane.f32.xlu0 %v1953
  %v1955 = vpop.xlane.xlu0 %1954
  %v1956 = vsel %vm1940, %v1933, 0.0
  %1957 = vadd.xlane.f32.xlu0 %v1956
  %v1958 = vpop.xlane.xlu0 %1957
  %v1959 = vsel %vm1940, %v1936, 0.0
  %1960 = vadd.xlane.f32.xlu0 %v1959
  %v1961 = vpop.xlane.xlu0 %1960
  %v1962 = vsel %vm1940, %v1938, 0.0
  %1963 = vadd.xlane.f32.xlu0 %v1962
  %v1964 = vpop.xlane.xlu0 %1963
  %v1965 = vmul.f32 %v1943, 0.03125
  %v1966 = vmul.f32 %v1946, 0.03125
  %v1967 = vmul.f32 %v1949, 0.03125
  %v1968 = vmul.f32 %v1952, 0.03125
  %v1969 = vmul.f32 %v1955, 0.03125
  %v1970 = vmul.f32 %v1958, 0.03125
  %v1971 = vmul.f32 %v1961, 0.03125
  %v1972 = vmul.f32 %v1964, 0.03125
  %v1973 = vsub.f32 %v1921, %v1965
  %v1974 = vsub.f32 %v1923, %v1966
  %v1975 = vsub.f32 %v1926, %v1967
  %v1976 = vsub.f32 %v1928, %v1968
  %v1977 = vsub.f32 %v1931, %v1969
  %v1978 = vsub.f32 %v1933, %v1970
  %v1979 = vsub.f32 %v1936, %v1971
  %v1980 = vsub.f32 %v1938, %v1972
  %v1981 = vmul.f32 %v1973, %v1973
  %v1982 = vmul.f32 %v1974, %v1974
  %v1983 = vmul.f32 %v1975, %v1975
  %v1984 = vmul.f32 %v1976, %v1976
  %v1985 = vmul.f32 %v1977, %v1977
  %v1986 = vmul.f32 %v1978, %v1978
  %v1987 = vmul.f32 %v1979, %v1979
  %v1988 = vmul.f32 %v1980, %v1980
  %v1989 = vsel %vm1940, %v1981, 0.0
  %1990 = vadd.xlane.f32.xlu0 %v1989
  %v1991 = vpop.xlane.xlu0 %1990
  %v1992 = vsel %vm1940, %v1982, 0.0
  %1993 = vadd.xlane.f32.xlu0 %v1992
  %v1994 = vpop.xlane.xlu0 %1993
  %v1995 = vsel %vm1940, %v1983, 0.0
  %1996 = vadd.xlane.f32.xlu0 %v1995
  %v1997 = vpop.xlane.xlu0 %1996
  %v1998 = vsel %vm1940, %v1984, 0.0
  %1999 = vadd.xlane.f32.xlu0 %v1998
  %v2000 = vpop.xlane.xlu0 %1999
  %v2001 = vsel %vm1940, %v1985, 0.0
  %2002 = vadd.xlane.f32.xlu0 %v2001
  %v2003 = vpop.xlane.xlu0 %2002
  %v2004 = vsel %vm1940, %v1986, 0.0
  %2005 = vadd.xlane.f32.xlu0 %v2004
  %v2006 = vpop.xlane.xlu0 %2005
  %v2007 = vsel %vm1940, %v1987, 0.0
  %2008 = vadd.xlane.f32.xlu0 %v2007
  %v2009 = vpop.xlane.xlu0 %2008
  %v2010 = vsel %vm1940, %v1988, 0.0
  %2011 = vadd.xlane.f32.xlu0 %v2010
  %v2012 = vpop.xlane.xlu0 %2011
  %v2013 = vmul.f32 %v1991, 0.03125
  %v2014 = vmul.f32 %v1994, 0.03125
  %v2015 = vmul.f32 %v1997, 0.03125
  %v2016 = vmul.f32 %v2000, 0.03125
  %v2017 = vmul.f32 %v2003, 0.03125
  %v2018 = vmul.f32 %v2006, 0.03125
  %v2019 = vmul.f32 %v2009, 0.03125
  %v2020 = vmul.f32 %v2012, 0.03125
  %v2021 = vld [vmem:[%s3] sm:$0xff]
  %v2022 = vld [vmem:[%s3 + $0x8] sm:$0xff]
  %v2023 = vld [vmem:[%s3 + $0x10] sm:$0xff]
  %v2024 = vld [vmem:[%s3 + $0x18] sm:$0xff]
  %v2025 = vld [vmem:[%s3 + $0x20] sm:$0xff]
  %v2026 = vld [vmem:[%s3 + $0x28] sm:$0xff]
  %v2027 = vld [vmem:[%s3 + $0x30] sm:$0xff]
  %v2028 = vld [vmem:[%s3 + $0x38] sm:$0xff]
  %v2029 = vadd.f32 %v2013, 1e-05
  %v2030 = vadd.f32 %v2014, 1e-05
  %v2031 = vadd.f32 %v2015, 1e-05
  %v2032 = vadd.f32 %v2016, 1e-05
  %v2033 = vadd.f32 %v2017, 1e-05
  %v2034 = vadd.f32 %v2018, 1e-05
  %v2035 = vadd.f32 %v2019, 1e-05
  %v2036 = vadd.f32 %v2020, 1e-05
  %v2037 = vrsqrt.pop %v2029
  %v2038 = vmul.f32 %v2037, %v2029
  %v2039 = vmul.f32 %v2038, %v2037
  %v2040 = vmul.f32 0.5, %v2039
  %v2041 = vsub.f32 1.5, %v2040
  %v2042 = vmul.f32 %v2037, %v2041
  %vm2043 = vweird.f32 %v2029
  %vm2044 = vweird.f32 %v2037
  %vm2045 = vmor %vm2043, %vm2044
  %v2046 = vsel %vm2045, %v2037, %v2042
  %v2047 = vrsqrt.pop %v2030
  %v2048 = vmul.f32 %v2047, %v2030
  %v2049 = vmul.f32 %v2048, %v2047
  %v2050 = vmul.f32 0.5, %v2049
  %v2051 = vsub.f32 1.5, %v2050
  %v2052 = vmul.f32 %v2047, %v2051
  %vm2053 = vweird.f32 %v2030
  %vm2054 = vweird.f32 %v2047
  %vm2055 = vmor %vm2053, %vm2054
  %v2056 = vsel %vm2055, %v2047, %v2052
  %v2057 = vrsqrt.pop %v2031
  %v2058 = vmul.f32 %v2057, %v2031
  %v2059 = vmul.f32 %v2058, %v2057
  %v2060 = vmul.f32 0.5, %v2059
  %v2061 = vsub.f32 1.5, %v2060
  %v2062 = vmul.f32 %v2057, %v2061
  %vm2063 = vweird.f32 %v2031
  %vm2064 = vweird.f32 %v2057
  %vm2065 = vmor %vm2063, %vm2064
  %v2066 = vsel %vm2065, %v2057, %v2062
  %v2067 = vrsqrt.pop %v2032
  %v2068 = vmul.f32 %v2067, %v2032
  %v2069 = vmul.f32 %v2068, %v2067
  %v2070 = vmul.f32 0.5, %v2069
  %v2071 = vsub.f32 1.5, %v2070
  %v2072 = vmul.f32 %v2067, %v2071
  %vm2073 = vweird.f32 %v2032
  %vm2074 = vweird.f32 %v2067
  %vm2075 = vmor %vm2073, %vm2074
  %v2076 = vsel %vm2075, %v2067, %v2072
  %v2077 = vrsqrt.pop %v2033
  %v2078 = vmul.f32 %v2077, %v2033
  %v2079 = vmul.f32 %v2078, %v2077
  %v2080 = vmul.f32 0.5, %v2079
  %v2081 = vsub.f32 1.5, %v2080
  %v2082 = vmul.f32 %v2077, %v2081
  %vm2083 = vweird.f32 %v2033
  %vm2084 = vweird.f32 %v2077
  %vm2085 = vmor %vm2083, %vm2084
  %v2086 = vsel %vm2085, %v2077, %v2082
  %v2087 = vrsqrt.pop %v2034
  %v2088 = vmul.f32 %v2087, %v2034
  %v2089 = vmul.f32 %v2088, %v2087
  %v2090 = vmul.f32 0.5, %v2089
  %v2091 = vsub.f32 1.5, %v2090
  %v2092 = vmul.f32 %v2087, %v2091
  %vm2093 = vweird.f32 %v2034
  %vm2094 = vweird.f32 %v2087
  %vm2095 = vmor %vm2093, %vm2094
  %v2096 = vsel %vm2095, %v2087, %v2092
  %v2097 = vrsqrt.pop %v2035
  %v2098 = vmul.f32 %v2097, %v2035
  %v2099 = vmul.f32 %v2098, %v2097
  %v2100 = vmul.f32 0.5, %v2099
  %v2101 = vsub.f32 1.5, %v2100
  %v2102 = vmul.f32 %v2097, %v2101
  %vm2103 = vweird.f32 %v2035
  %vm2104 = vweird.f32 %v2097
  %vm2105 = vmor %vm2103, %vm2104
  %v2106 = vsel %vm2105, %v2097, %v2102
  %v2107 = vrsqrt.pop %v2036
  %v2108 = vmul.f32 %v2107, %v2036
  %v2109 = vmul.f32 %v2108, %v2107
  %v2110 = vmul.f32 0.5, %v2109
  %v2111 = vsub.f32 1.5, %v2110
  %v2112 = vmul.f32 %v2107, %v2111
  %vm2113 = vweird.f32 %v2036
  %vm2114 = vweird.f32 %v2107
  %vm2115 = vmor %vm2113, %vm2114
  %v2116 = vsel %vm2115, %v2107, %v2112
  %v2117 = vmul.f32 %v2021, %v2046
  %v2118 = vmul.f32 %v2022, %v2056
  %v2119 = vmul.f32 %v2023, %v2066
  %v2120 = vmul.f32 %v2024, %v2076
  %v2121 = vmul.f32 %v2025, %v2086
  %v2122 = vmul.f32 %v2026, %v2096
  %v2123 = vmul.f32 %v2027, %v2106
  %v2124 = vmul.f32 %v2028, %v2116
  %2126 = vset.pattern.permute.xlu0 0
  %2127 = vperm.xlu0 %2126, %v2117
  %v2128 = vpop.permute.xlu0 %2127
  %2131 = vset.pattern.permute.xlu0 0
  %2132 = vperm.xlu0 %2131, %v2118
  %v2133 = vpop.permute.xlu0 %2132
  %2136 = vset.pattern.permute.xlu0 0
  %2137 = vperm.xlu0 %2136, %v2119
  %v2138 = vpop.permute.xlu0 %2137
  %2141 = vset.pattern.permute.xlu0 0
  %2142 = vperm.xlu0 %2141, %v2120
  %v2143 = vpop.permute.xlu0 %2142
  %2146 = vset.pattern.permute.xlu0 0
  %2147 = vperm.xlu0 %2146, %v2121
  %v2148 = vpop.permute.xlu0 %2147
  %2151 = vset.pattern.permute.xlu0 0
  %2152 = vperm.xlu0 %2151, %v2122
  %v2153 = vpop.permute.xlu0 %2152
  %2156 = vset.pattern.permute.xlu0 0
  %2157 = vperm.xlu0 %2156, %v2123
  %v2158 = vpop.permute.xlu0 %2157
  %2161 = vset.pattern.permute.xlu0 0
  %2162 = vperm.xlu0 %2161, %v2124
  %v2163 = vpop.permute.xlu0 %2162
  %v2165 = vmul.f32 %v1973, %v2128
  %v2166 = vmul.f32 %v1974, %v2133
  %v2167 = vmul.f32 %v1975, %v2138
  %v2168 = vmul.f32 %v1976, %v2143
  %v2169 = vmul.f32 %v1977, %v2148
  %v2170 = vmul.f32 %v1978, %v2153
  %v2171 = vmul.f32 %v1979, %v2158
  %v2172 = vmul.f32 %v1980, %v2163
  %v2173 = vld [vmem:[%s4] sm:$0xff]
  %v2174 = vld [vmem:[%s4 + $0x8] sm:$0xff]
  %v2175 = vld [vmem:[%s4 + $0x10] sm:$0xff]
  %v2176 = vld [vmem:[%s4 + $0x18] sm:$0xff]
  %v2177 = vld [vmem:[%s4 + $0x20] sm:$0xff]
  %v2178 = vld [vmem:[%s4 + $0x28] sm:$0xff]
  %v2179 = vld [vmem:[%s4 + $0x30] sm:$0xff]
  %v2180 = vld [vmem:[%s4 + $0x38] sm:$0xff]
  %2182 = vset.pattern.permute.xlu0 0
  %2183 = vperm.xlu0 %2182, %v2173
  %v2184 = vpop.permute.xlu0 %2183
  %2187 = vset.pattern.permute.xlu0 0
  %2188 = vperm.xlu0 %2187, %v2174
  %v2189 = vpop.permute.xlu0 %2188
  %2192 = vset.pattern.permute.xlu0 0
  %2193 = vperm.xlu0 %2192, %v2175
  %v2194 = vpop.permute.xlu0 %2193
  %2197 = vset.pattern.permute.xlu0 0
  %2198 = vperm.xlu0 %2197, %v2176
  %v2199 = vpop.permute.xlu0 %2198
  %2202 = vset.pattern.permute.xlu0 0
  %2203 = vperm.xlu0 %2202, %v2177
  %v2204 = vpop.permute.xlu0 %2203
  %2207 = vset.pattern.permute.xlu0 0
  %2208 = vperm.xlu0 %2207, %v2178
  %v2209 = vpop.permute.xlu0 %2208
  %2212 = vset.pattern.permute.xlu0 0
  %2213 = vperm.xlu0 %2212, %v2179
  %v2214 = vpop.permute.xlu0 %2213
  %2217 = vset.pattern.permute.xlu0 0
  %2218 = vperm.xlu0 %2217, %v2180
  %v2219 = vpop.permute.xlu0 %2218
  %v2221 = vadd.f32 %v2165, %v2184
  %v2222 = vadd.f32 %v2166, %v2189
  %v2223 = vadd.f32 %v2167, %v2194
  %v2224 = vadd.f32 %v2168, %v2199
  %v2225 = vadd.f32 %v2169, %v2204
  %v2226 = vadd.f32 %v2170, %v2209
  %v2227 = vadd.f32 %v2171, %v2214
  %v2228 = vadd.f32 %v2172, %v2219
  %vm2229 = vcmp.ge.f32.partialorder %v2221, 0.0
  %vm2230 = vcmp.ge.f32.partialorder %v2222, 0.0
  %vm2231 = vcmp.ge.f32.partialorder %v2223, 0.0
  %vm2232 = vcmp.ge.f32.partialorder %v2224, 0.0
  %vm2233 = vcmp.ge.f32.partialorder %v2225, 0.0
  %vm2234 = vcmp.ge.f32.partialorder %v2226, 0.0
  %vm2235 = vcmp.ge.f32.partialorder %v2227, 0.0
  %vm2236 = vcmp.ge.f32.partialorder %v2228, 0.0
  %v2237 = vmul.f32 %v2221, 0.2
  %v2238 = vmul.f32 %v2222, 0.2
  %v2239 = vmul.f32 %v2223, 0.2
  %v2240 = vmul.f32 %v2224, 0.2
  %v2241 = vmul.f32 %v2225, 0.2
  %v2242 = vmul.f32 %v2226, 0.2
  %v2243 = vmul.f32 %v2227, 0.2
  %v2244 = vmul.f32 %v2228, 0.2
  %v2245 = vsel %vm2229, %v2221, %v2237
  %v2246 = vsel %vm2230, %v2222, %v2238
  %v2247 = vsel %vm2231, %v2223, %v2239
  %v2248 = vsel %vm2232, %v2224, %v2240
  %v2249 = vsel %vm2233, %v2225, %v2241
  %v2250 = vsel %vm2234, %v2226, %v2242
  %v2251 = vsel %vm2235, %v2227, %v2243
  %v2252 = vsel %vm2236, %v2228, %v2244
  %v2253 = vpack.c.bf16 %v2245, %v2245
  %v2254 = vpack.c.bf16 %v2246, %v2246
  %v2255 = vpack.c.bf16 %v2247, %v2247
  %v2256 = vpack.c.bf16 %v2248, %v2248
  %v2257 = vpack.c.bf16 %v2249, %v2249
  %v2258 = vpack.c.bf16 %v2250, %v2250
  %v2259 = vpack.c.bf16 %v2251, %v2251
  %v2260 = vpack.c.bf16 %v2252, %v2252
  %vm2261 = vcmask 257024
  %2262 = vst.msk [vmem:[%s5] sm:$0xf] %vm2261, %v2253
  %2263 = vst.msk [vmem:[%s5 + $0x4] sm:$0xf] %vm2261, %v2254
  %2264 = vst.msk [vmem:[%s5 + $0x8] sm:$0xf] %vm2261, %v2255
  %2265 = vst.msk [vmem:[%s5 + $0xc] sm:$0xf] %vm2261, %v2256
  %2266 = vst.msk [vmem:[%s5 + $0x10] sm:$0xf] %vm2261, %v2257
  %2267 = vst.msk [vmem:[%s5 + $0x14] sm:$0xf] %vm2261, %v2258
  %2268 = vst.msk [vmem:[%s5 + $0x18] sm:$0xf] %vm2261, %v2259
  %2269 = vst.msk [vmem:[%s5 + $0x1c] sm:$0xf] %vm2261, %v2260
  // Predicated region
  $region22: #{_lambda_.6} parent=0 // pred_check
    _
  $region23: #{_lambda_.6} parent=0 // pred_check_branch
    %2271 = sbr.rel (0) target = $region25
  $region24: #{_lambda_.6} parent=0 // pred_region
    _
  $region25: #{_lambda_.6} parent=0 // pred_fallthru
    _
  // Predicated region
  $region26: #{_lambda_.6} parent=0 // pred_check
    _
  $region27: #{_lambda_.6} parent=0 // pred_check_branch
    %2273 = sbr.rel (0) target = $region29
  $region28: #{_lambda_.6} parent=0 // pred_region
    _
  $region29: #{_lambda_.6} parent=0 // pred_fallthru
    _

// kernel: _lambda_.7
$region0: #{_lambda_.7}
  #allocation0 [shape = 'u32[]', space=smem, size = 0x4, offset = 0x4, fixed_abs, tag = 'smem constant byte address 0x4 - core index']
  #allocation1 [shape = 'u32[72,128]{1,0:T(1,128)}', space=vmem, size = 0x9000, scoped, tag = 'internal scratch']
  #allocation2 [shape = 'f32[1,1]{1,0:T(1,128)S(1)}', space=vmem, size = 0x200, scoped, tag = 'scoped memory for _lambda_.7']
  %s0 = inlined_call_operand.vmem [shape: bf16[1,4096], index: 0, kind: input, shape index: {}]
  %s1 = inlined_call_operand.vmem [shape: bf16[4096,2], index: 1, kind: input, shape index: {}]
  %s2 = inlined_call_operand.<no memory space> [shape: f32[1,1], index: 2, kind: input, shape index: {}]
  %s3 = inlined_call_operand.hbm [shape: f32[1,2], index: 3, kind: output, shape index: {}]
  %s4 = sld [smem:[#allocation0]]
  $region22: #{_lambda_.7} parent=0
    _
  %s6 = ssub.s32 1, %s4
  %s7 = scalar_select 0, %s6, %s4
  %v8 = vstv %s2
  %9 = vst [vmem:[#allocation2] sm:$0x1] %v8
  $region1: #{_lambda_.7} parent=0
    #allocation3 [shape = 'u8[512]{0}', space=vmem, size = 0x400, scoped, tag = 'output window, operand 0, single buffered']
    #allocation4 [shape = 's32[1]{0}', space=sflag, size = 0x4, scoped, tag = 'scoped memory for _lambda_.7']
    %10 = vsyncpa [#allocation4], 0
    // Predicated region
    $region2: #{_lambda_.7} parent=1 // pred_check
      _
    $region3: #{_lambda_.7} parent=1 // pred_check_branch
      %12 = sbr.rel (0) target = $region5
    $region4: #{_lambda_.7} parent=1 // pred_region
      _
    $region5: #{_lambda_.7} parent=1 // pred_fallthru
      _
    // Predicated region
    $region6: #{_lambda_.7} parent=1 // pred_check
      _
    $region7: #{_lambda_.7} parent=1 // pred_check_branch
      %14 = sbr.rel (0) target = $region9
    $region8: #{_lambda_.7} parent=1 // pred_region
      _
    $region9: #{_lambda_.7} parent=1 // pred_fallthru
      _
    // Predicated region
    $region10: #{_lambda_.7} parent=1 // pred_check
      _
    $region11: #{_lambda_.7} parent=1 // pred_check_branch
      %16 = sbr.rel (0) target = $region13
    $region12: #{_lambda_.7} parent=1 // pred_region
      _
    $region13: #{_lambda_.7} parent=1 // pred_fallthru
      _
    %v17 = vld [vmem:[%s0] sm:$0xff]
    %v18 = vld [vmem:[%s0 + $0x8] sm:$0xff]
    %v19 = vld [vmem:[%s0 + $0x10] sm:$0xff]
    %v20 = vld [vmem:[%s0 + $0x18] sm:$0xff]
    %v21 = vld [vmem:[%s1] sm:$0xf]
    %v22 = vld [vmem:[%s1 + $0x4] sm:$0xf]
    %v23 = vld [vmem:[%s1 + $0x8] sm:$0xf]
    %v24 = vld [vmem:[%s1 + $0xc] sm:$0xf]
    %v25 = vld [vmem:[%s1 + $0x10] sm:$0xf]
    %v26 = vld [vmem:[%s1 + $0x14] sm:$0xf]
    %v27 = vld [vmem:[%s1 + $0x18] sm:$0xf]
    %v28 = vld [vmem:[%s1 + $0x1c] sm:$0xf]
    %v29 = vld [vmem:[%s1 + $0x20] sm:$0xf]
    %v30 = vld [vmem:[%s1 + $0x24] sm:$0xf]
    %v31 = vld [vmem:[%s1 + $0x28] sm:$0xf]
    %v32 = vld [vmem:[%s1 + $0x2c] sm:$0xf]
    %v33 = vld [vmem:[%s1 + $0x30] sm:$0xf]
    %v34 = vld [vmem:[%s1 + $0x34] sm:$0xf]
    %v35 = vld [vmem:[%s1 + $0x38] sm:$0xf]
    %v36 = vld [vmem:[%s1 + $0x3c] sm:$0xf]
    %v37 = vld [vmem:[%s1 + $0x40] sm:$0xf]
    %v38 = vld [vmem:[%s1 + $0x44] sm:$0xf]
    %v39 = vld [vmem:[%s1 + $0x48] sm:$0xf]
    %v40 = vld [vmem:[%s1 + $0x4c] sm:$0xf]
    %v41 = vld [vmem:[%s1 + $0x50] sm:$0xf]
    %v42 = vld [vmem:[%s1 + $0x54] sm:$0xf]
    %v43 = vld [vmem:[%s1 + $0x58] sm:$0xf]
    %v44 = vld [vmem:[%s1 + $0x5c] sm:$0xf]
    %v45 = vld [vmem:[%s1 + $0x60] sm:$0xf]
    %v46 = vld [vmem:[%s1 + $0x64] sm:$0xf]
    %v47 = vld [vmem:[%s1 + $0x68] sm:$0xf]
    %v48 = vld [vmem:[%s1 + $0x6c] sm:$0xf]
    %v49 = vld [vmem:[%s1 + $0x70] sm:$0xf]
    %v50 = vld [vmem:[%s1 + $0x74] sm:$0xf]
    %v51 = vld [vmem:[%s1 + $0x78] sm:$0xf]
    %v52 = vld [vmem:[%s1 + $0x7c] sm:$0xf]
    %v53 = vld [vmem:[%s1 + $0x80] sm:$0xf]
    %v54 = vld [vmem:[%s1 + $0x84] sm:$0xf]
    %v55 = vld [vmem:[%s1 + $0x88] sm:$0xf]
    %v56 = vld [vmem:[%s1 + $0x8c] sm:$0xf]
    %v57 = vld [vmem:[%s1 + $0x90] sm:$0xf]
    %v58 = vld [vmem:[%s1 + $0x94] sm:$0xf]
    %v59 = vld [vmem:[%s1 + $0x98] sm:$0xf]
    %v60 = vld [vmem:[%s1 + $0x9c] sm:$0xf]
    %v61 = vld [vmem:[%s1 + $0xa0] sm:$0xf]
    %v62 = vld [vmem:[%s1 + $0xa4] sm:$0xf]
    %v63 = vld [vmem:[%s1 + $0xa8] sm:$0xf]
    %v64 = vld [vmem:[%s1 + $0xac] sm:$0xf]
    %v65 = vld [vmem:[%s1 + $0xb0] sm:$0xf]
    %v66 = vld [vmem:[%s1 + $0xb4] sm:$0xf]
    %v67 = vld [vmem:[%s1 + $0xb8] sm:$0xf]
    %v68 = vld [vmem:[%s1 + $0xbc] sm:$0xf]
    %v69 = vld [vmem:[%s1 + $0xc0] sm:$0xf]
    %v70 = vld [vmem:[%s1 + $0xc4] sm:$0xf]
    %v71 = vld [vmem:[%s1 + $0xc8] sm:$0xf]
    %v72 = vld [vmem:[%s1 + $0xcc] sm:$0xf]
    %v73 = vld [vmem:[%s1 + $0xd0] sm:$0xf]
    %v74 = vld [vmem:[%s1 + $0xd4] sm:$0xf]
    %v75 = vld [vmem:[%s1 + $0xd8] sm:$0xf]
    %v76 = vld [vmem:[%s1 + $0xdc] sm:$0xf]
    %v77 = vld [vmem:[%s1 + $0xe0] sm:$0xf]
    %v78 = vld [vmem:[%s1 + $0xe4] sm:$0xf]
    %v79 = vld [vmem:[%s1 + $0xe8] sm:$0xf]
    %v80 = vld [vmem:[%s1 + $0xec] sm:$0xf]
    %v81 = vld [vmem:[%s1 + $0xf0] sm:$0xf]
    %v82 = vld [vmem:[%s1 + $0xf4] sm:$0xf]
    %v83 = vld [vmem:[%s1 + $0xf8] sm:$0xf]
    %v84 = vld [vmem:[%s1 + $0xfc] sm:$0xf]
    %v85 = vld [vmem:[%s1 + $0x100] sm:$0xf]
    %v86 = vld [vmem:[%s1 + $0x104] sm:$0xf]
    %v87 = vld [vmem:[%s1 + $0x108] sm:$0xf]
    %v88 = vld [vmem:[%s1 + $0x10c] sm:$0xf]
    %v89 = vld [vmem:[%s1 + $0x110] sm:$0xf]
    %v90 = vld [vmem:[%s1 + $0x114] sm:$0xf]
    %v91 = vld [vmem:[%s1 + $0x118] sm:$0xf]
    %v92 = vld [vmem:[%s1 + $0x11c] sm:$0xf]
    %v93 = vld [vmem:[%s1 + $0x120] sm:$0xf]
    %v94 = vld [vmem:[%s1 + $0x124] sm:$0xf]
    %v95 = vld [vmem:[%s1 + $0x128] sm:$0xf]
    %v96 = vld [vmem:[%s1 + $0x12c] sm:$0xf]
    %v97 = vld [vmem:[%s1 + $0x130] sm:$0xf]
    %v98 = vld [vmem:[%s1 + $0x134] sm:$0xf]
    %v99 = vld [vmem:[%s1 + $0x138] sm:$0xf]
    %v100 = vld [vmem:[%s1 + $0x13c] sm:$0xf]
    %v101 = vld [vmem:[%s1 + $0x140] sm:$0xf]
    %v102 = vld [vmem:[%s1 + $0x144] sm:$0xf]
    %v103 = vld [vmem:[%s1 + $0x148] sm:$0xf]
    %v104 = vld [vmem:[%s1 + $0x14c] sm:$0xf]
    %v105 = vld [vmem:[%s1 + $0x150] sm:$0xf]
    %v106 = vld [vmem:[%s1 + $0x154] sm:$0xf]
    %v107 = vld [vmem:[%s1 + $0x158] sm:$0xf]
    %v108 = vld [vmem:[%s1 + $0x15c] sm:$0xf]
    %v109 = vld [vmem:[%s1 + $0x160] sm:$0xf]
    %v110 = vld [vmem:[%s1 + $0x164] sm:$0xf]
    %v111 = vld [vmem:[%s1 + $0x168] sm:$0xf]
    %v112 = vld [vmem:[%s1 + $0x16c] sm:$0xf]
    %v113 = vld [vmem:[%s1 + $0x170] sm:$0xf]
    %v114 = vld [vmem:[%s1 + $0x174] sm:$0xf]
    %v115 = vld [vmem:[%s1 + $0x178] sm:$0xf]
    %v116 = vld [vmem:[%s1 + $0x17c] sm:$0xf]
    %v117 = vld [vmem:[%s1 + $0x180] sm:$0xf]
    %v118 = vld [vmem:[%s1 + $0x184] sm:$0xf]
    %v119 = vld [vmem:[%s1 + $0x188] sm:$0xf]
    %v120 = vld [vmem:[%s1 + $0x18c] sm:$0xf]
    %v121 = vld [vmem:[%s1 + $0x190] sm:$0xf]
    %v122 = vld [vmem:[%s1 + $0x194] sm:$0xf]
    %v123 = vld [vmem:[%s1 + $0x198] sm:$0xf]
    %v124 = vld [vmem:[%s1 + $0x19c] sm:$0xf]
    %v125 = vld [vmem:[%s1 + $0x1a0] sm:$0xf]
    %v126 = vld [vmem:[%s1 + $0x1a4] sm:$0xf]
    %v127 = vld [vmem:[%s1 + $0x1a8] sm:$0xf]
    %v128 = vld [vmem:[%s1 + $0x1ac] sm:$0xf]
    %v129 = vld [vmem:[%s1 + $0x1b0] sm:$0xf]
    %v130 = vld [vmem:[%s1 + $0x1b4] sm:$0xf]
    %v131 = vld [vmem:[%s1 + $0x1b8] sm:$0xf]
    %v132 = vld [vmem:[%s1 + $0x1bc] sm:$0xf]
    %v133 = vld [vmem:[%s1 + $0x1c0] sm:$0xf]
    %v134 = vld [vmem:[%s1 + $0x1c4] sm:$0xf]
    %v135 = vld [vmem:[%s1 + $0x1c8] sm:$0xf]
    %v136 = vld [vmem:[%s1 + $0x1cc] sm:$0xf]
    %v137 = vld [vmem:[%s1 + $0x1d0] sm:$0xf]
    %v138 = vld [vmem:[%s1 + $0x1d4] sm:$0xf]
    %v139 = vld [vmem:[%s1 + $0x1d8] sm:$0xf]
    %v140 = vld [vmem:[%s1 + $0x1dc] sm:$0xf]
    %v141 = vld [vmem:[%s1 + $0x1e0] sm:$0xf]
    %v142 = vld [vmem:[%s1 + $0x1e4] sm:$0xf]
    %v143 = vld [vmem:[%s1 + $0x1e8] sm:$0xf]
    %v144 = vld [vmem:[%s1 + $0x1ec] sm:$0xf]
    %v145 = vld [vmem:[%s1 + $0x1f0] sm:$0xf]
    %v146 = vld [vmem:[%s1 + $0x1f4] sm:$0xf]
    %v147 = vld [vmem:[%s1 + $0x1f8] sm:$0xf]
    %v148 = vld [vmem:[%s1 + $0x1fc] sm:$0xf]
    %v149 = vld [vmem:[%s1 + $0x200] sm:$0xf]
    %v150 = vld [vmem:[%s1 + $0x204] sm:$0xf]
    %v151 = vld [vmem:[%s1 + $0x208] sm:$0xf]
    %v152 = vld [vmem:[%s1 + $0x20c] sm:$0xf]
    %v153 = vld [vmem:[%s1 + $0x210] sm:$0xf]
    %v154 = vld [vmem:[%s1 + $0x214] sm:$0xf]
    %v155 = vld [vmem:[%s1 + $0x218] sm:$0xf]
    %v156 = vld [vmem:[%s1 + $0x21c] sm:$0xf]
    %v157 = vld [vmem:[%s1 + $0x220] sm:$0xf]
    %v158 = vld [vmem:[%s1 + $0x224] sm:$0xf]
    %v159 = vld [vmem:[%s1 + $0x228] sm:$0xf]
    %v160 = vld [vmem:[%s1 + $0x22c] sm:$0xf]
    %v161 = vld [vmem:[%s1 + $0x230] sm:$0xf]
    %v162 = vld [vmem:[%s1 + $0x234] sm:$0xf]
    %v163 = vld [vmem:[%s1 + $0x238] sm:$0xf]
    %v164 = vld [vmem:[%s1 + $0x23c] sm:$0xf]
    %v165 = vld [vmem:[%s1 + $0x240] sm:$0xf]
    %v166 = vld [vmem:[%s1 + $0x244] sm:$0xf]
    %v167 = vld [vmem:[%s1 + $0x248] sm:$0xf]
    %v168 = vld [vmem:[%s1 + $0x24c] sm:$0xf]
    %v169 = vld [vmem:[%s1 + $0x250] sm:$0xf]
    %v170 = vld [vmem:[%s1 + $0x254] sm:$0xf]
    %v171 = vld [vmem:[%s1 + $0x258] sm:$0xf]
    %v172 = vld [vmem:[%s1 + $0x25c] sm:$0xf]
    %v173 = vld [vmem:[%s1 + $0x260] sm:$0xf]
    %v174 = vld [vmem:[%s1 + $0x264] sm:$0xf]
    %v175 = vld [vmem:[%s1 + $0x268] sm:$0xf]
    %v176 = vld [vmem:[%s1 + $0x26c] sm:$0xf]
    %v177 = vld [vmem:[%s1 + $0x270] sm:$0xf]
    %v178 = vld [vmem:[%s1 + $0x274] sm:$0xf]
    %v179 = vld [vmem:[%s1 + $0x278] sm:$0xf]
    %v180 = vld [vmem:[%s1 + $0x27c] sm:$0xf]
    %v181 = vld [vmem:[%s1 + $0x280] sm:$0xf]
    %v182 = vld [vmem:[%s1 + $0x284] sm:$0xf]
    %v183 = vld [vmem:[%s1 + $0x288] sm:$0xf]
    %v184 = vld [vmem:[%s1 + $0x28c] sm:$0xf]
    %v185 = vld [vmem:[%s1 + $0x290] sm:$0xf]
    %v186 = vld [vmem:[%s1 + $0x294] sm:$0xf]
    %v187 = vld [vmem:[%s1 + $0x298] sm:$0xf]
    %v188 = vld [vmem:[%s1 + $0x29c] sm:$0xf]
    %v189 = vld [vmem:[%s1 + $0x2a0] sm:$0xf]
    %v190 = vld [vmem:[%s1 + $0x2a4] sm:$0xf]
    %v191 = vld [vmem:[%s1 + $0x2a8] sm:$0xf]
    %v192 = vld [vmem:[%s1 + $0x2ac] sm:$0xf]
    %v193 = vld [vmem:[%s1 + $0x2b0] sm:$0xf]
    %v194 = vld [vmem:[%s1 + $0x2b4] sm:$0xf]
    %v195 = vld [vmem:[%s1 + $0x2b8] sm:$0xf]
    %v196 = vld [vmem:[%s1 + $0x2bc] sm:$0xf]
    %v197 = vld [vmem:[%s1 + $0x2c0] sm:$0xf]
    %v198 = vld [vmem:[%s1 + $0x2c4] sm:$0xf]
    %v199 = vld [vmem:[%s1 + $0x2c8] sm:$0xf]
    %v200 = vld [vmem:[%s1 + $0x2cc] sm:$0xf]
    %v201 = vld [vmem:[%s1 + $0x2d0] sm:$0xf]
    %v202 = vld [vmem:[%s1 + $0x2d4] sm:$0xf]
    %v203 = vld [vmem:[%s1 + $0x2d8] sm:$0xf]
    %v204 = vld [vmem:[%s1 + $0x2dc] sm:$0xf]
    %v205 = vld [vmem:[%s1 + $0x2e0] sm:$0xf]
    %v206 = vld [vmem:[%s1 + $0x2e4] sm:$0xf]
    %v207 = vld [vmem:[%s1 + $0x2e8] sm:$0xf]
    %v208 = vld [vmem:[%s1 + $0x2ec] sm:$0xf]
    %v209 = vld [vmem:[%s1 + $0x2f0] sm:$0xf]
    %v210 = vld [vmem:[%s1 + $0x2f4] sm:$0xf]
    %v211 = vld [vmem:[%s1 + $0x2f8] sm:$0xf]
    %v212 = vld [vmem:[%s1 + $0x2fc] sm:$0xf]
    %v213 = vld [vmem:[%s1 + $0x300] sm:$0xf]
    %v214 = vld [vmem:[%s1 + $0x304] sm:$0xf]
    %v215 = vld [vmem:[%s1 + $0x308] sm:$0xf]
    %v216 = vld [vmem:[%s1 + $0x30c] sm:$0xf]
    %v217 = vld [vmem:[%s1 + $0x310] sm:$0xf]
    %v218 = vld [vmem:[%s1 + $0x314] sm:$0xf]
    %v219 = vld [vmem:[%s1 + $0x318] sm:$0xf]
    %v220 = vld [vmem:[%s1 + $0x31c] sm:$0xf]
    %v221 = vld [vmem:[%s1 + $0x320] sm:$0xf]
    %v222 = vld [vmem:[%s1 + $0x324] sm:$0xf]
    %v223 = vld [vmem:[%s1 + $0x328] sm:$0xf]
    %v224 = vld [vmem:[%s1 + $0x32c] sm:$0xf]
    %v225 = vld [vmem:[%s1 + $0x330] sm:$0xf]
    %v226 = vld [vmem:[%s1 + $0x334] sm:$0xf]
    %v227 = vld [vmem:[%s1 + $0x338] sm:$0xf]
    %v228 = vld [vmem:[%s1 + $0x33c] sm:$0xf]
    %v229 = vld [vmem:[%s1 + $0x340] sm:$0xf]
    %v230 = vld [vmem:[%s1 + $0x344] sm:$0xf]
    %v231 = vld [vmem:[%s1 + $0x348] sm:$0xf]
    %v232 = vld [vmem:[%s1 + $0x34c] sm:$0xf]
    %v233 = vld [vmem:[%s1 + $0x350] sm:$0xf]
    %v234 = vld [vmem:[%s1 + $0x354] sm:$0xf]
    %v235 = vld [vmem:[%s1 + $0x358] sm:$0xf]
    %v236 = vld [vmem:[%s1 + $0x35c] sm:$0xf]
    %v237 = vld [vmem:[%s1 + $0x360] sm:$0xf]
    %v238 = vld [vmem:[%s1 + $0x364] sm:$0xf]
    %v239 = vld [vmem:[%s1 + $0x368] sm:$0xf]
    %v240 = vld [vmem:[%s1 + $0x36c] sm:$0xf]
    %v241 = vld [vmem:[%s1 + $0x370] sm:$0xf]
    %v242 = vld [vmem:[%s1 + $0x374] sm:$0xf]
    %v243 = vld [vmem:[%s1 + $0x378] sm:$0xf]
    %v244 = vld [vmem:[%s1 + $0x37c] sm:$0xf]
    %v245 = vld [vmem:[%s1 + $0x380] sm:$0xf]
    %v246 = vld [vmem:[%s1 + $0x384] sm:$0xf]
    %v247 = vld [vmem:[%s1 + $0x388] sm:$0xf]
    %v248 = vld [vmem:[%s1 + $0x38c] sm:$0xf]
    %v249 = vld [vmem:[%s1 + $0x390] sm:$0xf]
    %v250 = vld [vmem:[%s1 + $0x394] sm:$0xf]
    %v251 = vld [vmem:[%s1 + $0x398] sm:$0xf]
    %v252 = vld [vmem:[%s1 + $0x39c] sm:$0xf]
    %v253 = vld [vmem:[%s1 + $0x3a0] sm:$0xf]
    %v254 = vld [vmem:[%s1 + $0x3a4] sm:$0xf]
    %v255 = vld [vmem:[%s1 + $0x3a8] sm:$0xf]
    %v256 = vld [vmem:[%s1 + $0x3ac] sm:$0xf]
    %v257 = vld [vmem:[%s1 + $0x3b0] sm:$0xf]
    %v258 = vld [vmem:[%s1 + $0x3b4] sm:$0xf]
    %v259 = vld [vmem:[%s1 + $0x3b8] sm:$0xf]
    %v260 = vld [vmem:[%s1 + $0x3bc] sm:$0xf]
    %v261 = vld [vmem:[%s1 + $0x3c0] sm:$0xf]
    %v262 = vld [vmem:[%s1 + $0x3c4] sm:$0xf]
    %v263 = vld [vmem:[%s1 + $0x3c8] sm:$0xf]
    %v264 = vld [vmem:[%s1 + $0x3cc] sm:$0xf]
    %v265 = vld [vmem:[%s1 + $0x3d0] sm:$0xf]
    %v266 = vld [vmem:[%s1 + $0x3d4] sm:$0xf]
    %v267 = vld [vmem:[%s1 + $0x3d8] sm:$0xf]
    %v268 = vld [vmem:[%s1 + $0x3dc] sm:$0xf]
    %v269 = vld [vmem:[%s1 + $0x3e0] sm:$0xf]
    %v270 = vld [vmem:[%s1 + $0x3e4] sm:$0xf]
    %v271 = vld [vmem:[%s1 + $0x3e8] sm:$0xf]
    %v272 = vld [vmem:[%s1 + $0x3ec] sm:$0xf]
    %v273 = vld [vmem:[%s1 + $0x3f0] sm:$0xf]
    %v274 = vld [vmem:[%s1 + $0x3f4] sm:$0xf]
    %v275 = vld [vmem:[%s1 + $0x3f8] sm:$0xf]
    %v276 = vld [vmem:[%s1 + $0x3fc] sm:$0xf]
    %v277 = vld [vmem:[%s1 + $0x400] sm:$0xf]
    %v278 = vld [vmem:[%s1 + $0x404] sm:$0xf]
    %v279 = vld [vmem:[%s1 + $0x408] sm:$0xf]
    %v280 = vld [vmem:[%s1 + $0x40c] sm:$0xf]
    %v281 = vld [vmem:[%s1 + $0x410] sm:$0xf]
    %v282 = vld [vmem:[%s1 + $0x414] sm:$0xf]
    %v283 = vld [vmem:[%s1 + $0x418] sm:$0xf]
    %v284 = vld [vmem:[%s1 + $0x41c] sm:$0xf]
    %v285 = vld [vmem:[%s1 + $0x420] sm:$0xf]
    %v286 = vld [vmem:[%s1 + $0x424] sm:$0xf]
    %v287 = vld [vmem:[%s1 + $0x428] sm:$0xf]
    %v288 = vld [vmem:[%s1 + $0x42c] sm:$0xf]
    %v289 = vld [vmem:[%s1 + $0x430] sm:$0xf]
    %v290 = vld [vmem:[%s1 + $0x434] sm:$0xf]
    %v291 = vld [vmem:[%s1 + $0x438] sm:$0xf]
    %v292 = vld [vmem:[%s1 + $0x43c] sm:$0xf]
    %v293 = vld [vmem:[%s1 + $0x440] sm:$0xf]
    %v294 = vld [vmem:[%s1 + $0x444] sm:$0xf]
    %v295 = vld [vmem:[%s1 + $0x448] sm:$0xf]
    %v296 = vld [vmem:[%s1 + $0x44c] sm:$0xf]
    %v297 = vld [vmem:[%s1 + $0x450] sm:$0xf]
    %v298 = vld [vmem:[%s1 + $0x454] sm:$0xf]
    %v299 = vld [vmem:[%s1 + $0x458] sm:$0xf]
    %v300 = vld [vmem:[%s1 + $0x45c] sm:$0xf]
    %v301 = vld [vmem:[%s1 + $0x460] sm:$0xf]
    %v302 = vld [vmem:[%s1 + $0x464] sm:$0xf]
    %v303 = vld [vmem:[%s1 + $0x468] sm:$0xf]
    %v304 = vld [vmem:[%s1 + $0x46c] sm:$0xf]
    %v305 = vld [vmem:[%s1 + $0x470] sm:$0xf]
    %v306 = vld [vmem:[%s1 + $0x474] sm:$0xf]
    %v307 = vld [vmem:[%s1 + $0x478] sm:$0xf]
    %v308 = vld [vmem:[%s1 + $0x47c] sm:$0xf]
    %v309 = vld [vmem:[%s1 + $0x480] sm:$0xf]
    %v310 = vld [vmem:[%s1 + $0x484] sm:$0xf]
    %v311 = vld [vmem:[%s1 + $0x488] sm:$0xf]
    %v312 = vld [vmem:[%s1 + $0x48c] sm:$0xf]
    %v313 = vld [vmem:[%s1 + $0x490] sm:$0xf]
    %v314 = vld [vmem:[%s1 + $0x494] sm:$0xf]
    %v315 = vld [vmem:[%s1 + $0x498] sm:$0xf]
    %v316 = vld [vmem:[%s1 + $0x49c] sm:$0xf]
    %v317 = vld [vmem:[%s1 + $0x4a0] sm:$0xf]
    %v318 = vld [vmem:[%s1 + $0x4a4] sm:$0xf]
    %v319 = vld [vmem:[%s1 + $0x4a8] sm:$0xf]
    %v320 = vld [vmem:[%s1 + $0x4ac] sm:$0xf]
    %v321 = vld [vmem:[%s1 + $0x4b0] sm:$0xf]
    %v322 = vld [vmem:[%s1 + $0x4b4] sm:$0xf]
    %v323 = vld [vmem:[%s1 + $0x4b8] sm:$0xf]
    %v324 = vld [vmem:[%s1 + $0x4bc] sm:$0xf]
    %v325 = vld [vmem:[%s1 + $0x4c0] sm:$0xf]
    %v326 = vld [vmem:[%s1 + $0x4c4] sm:$0xf]
    %v327 = vld [vmem:[%s1 + $0x4c8] sm:$0xf]
    %v328 = vld [vmem:[%s1 + $0x4cc] sm:$0xf]
    %v329 = vld [vmem:[%s1 + $0x4d0] sm:$0xf]
    %v330 = vld [vmem:[%s1 + $0x4d4] sm:$0xf]
    %v331 = vld [vmem:[%s1 + $0x4d8] sm:$0xf]
    %v332 = vld [vmem:[%s1 + $0x4dc] sm:$0xf]
    %v333 = vld [vmem:[%s1 + $0x4e0] sm:$0xf]
    %v334 = vld [vmem:[%s1 + $0x4e4] sm:$0xf]
    %v335 = vld [vmem:[%s1 + $0x4e8] sm:$0xf]
    %v336 = vld [vmem:[%s1 + $0x4ec] sm:$0xf]
    %v337 = vld [vmem:[%s1 + $0x4f0] sm:$0xf]
    %v338 = vld [vmem:[%s1 + $0x4f4] sm:$0xf]
    %v339 = vld [vmem:[%s1 + $0x4f8] sm:$0xf]
    %v340 = vld [vmem:[%s1 + $0x4fc] sm:$0xf]
    %v341 = vld [vmem:[%s1 + $0x500] sm:$0xf]
    %v342 = vld [vmem:[%s1 + $0x504] sm:$0xf]
    %v343 = vld [vmem:[%s1 + $0x508] sm:$0xf]
    %v344 = vld [vmem:[%s1 + $0x50c] sm:$0xf]
    %v345 = vld [vmem:[%s1 + $0x510] sm:$0xf]
    %v346 = vld [vmem:[%s1 + $0x514] sm:$0xf]
    %v347 = vld [vmem:[%s1 + $0x518] sm:$0xf]
    %v348 = vld [vmem:[%s1 + $0x51c] sm:$0xf]
    %v349 = vld [vmem:[%s1 + $0x520] sm:$0xf]
    %v350 = vld [vmem:[%s1 + $0x524] sm:$0xf]
    %v351 = vld [vmem:[%s1 + $0x528] sm:$0xf]
    %v352 = vld [vmem:[%s1 + $0x52c] sm:$0xf]
    %v353 = vld [vmem:[%s1 + $0x530] sm:$0xf]
    %v354 = vld [vmem:[%s1 + $0x534] sm:$0xf]
    %v355 = vld [vmem:[%s1 + $0x538] sm:$0xf]
    %v356 = vld [vmem:[%s1 + $0x53c] sm:$0xf]
    %v357 = vld [vmem:[%s1 + $0x540] sm:$0xf]
    %v358 = vld [vmem:[%s1 + $0x544] sm:$0xf]
    %v359 = vld [vmem:[%s1 + $0x548] sm:$0xf]
    %v360 = vld [vmem:[%s1 + $0x54c] sm:$0xf]
    %v361 = vld [vmem:[%s1 + $0x550] sm:$0xf]
    %v362 = vld [vmem:[%s1 + $0x554] sm:$0xf]
    %v363 = vld [vmem:[%s1 + $0x558] sm:$0xf]
    %v364 = vld [vmem:[%s1 + $0x55c] sm:$0xf]
    %v365 = vld [vmem:[%s1 + $0x560] sm:$0xf]
    %v366 = vld [vmem:[%s1 + $0x564] sm:$0xf]
    %v367 = vld [vmem:[%s1 + $0x568] sm:$0xf]
    %v368 = vld [vmem:[%s1 + $0x56c] sm:$0xf]
    %v369 = vld [vmem:[%s1 + $0x570] sm:$0xf]
    %v370 = vld [vmem:[%s1 + $0x574] sm:$0xf]
    %v371 = vld [vmem:[%s1 + $0x578] sm:$0xf]
    %v372 = vld [vmem:[%s1 + $0x57c] sm:$0xf]
    %v373 = vld [vmem:[%s1 + $0x580] sm:$0xf]
    %v374 = vld [vmem:[%s1 + $0x584] sm:$0xf]
    %v375 = vld [vmem:[%s1 + $0x588] sm:$0xf]
    %v376 = vld [vmem:[%s1 + $0x58c] sm:$0xf]
    %v377 = vld [vmem:[%s1 + $0x590] sm:$0xf]
    %v378 = vld [vmem:[%s1 + $0x594] sm:$0xf]
    %v379 = vld [vmem:[%s1 + $0x598] sm:$0xf]
    %v380 = vld [vmem:[%s1 + $0x59c] sm:$0xf]
    %v381 = vld [vmem:[%s1 + $0x5a0] sm:$0xf]
    %v382 = vld [vmem:[%s1 + $0x5a4] sm:$0xf]
    %v383 = vld [vmem:[%s1 + $0x5a8] sm:$0xf]
    %v384 = vld [vmem:[%s1 + $0x5ac] sm:$0xf]
    %v385 = vld [vmem:[%s1 + $0x5b0] sm:$0xf]
    %v386 = vld [vmem:[%s1 + $0x5b4] sm:$0xf]
    %v387 = vld [vmem:[%s1 + $0x5b8] sm:$0xf]
    %v388 = vld [vmem:[%s1 + $0x5bc] sm:$0xf]
    %v389 = vld [vmem:[%s1 + $0x5c0] sm:$0xf]
    %v390 = vld [vmem:[%s1 + $0x5c4] sm:$0xf]
    %v391 = vld [vmem:[%s1 + $0x5c8] sm:$0xf]
    %v392 = vld [vmem:[%s1 + $0x5cc] sm:$0xf]
    %v393 = vld [vmem:[%s1 + $0x5d0] sm:$0xf]
    %v394 = vld [vmem:[%s1 + $0x5d4] sm:$0xf]
    %v395 = vld [vmem:[%s1 + $0x5d8] sm:$0xf]
    %v396 = vld [vmem:[%s1 + $0x5dc] sm:$0xf]
    %v397 = vld [vmem:[%s1 + $0x5e0] sm:$0xf]
    %v398 = vld [vmem:[%s1 + $0x5e4] sm:$0xf]
    %v399 = vld [vmem:[%s1 + $0x5e8] sm:$0xf]
    %v400 = vld [vmem:[%s1 + $0x5ec] sm:$0xf]
    %v401 = vld [vmem:[%s1 + $0x5f0] sm:$0xf]
    %v402 = vld [vmem:[%s1 + $0x5f4] sm:$0xf]
    %v403 = vld [vmem:[%s1 + $0x5f8] sm:$0xf]
    %v404 = vld [vmem:[%s1 + $0x5fc] sm:$0xf]
    %v405 = vld [vmem:[%s1 + $0x600] sm:$0xf]
    %v406 = vld [vmem:[%s1 + $0x604] sm:$0xf]
    %v407 = vld [vmem:[%s1 + $0x608] sm:$0xf]
    %v408 = vld [vmem:[%s1 + $0x60c] sm:$0xf]
    %v409 = vld [vmem:[%s1 + $0x610] sm:$0xf]
    %v410 = vld [vmem:[%s1 + $0x614] sm:$0xf]
    %v411 = vld [vmem:[%s1 + $0x618] sm:$0xf]
    %v412 = vld [vmem:[%s1 + $0x61c] sm:$0xf]
    %v413 = vld [vmem:[%s1 + $0x620] sm:$0xf]
    %v414 = vld [vmem:[%s1 + $0x624] sm:$0xf]
    %v415 = vld [vmem:[%s1 + $0x628] sm:$0xf]
    %v416 = vld [vmem:[%s1 + $0x62c] sm:$0xf]
    %v417 = vld [vmem:[%s1 + $0x630] sm:$0xf]
    %v418 = vld [vmem:[%s1 + $0x634] sm:$0xf]
    %v419 = vld [vmem:[%s1 + $0x638] sm:$0xf]
    %v420 = vld [vmem:[%s1 + $0x63c] sm:$0xf]
    %v421 = vld [vmem:[%s1 + $0x640] sm:$0xf]
    %v422 = vld [vmem:[%s1 + $0x644] sm:$0xf]
    %v423 = vld [vmem:[%s1 + $0x648] sm:$0xf]
    %v424 = vld [vmem:[%s1 + $0x64c] sm:$0xf]
    %v425 = vld [vmem:[%s1 + $0x650] sm:$0xf]
    %v426 = vld [vmem:[%s1 + $0x654] sm:$0xf]
    %v427 = vld [vmem:[%s1 + $0x658] sm:$0xf]
    %v428 = vld [vmem:[%s1 + $0x65c] sm:$0xf]
    %v429 = vld [vmem:[%s1 + $0x660] sm:$0xf]
    %v430 = vld [vmem:[%s1 + $0x664] sm:$0xf]
    %v431 = vld [vmem:[%s1 + $0x668] sm:$0xf]
    %v432 = vld [vmem:[%s1 + $0x66c] sm:$0xf]
    %v433 = vld [vmem:[%s1 + $0x670] sm:$0xf]
    %v434 = vld [vmem:[%s1 + $0x674] sm:$0xf]
    %v435 = vld [vmem:[%s1 + $0x678] sm:$0xf]
    %v436 = vld [vmem:[%s1 + $0x67c] sm:$0xf]
    %v437 = vld [vmem:[%s1 + $0x680] sm:$0xf]
    %v438 = vld [vmem:[%s1 + $0x684] sm:$0xf]
    %v439 = vld [vmem:[%s1 + $0x688] sm:$0xf]
    %v440 = vld [vmem:[%s1 + $0x68c] sm:$0xf]
    %v441 = vld [vmem:[%s1 + $0x690] sm:$0xf]
    %v442 = vld [vmem:[%s1 + $0x694] sm:$0xf]
    %v443 = vld [vmem:[%s1 + $0x698] sm:$0xf]
    %v444 = vld [vmem:[%s1 + $0x69c] sm:$0xf]
    %v445 = vld [vmem:[%s1 + $0x6a0] sm:$0xf]
    %v446 = vld [vmem:[%s1 + $0x6a4] sm:$0xf]
    %v447 = vld [vmem:[%s1 + $0x6a8] sm:$0xf]
    %v448 = vld [vmem:[%s1 + $0x6ac] sm:$0xf]
    %v449 = vld [vmem:[%s1 + $0x6b0] sm:$0xf]
    %v450 = vld [vmem:[%s1 + $0x6b4] sm:$0xf]
    %v451 = vld [vmem:[%s1 + $0x6b8] sm:$0xf]
    %v452 = vld [vmem:[%s1 + $0x6bc] sm:$0xf]
    %v453 = vld [vmem:[%s1 + $0x6c0] sm:$0xf]
    %v454 = vld [vmem:[%s1 + $0x6c4] sm:$0xf]
    %v455 = vld [vmem:[%s1 + $0x6c8] sm:$0xf]
    %v456 = vld [vmem:[%s1 + $0x6cc] sm:$0xf]
    %v457 = vld [vmem:[%s1 + $0x6d0] sm:$0xf]
    %v458 = vld [vmem:[%s1 + $0x6d4] sm:$0xf]
    %v459 = vld [vmem:[%s1 + $0x6d8] sm:$0xf]
    %v460 = vld [vmem:[%s1 + $0x6dc] sm:$0xf]
    %v461 = vld [vmem:[%s1 + $0x6e0] sm:$0xf]
    %v462 = vld [vmem:[%s1 + $0x6e4] sm:$0xf]
    %v463 = vld [vmem:[%s1 + $0x6e8] sm:$0xf]
    %v464 = vld [vmem:[%s1 + $0x6ec] sm:$0xf]
    %v465 = vld [vmem:[%s1 + $0x6f0] sm:$0xf]
    %v466 = vld [vmem:[%s1 + $0x6f4] sm:$0xf]
    %v467 = vld [vmem:[%s1 + $0x6f8] sm:$0xf]
    %v468 = vld [vmem:[%s1 + $0x6fc] sm:$0xf]
    %v469 = vld [vmem:[%s1 + $0x700] sm:$0xf]
    %v470 = vld [vmem:[%s1 + $0x704] sm:$0xf]
    %v471 = vld [vmem:[%s1 + $0x708] sm:$0xf]
    %v472 = vld [vmem:[%s1 + $0x70c] sm:$0xf]
    %v473 = vld [vmem:[%s1 + $0x710] sm:$0xf]
    %v474 = vld [vmem:[%s1 + $0x714] sm:$0xf]
    %v475 = vld [vmem:[%s1 + $0x718] sm:$0xf]
    %v476 = vld [vmem:[%s1 + $0x71c] sm:$0xf]
    %v477 = vld [vmem:[%s1 + $0x720] sm:$0xf]
    %v478 = vld [vmem:[%s1 + $0x724] sm:$0xf]
    %v479 = vld [vmem:[%s1 + $0x728] sm:$0xf]
    %v480 = vld [vmem:[%s1 + $0x72c] sm:$0xf]
    %v481 = vld [vmem:[%s1 + $0x730] sm:$0xf]
    %v482 = vld [vmem:[%s1 + $0x734] sm:$0xf]
    %v483 = vld [vmem:[%s1 + $0x738] sm:$0xf]
    %v484 = vld [vmem:[%s1 + $0x73c] sm:$0xf]
    %v485 = vld [vmem:[%s1 + $0x740] sm:$0xf]
    %v486 = vld [vmem:[%s1 + $0x744] sm:$0xf]
    %v487 = vld [vmem:[%s1 + $0x748] sm:$0xf]
    %v488 = vld [vmem:[%s1 + $0x74c] sm:$0xf]
    %v489 = vld [vmem:[%s1 + $0x750] sm:$0xf]
    %v490 = vld [vmem:[%s1 + $0x754] sm:$0xf]
    %v491 = vld [vmem:[%s1 + $0x758] sm:$0xf]
    %v492 = vld [vmem:[%s1 + $0x75c] sm:$0xf]
    %v493 = vld [vmem:[%s1 + $0x760] sm:$0xf]
    %v494 = vld [vmem:[%s1 + $0x764] sm:$0xf]
    %v495 = vld [vmem:[%s1 + $0x768] sm:$0xf]
    %v496 = vld [vmem:[%s1 + $0x76c] sm:$0xf]
    %v497 = vld [vmem:[%s1 + $0x770] sm:$0xf]
    %v498 = vld [vmem:[%s1 + $0x774] sm:$0xf]
    %v499 = vld [vmem:[%s1 + $0x778] sm:$0xf]
    %v500 = vld [vmem:[%s1 + $0x77c] sm:$0xf]
    %v501 = vld [vmem:[%s1 + $0x780] sm:$0xf]
    %v502 = vld [vmem:[%s1 + $0x784] sm:$0xf]
    %v503 = vld [vmem:[%s1 + $0x788] sm:$0xf]
    %v504 = vld [vmem:[%s1 + $0x78c] sm:$0xf]
    %v505 = vld [vmem:[%s1 + $0x790] sm:$0xf]
    %v506 = vld [vmem:[%s1 + $0x794] sm:$0xf]
    %v507 = vld [vmem:[%s1 + $0x798] sm:$0xf]
    %v508 = vld [vmem:[%s1 + $0x79c] sm:$0xf]
    %v509 = vld [vmem:[%s1 + $0x7a0] sm:$0xf]
    %v510 = vld [vmem:[%s1 + $0x7a4] sm:$0xf]
    %v511 = vld [vmem:[%s1 + $0x7a8] sm:$0xf]
    %v512 = vld [vmem:[%s1 + $0x7ac] sm:$0xf]
    %v513 = vld [vmem:[%s1 + $0x7b0] sm:$0xf]
    %v514 = vld [vmem:[%s1 + $0x7b4] sm:$0xf]
    %v515 = vld [vmem:[%s1 + $0x7b8] sm:$0xf]
    %v516 = vld [vmem:[%s1 + $0x7bc] sm:$0xf]
    %v517 = vld [vmem:[%s1 + $0x7c0] sm:$0xf]
    %v518 = vld [vmem:[%s1 + $0x7c4] sm:$0xf]
    %v519 = vld [vmem:[%s1 + $0x7c8] sm:$0xf]
    %v520 = vld [vmem:[%s1 + $0x7cc] sm:$0xf]
    %v521 = vld [vmem:[%s1 + $0x7d0] sm:$0xf]
    %v522 = vld [vmem:[%s1 + $0x7d4] sm:$0xf]
    %v523 = vld [vmem:[%s1 + $0x7d8] sm:$0xf]
    %v524 = vld [vmem:[%s1 + $0x7dc] sm:$0xf]
    %v525 = vld [vmem:[%s1 + $0x7e0] sm:$0xf]
    %v526 = vld [vmem:[%s1 + $0x7e4] sm:$0xf]
    %v527 = vld [vmem:[%s1 + $0x7e8] sm:$0xf]
    %v528 = vld [vmem:[%s1 + $0x7ec] sm:$0xf]
    %v529 = vld [vmem:[%s1 + $0x7f0] sm:$0xf]
    %v530 = vld [vmem:[%s1 + $0x7f4] sm:$0xf]
    %v531 = vld [vmem:[%s1 + $0x7f8] sm:$0xf]
    %v532 = vld [vmem:[%s1 + $0x7fc] sm:$0xf]
    %v533 = vld [vmem:[#allocation2] sm:$0x1]
    %535 = vset.pattern.permute.xlu0 0
    %536 = vperm.xlu0 %535, %v533
    %v537 = vpop.permute.xlu0 %536
    %v539 = vperm.slane %v537, 0
    %541 = vst [vmem:[#allocation1] ss:$9 sm:$0xff] %v17
    %v542 = vld [vmem:[#allocation1] sm:$0xff]
    %v543 = vld [vmem:[#allocation1 + $0x9] sm:$0xff]
    %v544 = vld [vmem:[#allocation1 + $0x12] sm:$0xff]
    %v545 = vld [vmem:[#allocation1 + $0x1b] sm:$0xff]
    %v546 = vld [vmem:[#allocation1 + $0x24] sm:$0xff]
    %v547 = vld [vmem:[#allocation1 + $0x2d] sm:$0xff]
    %v548 = vld [vmem:[#allocation1 + $0x36] sm:$0xff]
    %v549 = vld [vmem:[#allocation1 + $0x3f] sm:$0xff]
    %551 = vst [vmem:[#allocation1] ss:$9 sm:$0xff] %v18
    %v552 = vld [vmem:[#allocation1] sm:$0xff]
    %v553 = vld [vmem:[#allocation1 + $0x9] sm:$0xff]
    %v554 = vld [vmem:[#allocation1 + $0x12] sm:$0xff]
    %v555 = vld [vmem:[#allocation1 + $0x1b] sm:$0xff]
    %v556 = vld [vmem:[#allocation1 + $0x24] sm:$0xff]
    %v557 = vld [vmem:[#allocation1 + $0x2d] sm:$0xff]
    %v558 = vld [vmem:[#allocation1 + $0x36] sm:$0xff]
    %v559 = vld [vmem:[#allocation1 + $0x3f] sm:$0xff]
    %561 = vst [vmem:[#allocation1] ss:$9 sm:$0xff] %v19
    %v562 = vld [vmem:[#allocation1] sm:$0xff]
    %v563 = vld [vmem:[#allocation1 + $0x9] sm:$0xff]
    %v564 = vld [vmem:[#allocation1 + $0x12] sm:$0xff]
    %v565 = vld [vmem:[#allocation1 + $0x1b] sm:$0xff]
    %v566 = vld [vmem:[#allocation1 + $0x24] sm:$0xff]
    %v567 = vld [vmem:[#allocation1 + $0x2d] sm:$0xff]
    %v568 = vld [vmem:[#allocation1 + $0x36] sm:$0xff]
    %v569 = vld [vmem:[#allocation1 + $0x3f] sm:$0xff]
    %571 = vst [vmem:[#allocation1] ss:$9 sm:$0xff] %v20
    %v572 = vld [vmem:[#allocation1] sm:$0xff]
    %v573 = vld [vmem:[#allocation1 + $0x9] sm:$0xff]
    %v574 = vld [vmem:[#allocation1 + $0x12] sm:$0xff]
    %v575 = vld [vmem:[#allocation1 + $0x1b] sm:$0xff]
    %v576 = vld [vmem:[#allocation1 + $0x24] sm:$0xff]
    %v577 = vld [vmem:[#allocation1 + $0x2d] sm:$0xff]
    %v578 = vld [vmem:[#allocation1 + $0x36] sm:$0xff]
    %v579 = vld [vmem:[#allocation1 + $0x3f] sm:$0xff]
    %v1124 = vunpack.c.l.b16 %v21
    %v1125 = vunpack.c.l.b16 %v22
    %v1126 = vunpack.c.l.b16 %v23
    %v1127 = vunpack.c.l.b16 %v24
    %v1128 = vunpack.c.l.b16 %v25
    %v1129 = vunpack.c.l.b16 %v26
    %v1130 = vunpack.c.l.b16 %v27
    %v1131 = vunpack.c.l.b16 %v28
    %v1132 = vunpack.c.l.b16 %v29
    %v1133 = vunpack.c.l.b16 %v30
    %v1134 = vunpack.c.l.b16 %v31
    %v1135 = vunpack.c.l.b16 %v32
    %v1136 = vunpack.c.l.b16 %v33
    %v1137 = vunpack.c.l.b16 %v34
    %v1138 = vunpack.c.l.b16 %v35
    %v1139 = vunpack.c.l.b16 %v36
    %v1140 = vunpack.c.l.b16 %v37
    %v1141 = vunpack.c.l.b16 %v38
    %v1142 = vunpack.c.l.b16 %v39
    %v1143 = vunpack.c.l.b16 %v40
    %v1144 = vunpack.c.l.b16 %v41
    %v1145 = vunpack.c.l.b16 %v42
    %v1146 = vunpack.c.l.b16 %v43
    %v1147 = vunpack.c.l.b16 %v44
    %v1148 = vunpack.c.l.b16 %v45
    %v1149 = vunpack.c.l.b16 %v46
    %v1150 = vunpack.c.l.b16 %v47
    %v1151 = vunpack.c.l.b16 %v48
    %v1152 = vunpack.c.l.b16 %v49
    %v1153 = vunpack.c.l.b16 %v50
    %v1154 = vunpack.c.l.b16 %v51
    %v1155 = vunpack.c.l.b16 %v52
    %v1156 = vunpack.c.l.b16 %v53
    %v1157 = vunpack.c.l.b16 %v54
    %v1158 = vunpack.c.l.b16 %v55
    %v1159 = vunpack.c.l.b16 %v56
    %v1160 = vunpack.c.l.b16 %v57
    %v1161 = vunpack.c.l.b16 %v58
    %v1162 = vunpack.c.l.b16 %v59
    %v1163 = vunpack.c.l.b16 %v60
    %v1164 = vunpack.c.l.b16 %v61
    %v1165 = vunpack.c.l.b16 %v62
    %v1166 = vunpack.c.l.b16 %v63
    %v1167 = vunpack.c.l.b16 %v64
    %v1168 = vunpack.c.l.b16 %v65
    %v1169 = vunpack.c.l.b16 %v66
    %v1170 = vunpack.c.l.b16 %v67
    %v1171 = vunpack.c.l.b16 %v68
    %v1172 = vunpack.c.l.b16 %v69
    %v1173 = vunpack.c.l.b16 %v70
    %v1174 = vunpack.c.l.b16 %v71
    %v1175 = vunpack.c.l.b16 %v72
    %v1176 = vunpack.c.l.b16 %v73
    %v1177 = vunpack.c.l.b16 %v74
    %v1178 = vunpack.c.l.b16 %v75
    %v1179 = vunpack.c.l.b16 %v76
    %v1180 = vunpack.c.l.b16 %v77
    %v1181 = vunpack.c.l.b16 %v78
    %v1182 = vunpack.c.l.b16 %v79
    %v1183 = vunpack.c.l.b16 %v80
    %v1184 = vunpack.c.l.b16 %v81
    %v1185 = vunpack.c.l.b16 %v82
    %v1186 = vunpack.c.l.b16 %v83
    %v1187 = vunpack.c.l.b16 %v84
    %v1188 = vunpack.c.l.b16 %v85
    %v1189 = vunpack.c.l.b16 %v86
    %v1190 = vunpack.c.l.b16 %v87
    %v1191 = vunpack.c.l.b16 %v88
    %v1192 = vunpack.c.l.b16 %v89
    %v1193 = vunpack.c.l.b16 %v90
    %v1194 = vunpack.c.l.b16 %v91
    %v1195 = vunpack.c.l.b16 %v92
    %v1196 = vunpack.c.l.b16 %v93
    %v1197 = vunpack.c.l.b16 %v94
    %v1198 = vunpack.c.l.b16 %v95
    %v1199 = vunpack.c.l.b16 %v96
    %v1200 = vunpack.c.l.b16 %v97
    %v1201 = vunpack.c.l.b16 %v98
    %v1202 = vunpack.c.l.b16 %v99
    %v1203 = vunpack.c.l.b16 %v100
    %v1204 = vunpack.c.l.b16 %v101
    %v1205 = vunpack.c.l.b16 %v102
    %v1206 = vunpack.c.l.b16 %v103
    %v1207 = vunpack.c.l.b16 %v104
    %v1208 = vunpack.c.l.b16 %v105
    %v1209 = vunpack.c.l.b16 %v106
    %v1210 = vunpack.c.l.b16 %v107
    %v1211 = vunpack.c.l.b16 %v108
    %v1212 = vunpack.c.l.b16 %v109
    %v1213 = vunpack.c.l.b16 %v110
    %v1214 = vunpack.c.l.b16 %v111
    %v1215 = vunpack.c.l.b16 %v112
    %v1216 = vunpack.c.l.b16 %v113
    %v1217 = vunpack.c.l.b16 %v114
    %v1218 = vunpack.c.l.b16 %v115
    %v1219 = vunpack.c.l.b16 %v116
    %v1220 = vunpack.c.l.b16 %v117
    %v1221 = vunpack.c.l.b16 %v118
    %v1222 = vunpack.c.l.b16 %v119
    %v1223 = vunpack.c.l.b16 %v120
    %v1224 = vunpack.c.l.b16 %v121
    %v1225 = vunpack.c.l.b16 %v122
    %v1226 = vunpack.c.l.b16 %v123
    %v1227 = vunpack.c.l.b16 %v124
    %v1228 = vunpack.c.l.b16 %v125
    %v1229 = vunpack.c.l.b16 %v126
    %v1230 = vunpack.c.l.b16 %v127
    %v1231 = vunpack.c.l.b16 %v128
    %v1232 = vunpack.c.l.b16 %v129
    %v1233 = vunpack.c.l.b16 %v130
    %v1234 = vunpack.c.l.b16 %v131
    %v1235 = vunpack.c.l.b16 %v132
    %v1236 = vunpack.c.l.b16 %v133
    %v1237 = vunpack.c.l.b16 %v134
    %v1238 = vunpack.c.l.b16 %v135
    %v1239 = vunpack.c.l.b16 %v136
    %v1240 = vunpack.c.l.b16 %v137
    %v1241 = vunpack.c.l.b16 %v138
    %v1242 = vunpack.c.l.b16 %v139
    %v1243 = vunpack.c.l.b16 %v140
    %v1244 = vunpack.c.l.b16 %v141
    %v1245 = vunpack.c.l.b16 %v142
    %v1246 = vunpack.c.l.b16 %v143
    %v1247 = vunpack.c.l.b16 %v144
    %v1248 = vunpack.c.l.b16 %v145
    %v1249 = vunpack.c.l.b16 %v146
    %v1250 = vunpack.c.l.b16 %v147
    %v1251 = vunpack.c.l.b16 %v148
    %v1252 = vunpack.c.l.b16 %v149
    %v1253 = vunpack.c.l.b16 %v150
    %v1254 = vunpack.c.l.b16 %v151
    %v1255 = vunpack.c.l.b16 %v152
    %v1256 = vunpack.c.l.b16 %v153
    %v1257 = vunpack.c.l.b16 %v154
    %v1258 = vunpack.c.l.b16 %v155
    %v1259 = vunpack.c.l.b16 %v156
    %v1260 = vunpack.c.l.b16 %v157
    %v1261 = vunpack.c.l.b16 %v158
    %v1262 = vunpack.c.l.b16 %v159
    %v1263 = vunpack.c.l.b16 %v160
    %v1264 = vunpack.c.l.b16 %v161
    %v1265 = vunpack.c.l.b16 %v162
    %v1266 = vunpack.c.l.b16 %v163
    %v1267 = vunpack.c.l.b16 %v164
    %v1268 = vunpack.c.l.b16 %v165
    %v1269 = vunpack.c.l.b16 %v166
    %v1270 = vunpack.c.l.b16 %v167
    %v1271 = vunpack.c.l.b16 %v168
    %v1272 = vunpack.c.l.b16 %v169
    %v1273 = vunpack.c.l.b16 %v170
    %v1274 = vunpack.c.l.b16 %v171
    %v1275 = vunpack.c.l.b16 %v172
    %v1276 = vunpack.c.l.b16 %v173
    %v1277 = vunpack.c.l.b16 %v174
    %v1278 = vunpack.c.l.b16 %v175
    %v1279 = vunpack.c.l.b16 %v176
    %v1280 = vunpack.c.l.b16 %v177
    %v1281 = vunpack.c.l.b16 %v178
    %v1282 = vunpack.c.l.b16 %v179
    %v1283 = vunpack.c.l.b16 %v180
    %v1284 = vunpack.c.l.b16 %v181
    %v1285 = vunpack.c.l.b16 %v182
    %v1286 = vunpack.c.l.b16 %v183
    %v1287 = vunpack.c.l.b16 %v184
    %v1288 = vunpack.c.l.b16 %v185
    %v1289 = vunpack.c.l.b16 %v186
    %v1290 = vunpack.c.l.b16 %v187
    %v1291 = vunpack.c.l.b16 %v188
    %v1292 = vunpack.c.l.b16 %v189
    %v1293 = vunpack.c.l.b16 %v190
    %v1294 = vunpack.c.l.b16 %v191
    %v1295 = vunpack.c.l.b16 %v192
    %v1296 = vunpack.c.l.b16 %v193
    %v1297 = vunpack.c.l.b16 %v194
    %v1298 = vunpack.c.l.b16 %v195
    %v1299 = vunpack.c.l.b16 %v196
    %v1300 = vunpack.c.l.b16 %v197
    %v1301 = vunpack.c.l.b16 %v198
    %v1302 = vunpack.c.l.b16 %v199
    %v1303 = vunpack.c.l.b16 %v200
    %v1304 = vunpack.c.l.b16 %v201
    %v1305 = vunpack.c.l.b16 %v202
    %v1306 = vunpack.c.l.b16 %v203
    %v1307 = vunpack.c.l.b16 %v204
    %v1308 = vunpack.c.l.b16 %v205
    %v1309 = vunpack.c.l.b16 %v206
    %v1310 = vunpack.c.l.b16 %v207
    %v1311 = vunpack.c.l.b16 %v208
    %v1312 = vunpack.c.l.b16 %v209
    %v1313 = vunpack.c.l.b16 %v210
    %v1314 = vunpack.c.l.b16 %v211
    %v1315 = vunpack.c.l.b16 %v212
    %v1316 = vunpack.c.l.b16 %v213
    %v1317 = vunpack.c.l.b16 %v214
    %v1318 = vunpack.c.l.b16 %v215
    %v1319 = vunpack.c.l.b16 %v216
    %v1320 = vunpack.c.l.b16 %v217
    %v1321 = vunpack.c.l.b16 %v218
    %v1322 = vunpack.c.l.b16 %v219
    %v1323 = vunpack.c.l.b16 %v220
    %v1324 = vunpack.c.l.b16 %v221
    %v1325 = vunpack.c.l.b16 %v222
    %v1326 = vunpack.c.l.b16 %v223
    %v1327 = vunpack.c.l.b16 %v224
    %v1328 = vunpack.c.l.b16 %v225
    %v1329 = vunpack.c.l.b16 %v226
    %v1330 = vunpack.c.l.b16 %v227
    %v1331 = vunpack.c.l.b16 %v228
    %v1332 = vunpack.c.l.b16 %v229
    %v1333 = vunpack.c.l.b16 %v230
    %v1334 = vunpack.c.l.b16 %v231
    %v1335 = vunpack.c.l.b16 %v232
    %v1336 = vunpack.c.l.b16 %v233
    %v1337 = vunpack.c.l.b16 %v234
    %v1338 = vunpack.c.l.b16 %v235
    %v1339 = vunpack.c.l.b16 %v236
    %v1340 = vunpack.c.l.b16 %v237
    %v1341 = vunpack.c.l.b16 %v238
    %v1342 = vunpack.c.l.b16 %v239
    %v1343 = vunpack.c.l.b16 %v240
    %v1344 = vunpack.c.l.b16 %v241
    %v1345 = vunpack.c.l.b16 %v242
    %v1346 = vunpack.c.l.b16 %v243
    %v1347 = vunpack.c.l.b16 %v244
    %v1348 = vunpack.c.l.b16 %v245
    %v1349 = vunpack.c.l.b16 %v246
    %v1350 = vunpack.c.l.b16 %v247
    %v1351 = vunpack.c.l.b16 %v248
    %v1352 = vunpack.c.l.b16 %v249
    %v1353 = vunpack.c.l.b16 %v250
    %v1354 = vunpack.c.l.b16 %v251
    %v1355 = vunpack.c.l.b16 %v252
    %v1356 = vunpack.c.l.b16 %v253
    %v1357 = vunpack.c.l.b16 %v254
    %v1358 = vunpack.c.l.b16 %v255
    %v1359 = vunpack.c.l.b16 %v256
    %v1360 = vunpack.c.l.b16 %v257
    %v1361 = vunpack.c.l.b16 %v258
    %v1362 = vunpack.c.l.b16 %v259
    %v1363 = vunpack.c.l.b16 %v260
    %v1364 = vunpack.c.l.b16 %v261
    %v1365 = vunpack.c.l.b16 %v262
    %v1366 = vunpack.c.l.b16 %v263
    %v1367 = vunpack.c.l.b16 %v264
    %v1368 = vunpack.c.l.b16 %v265
    %v1369 = vunpack.c.l.b16 %v266
    %v1370 = vunpack.c.l.b16 %v267
    %v1371 = vunpack.c.l.b16 %v268
    %v1372 = vunpack.c.l.b16 %v269
    %v1373 = vunpack.c.l.b16 %v270
    %v1374 = vunpack.c.l.b16 %v271
    %v1375 = vunpack.c.l.b16 %v272
    %v1376 = vunpack.c.l.b16 %v273
    %v1377 = vunpack.c.l.b16 %v274
    %v1378 = vunpack.c.l.b16 %v275
    %v1379 = vunpack.c.l.b16 %v276
    %v1380 = vunpack.c.l.b16 %v277
    %v1381 = vunpack.c.l.b16 %v278
    %v1382 = vunpack.c.l.b16 %v279
    %v1383 = vunpack.c.l.b16 %v280
    %v1384 = vunpack.c.l.b16 %v281
    %v1385 = vunpack.c.l.b16 %v282
    %v1386 = vunpack.c.l.b16 %v283
    %v1387 = vunpack.c.l.b16 %v284
    %v1388 = vunpack.c.l.b16 %v285
    %v1389 = vunpack.c.l.b16 %v286
    %v1390 = vunpack.c.l.b16 %v287
    %v1391 = vunpack.c.l.b16 %v288
    %v1392 = vunpack.c.l.b16 %v289
    %v1393 = vunpack.c.l.b16 %v290
    %v1394 = vunpack.c.l.b16 %v291
    %v1395 = vunpack.c.l.b16 %v292
    %v1396 = vunpack.c.l.b16 %v293
    %v1397 = vunpack.c.l.b16 %v294
    %v1398 = vunpack.c.l.b16 %v295
    %v1399 = vunpack.c.l.b16 %v296
    %v1400 = vunpack.c.l.b16 %v297
    %v1401 = vunpack.c.l.b16 %v298
    %v1402 = vunpack.c.l.b16 %v299
    %v1403 = vunpack.c.l.b16 %v300
    %v1404 = vunpack.c.l.b16 %v301
    %v1405 = vunpack.c.l.b16 %v302
    %v1406 = vunpack.c.l.b16 %v303
    %v1407 = vunpack.c.l.b16 %v304
    %v1408 = vunpack.c.l.b16 %v305
    %v1409 = vunpack.c.l.b16 %v306
    %v1410 = vunpack.c.l.b16 %v307
    %v1411 = vunpack.c.l.b16 %v308
    %v1412 = vunpack.c.l.b16 %v309
    %v1413 = vunpack.c.l.b16 %v310
    %v1414 = vunpack.c.l.b16 %v311
    %v1415 = vunpack.c.l.b16 %v312
    %v1416 = vunpack.c.l.b16 %v313
    %v1417 = vunpack.c.l.b16 %v314
    %v1418 = vunpack.c.l.b16 %v315
    %v1419 = vunpack.c.l.b16 %v316
    %v1420 = vunpack.c.l.b16 %v317
    %v1421 = vunpack.c.l.b16 %v318
    %v1422 = vunpack.c.l.b16 %v319
    %v1423 = vunpack.c.l.b16 %v320
    %v1424 = vunpack.c.l.b16 %v321
    %v1425 = vunpack.c.l.b16 %v322
    %v1426 = vunpack.c.l.b16 %v323
    %v1427 = vunpack.c.l.b16 %v324
    %v1428 = vunpack.c.l.b16 %v325
    %v1429 = vunpack.c.l.b16 %v326
    %v1430 = vunpack.c.l.b16 %v327
    %v1431 = vunpack.c.l.b16 %v328
    %v1432 = vunpack.c.l.b16 %v329
    %v1433 = vunpack.c.l.b16 %v330
    %v1434 = vunpack.c.l.b16 %v331
    %v1435 = vunpack.c.l.b16 %v332
    %v1436 = vunpack.c.l.b16 %v333
    %v1437 = vunpack.c.l.b16 %v334
    %v1438 = vunpack.c.l.b16 %v335
    %v1439 = vunpack.c.l.b16 %v336
    %v1440 = vunpack.c.l.b16 %v337
    %v1441 = vunpack.c.l.b16 %v338
    %v1442 = vunpack.c.l.b16 %v339
    %v1443 = vunpack.c.l.b16 %v340
    %v1444 = vunpack.c.l.b16 %v341
    %v1445 = vunpack.c.l.b16 %v342
    %v1446 = vunpack.c.l.b16 %v343
    %v1447 = vunpack.c.l.b16 %v344
    %v1448 = vunpack.c.l.b16 %v345
    %v1449 = vunpack.c.l.b16 %v346
    %v1450 = vunpack.c.l.b16 %v347
    %v1451 = vunpack.c.l.b16 %v348
    %v1452 = vunpack.c.l.b16 %v349
    %v1453 = vunpack.c.l.b16 %v350
    %v1454 = vunpack.c.l.b16 %v351
    %v1455 = vunpack.c.l.b16 %v352
    %v1456 = vunpack.c.l.b16 %v353
    %v1457 = vunpack.c.l.b16 %v354
    %v1458 = vunpack.c.l.b16 %v355
    %v1459 = vunpack.c.l.b16 %v356
    %v1460 = vunpack.c.l.b16 %v357
    %v1461 = vunpack.c.l.b16 %v358
    %v1462 = vunpack.c.l.b16 %v359
    %v1463 = vunpack.c.l.b16 %v360
    %v1464 = vunpack.c.l.b16 %v361
    %v1465 = vunpack.c.l.b16 %v362
    %v1466 = vunpack.c.l.b16 %v363
    %v1467 = vunpack.c.l.b16 %v364
    %v1468 = vunpack.c.l.b16 %v365
    %v1469 = vunpack.c.l.b16 %v366
    %v1470 = vunpack.c.l.b16 %v367
    %v1471 = vunpack.c.l.b16 %v368
    %v1472 = vunpack.c.l.b16 %v369
    %v1473 = vunpack.c.l.b16 %v370
    %v1474 = vunpack.c.l.b16 %v371
    %v1475 = vunpack.c.l.b16 %v372
    %v1476 = vunpack.c.l.b16 %v373
    %v1477 = vunpack.c.l.b16 %v374
    %v1478 = vunpack.c.l.b16 %v375
    %v1479 = vunpack.c.l.b16 %v376
    %v1480 = vunpack.c.l.b16 %v377
    %v1481 = vunpack.c.l.b16 %v378
    %v1482 = vunpack.c.l.b16 %v379
    %v1483 = vunpack.c.l.b16 %v380
    %v1484 = vunpack.c.l.b16 %v381
    %v1485 = vunpack.c.l.b16 %v382
    %v1486 = vunpack.c.l.b16 %v383
    %v1487 = vunpack.c.l.b16 %v384
    %v1488 = vunpack.c.l.b16 %v385
    %v1489 = vunpack.c.l.b16 %v386
    %v1490 = vunpack.c.l.b16 %v387
    %v1491 = vunpack.c.l.b16 %v388
    %v1492 = vunpack.c.l.b16 %v389
    %v1493 = vunpack.c.l.b16 %v390
    %v1494 = vunpack.c.l.b16 %v391
    %v1495 = vunpack.c.l.b16 %v392
    %v1496 = vunpack.c.l.b16 %v393
    %v1497 = vunpack.c.l.b16 %v394
    %v1498 = vunpack.c.l.b16 %v395
    %v1499 = vunpack.c.l.b16 %v396
    %v1500 = vunpack.c.l.b16 %v397
    %v1501 = vunpack.c.l.b16 %v398
    %v1502 = vunpack.c.l.b16 %v399
    %v1503 = vunpack.c.l.b16 %v400
    %v1504 = vunpack.c.l.b16 %v401
    %v1505 = vunpack.c.l.b16 %v402
    %v1506 = vunpack.c.l.b16 %v403
    %v1507 = vunpack.c.l.b16 %v404
    %v1508 = vunpack.c.l.b16 %v405
    %v1509 = vunpack.c.l.b16 %v406
    %v1510 = vunpack.c.l.b16 %v407
    %v1511 = vunpack.c.l.b16 %v408
    %v1512 = vunpack.c.l.b16 %v409
    %v1513 = vunpack.c.l.b16 %v410
    %v1514 = vunpack.c.l.b16 %v411
    %v1515 = vunpack.c.l.b16 %v412
    %v1516 = vunpack.c.l.b16 %v413
    %v1517 = vunpack.c.l.b16 %v414
    %v1518 = vunpack.c.l.b16 %v415
    %v1519 = vunpack.c.l.b16 %v416
    %v1520 = vunpack.c.l.b16 %v417
    %v1521 = vunpack.c.l.b16 %v418
    %v1522 = vunpack.c.l.b16 %v419
    %v1523 = vunpack.c.l.b16 %v420
    %v1524 = vunpack.c.l.b16 %v421
    %v1525 = vunpack.c.l.b16 %v422
    %v1526 = vunpack.c.l.b16 %v423
    %v1527 = vunpack.c.l.b16 %v424
    %v1528 = vunpack.c.l.b16 %v425
    %v1529 = vunpack.c.l.b16 %v426
    %v1530 = vunpack.c.l.b16 %v427
    %v1531 = vunpack.c.l.b16 %v428
    %v1532 = vunpack.c.l.b16 %v429
    %v1533 = vunpack.c.l.b16 %v430
    %v1534 = vunpack.c.l.b16 %v431
    %v1535 = vunpack.c.l.b16 %v432
    %v1536 = vunpack.c.l.b16 %v433
    %v1537 = vunpack.c.l.b16 %v434
    %v1538 = vunpack.c.l.b16 %v435
    %v1539 = vunpack.c.l.b16 %v436
    %v1540 = vunpack.c.l.b16 %v437
    %v1541 = vunpack.c.l.b16 %v438
    %v1542 = vunpack.c.l.b16 %v439
    %v1543 = vunpack.c.l.b16 %v440
    %v1544 = vunpack.c.l.b16 %v441
    %v1545 = vunpack.c.l.b16 %v442
    %v1546 = vunpack.c.l.b16 %v443
    %v1547 = vunpack.c.l.b16 %v444
    %v1548 = vunpack.c.l.b16 %v445
    %v1549 = vunpack.c.l.b16 %v446
    %v1550 = vunpack.c.l.b16 %v447
    %v1551 = vunpack.c.l.b16 %v448
    %v1552 = vunpack.c.l.b16 %v449
    %v1553 = vunpack.c.l.b16 %v450
    %v1554 = vunpack.c.l.b16 %v451
    %v1555 = vunpack.c.l.b16 %v452
    %v1556 = vunpack.c.l.b16 %v453
    %v1557 = vunpack.c.l.b16 %v454
    %v1558 = vunpack.c.l.b16 %v455
    %v1559 = vunpack.c.l.b16 %v456
    %v1560 = vunpack.c.l.b16 %v457
    %v1561 = vunpack.c.l.b16 %v458
    %v1562 = vunpack.c.l.b16 %v459
    %v1563 = vunpack.c.l.b16 %v460
    %v1564 = vunpack.c.l.b16 %v461
    %v1565 = vunpack.c.l.b16 %v462
    %v1566 = vunpack.c.l.b16 %v463
    %v1567 = vunpack.c.l.b16 %v464
    %v1568 = vunpack.c.l.b16 %v465
    %v1569 = vunpack.c.l.b16 %v466
    %v1570 = vunpack.c.l.b16 %v467
    %v1571 = vunpack.c.l.b16 %v468
    %v1572 = vunpack.c.l.b16 %v469
    %v1573 = vunpack.c.l.b16 %v470
    %v1574 = vunpack.c.l.b16 %v471
    %v1575 = vunpack.c.l.b16 %v472
    %v1576 = vunpack.c.l.b16 %v473
    %v1577 = vunpack.c.l.b16 %v474
    %v1578 = vunpack.c.l.b16 %v475
    %v1579 = vunpack.c.l.b16 %v476
    %v1580 = vunpack.c.l.b16 %v477
    %v1581 = vunpack.c.l.b16 %v478
    %v1582 = vunpack.c.l.b16 %v479
    %v1583 = vunpack.c.l.b16 %v480
    %v1584 = vunpack.c.l.b16 %v481
    %v1585 = vunpack.c.l.b16 %v482
    %v1586 = vunpack.c.l.b16 %v483
    %v1587 = vunpack.c.l.b16 %v484
    %v1588 = vunpack.c.l.b16 %v485
    %v1589 = vunpack.c.l.b16 %v486
    %v1590 = vunpack.c.l.b16 %v487
    %v1591 = vunpack.c.l.b16 %v488
    %v1592 = vunpack.c.l.b16 %v489
    %v1593 = vunpack.c.l.b16 %v490
    %v1594 = vunpack.c.l.b16 %v491
    %v1595 = vunpack.c.l.b16 %v492
    %v1596 = vunpack.c.l.b16 %v493
    %v1597 = vunpack.c.l.b16 %v494
    %v1598 = vunpack.c.l.b16 %v495
    %v1599 = vunpack.c.l.b16 %v496
    %v1600 = vunpack.c.l.b16 %v497
    %v1601 = vunpack.c.l.b16 %v498
    %v1602 = vunpack.c.l.b16 %v499
    %v1603 = vunpack.c.l.b16 %v500
    %v1604 = vunpack.c.l.b16 %v501
    %v1605 = vunpack.c.l.b16 %v502
    %v1606 = vunpack.c.l.b16 %v503
    %v1607 = vunpack.c.l.b16 %v504
    %v1608 = vunpack.c.l.b16 %v505
    %v1609 = vunpack.c.l.b16 %v506
    %v1610 = vunpack.c.l.b16 %v507
    %v1611 = vunpack.c.l.b16 %v508
    %v1612 = vunpack.c.l.b16 %v509
    %v1613 = vunpack.c.l.b16 %v510
    %v1614 = vunpack.c.l.b16 %v511
    %v1615 = vunpack.c.l.b16 %v512
    %v1616 = vunpack.c.l.b16 %v513
    %v1617 = vunpack.c.l.b16 %v514
    %v1618 = vunpack.c.l.b16 %v515
    %v1619 = vunpack.c.l.b16 %v516
    %v1620 = vunpack.c.l.b16 %v517
    %v1621 = vunpack.c.l.b16 %v518
    %v1622 = vunpack.c.l.b16 %v519
    %v1623 = vunpack.c.l.b16 %v520
    %v1624 = vunpack.c.l.b16 %v521
    %v1625 = vunpack.c.l.b16 %v522
    %v1626 = vunpack.c.l.b16 %v523
    %v1627 = vunpack.c.l.b16 %v524
    %v1628 = vunpack.c.l.b16 %v525
    %v1629 = vunpack.c.l.b16 %v526
    %v1630 = vunpack.c.l.b16 %v527
    %v1631 = vunpack.c.l.b16 %v528
    %v1632 = vunpack.c.l.b16 %v529
    %v1633 = vunpack.c.l.b16 %v530
    %v1634 = vunpack.c.l.b16 %v531
    %v1635 = vunpack.c.l.b16 %v532
    %v1636 = vpack.c.b16 %v1125, %v1124
    %v1637 = vpack.c.b16 %v1127, %v1126
    %v1638 = vpack.c.b16 %v1129, %v1128
    %v1639 = vpack.c.b16 %v1131, %v1130
    %v1640 = vpack.c.b16 %v1133, %v1132
    %v1641 = vpack.c.b16 %v1135, %v1134
    %v1642 = vpack.c.b16 %v1137, %v1136
    %v1643 = vpack.c.b16 %v1139, %v1138
    %v1644 = vpack.c.b16 %v1141, %v1140
    %v1645 = vpack.c.b16 %v1143, %v1142
    %v1646 = vpack.c.b16 %v1145, %v1144
    %v1647 = vpack.c.b16 %v1147, %v1146
    %v1648 = vpack.c.b16 %v1149, %v1148
    %v1649 = vpack.c.b16 %v1151, %v1150
    %v1650 = vpack.c.b16 %v1153, %v1152
    %v1651 = vpack.c.b16 %v1155, %v1154
    %v1652 = vpack.c.b16 %v1157, %v1156
    %v1653 = vpack.c.b16 %v1159, %v1158
    %v1654 = vpack.c.b16 %v1161, %v1160
    %v1655 = vpack.c.b16 %v1163, %v1162
    %v1656 = vpack.c.b16 %v1165, %v1164
    %v1657 = vpack.c.b16 %v1167, %v1166
    %v1658 = vpack.c.b16 %v1169, %v1168
    %v1659 = vpack.c.b16 %v1171, %v1170
    %v1660 = vpack.c.b16 %v1173, %v1172
    %v1661 = vpack.c.b16 %v1175, %v1174
    %v1662 = vpack.c.b16 %v1177, %v1176
    %v1663 = vpack.c.b16 %v1179, %v1178
    %v1664 = vpack.c.b16 %v1181, %v1180
    %v1665 = vpack.c.b16 %v1183, %v1182
    %v1666 = vpack.c.b16 %v1185, %v1184
    %v1667 = vpack.c.b16 %v1187, %v1186
    %v1668 = vpack.c.b16 %v1189, %v1188
    %v1669 = vpack.c.b16 %v1191, %v1190
    %v1670 = vpack.c.b16 %v1193, %v1192
    %v1671 = vpack.c.b16 %v1195, %v1194
    %v1672 = vpack.c.b16 %v1197, %v1196
    %v1673 = vpack.c.b16 %v1199, %v1198
    %v1674 = vpack.c.b16 %v1201, %v1200
    %v1675 = vpack.c.b16 %v1203, %v1202
    %v1676 = vpack.c.b16 %v1205, %v1204
    %v1677 = vpack.c.b16 %v1207, %v1206
    %v1678 = vpack.c.b16 %v1209, %v1208
    %v1679 = vpack.c.b16 %v1211, %v1210
    %v1680 = vpack.c.b16 %v1213, %v1212
    %v1681 = vpack.c.b16 %v1215, %v1214
    %v1682 = vpack.c.b16 %v1217, %v1216
    %v1683 = vpack.c.b16 %v1219, %v1218
    %v1684 = vpack.c.b16 %v1221, %v1220
    %v1685 = vpack.c.b16 %v1223, %v1222
    %v1686 = vpack.c.b16 %v1225, %v1224
    %v1687 = vpack.c.b16 %v1227, %v1226
    %v1688 = vpack.c.b16 %v1229, %v1228
    %v1689 = vpack.c.b16 %v1231, %v1230
    %v1690 = vpack.c.b16 %v1233, %v1232
    %v1691 = vpack.c.b16 %v1235, %v1234
    %v1692 = vpack.c.b16 %v1237, %v1236
    %v1693 = vpack.c.b16 %v1239, %v1238
    %v1694 = vpack.c.b16 %v1241, %v1240
    %v1695 = vpack.c.b16 %v1243, %v1242
    %v1696 = vpack.c.b16 %v1245, %v1244
    %v1697 = vpack.c.b16 %v1247, %v1246
    %v1698 = vpack.c.b16 %v1249, %v1248
    %v1699 = vpack.c.b16 %v1251, %v1250
    %v1700 = vpack.c.b16 %v1253, %v1252
    %v1701 = vpack.c.b16 %v1255, %v1254
    %v1702 = vpack.c.b16 %v1257, %v1256
    %v1703 = vpack.c.b16 %v1259, %v1258
    %v1704 = vpack.c.b16 %v1261, %v1260
    %v1705 = vpack.c.b16 %v1263, %v1262
    %v1706 = vpack.c.b16 %v1265, %v1264
    %v1707 = vpack.c.b16 %v1267, %v1266
    %v1708 = vpack.c.b16 %v1269, %v1268
    %v1709 = vpack.c.b16 %v1271, %v1270
    %v1710 = vpack.c.b16 %v1273, %v1272
    %v1711 = vpack.c.b16 %v1275, %v1274
    %v1712 = vpack.c.b16 %v1277, %v1276
    %v1713 = vpack.c.b16 %v1279, %v1278
    %v1714 = vpack.c.b16 %v1281, %v1280
    %v1715 = vpack.c.b16 %v1283, %v1282
    %v1716 = vpack.c.b16 %v1285, %v1284
    %v1717 = vpack.c.b16 %v1287, %v1286
    %v1718 = vpack.c.b16 %v1289, %v1288
    %v1719 = vpack.c.b16 %v1291, %v1290
    %v1720 = vpack.c.b16 %v1293, %v1292
    %v1721 = vpack.c.b16 %v1295, %v1294
    %v1722 = vpack.c.b16 %v1297, %v1296
    %v1723 = vpack.c.b16 %v1299, %v1298
    %v1724 = vpack.c.b16 %v1301, %v1300
    %v1725 = vpack.c.b16 %v1303, %v1302
    %v1726 = vpack.c.b16 %v1305, %v1304
    %v1727 = vpack.c.b16 %v1307, %v1306
    %v1728 = vpack.c.b16 %v1309, %v1308
    %v1729 = vpack.c.b16 %v1311, %v1310
    %v1730 = vpack.c.b16 %v1313, %v1312
    %v1731 = vpack.c.b16 %v1315, %v1314
    %v1732 = vpack.c.b16 %v1317, %v1316
    %v1733 = vpack.c.b16 %v1319, %v1318
    %v1734 = vpack.c.b16 %v1321, %v1320
    %v1735 = vpack.c.b16 %v1323, %v1322
    %v1736 = vpack.c.b16 %v1325, %v1324
    %v1737 = vpack.c.b16 %v1327, %v1326
    %v1738 = vpack.c.b16 %v1329, %v1328
    %v1739 = vpack.c.b16 %v1331, %v1330
    %v1740 = vpack.c.b16 %v1333, %v1332
    %v1741 = vpack.c.b16 %v1335, %v1334
    %v1742 = vpack.c.b16 %v1337, %v1336
    %v1743 = vpack.c.b16 %v1339, %v1338
    %v1744 = vpack.c.b16 %v1341, %v1340
    %v1745 = vpack.c.b16 %v1343, %v1342
    %v1746 = vpack.c.b16 %v1345, %v1344
    %v1747 = vpack.c.b16 %v1347, %v1346
    %v1748 = vpack.c.b16 %v1349, %v1348
    %v1749 = vpack.c.b16 %v1351, %v1350
    %v1750 = vpack.c.b16 %v1353, %v1352
    %v1751 = vpack.c.b16 %v1355, %v1354
    %v1752 = vpack.c.b16 %v1357, %v1356
    %v1753 = vpack.c.b16 %v1359, %v1358
    %v1754 = vpack.c.b16 %v1361, %v1360
    %v1755 = vpack.c.b16 %v1363, %v1362
    %v1756 = vpack.c.b16 %v1365, %v1364
    %v1757 = vpack.c.b16 %v1367, %v1366
    %v1758 = vpack.c.b16 %v1369, %v1368
    %v1759 = vpack.c.b16 %v1371, %v1370
    %v1760 = vpack.c.b16 %v1373, %v1372
    %v1761 = vpack.c.b16 %v1375, %v1374
    %v1762 = vpack.c.b16 %v1377, %v1376
    %v1763 = vpack.c.b16 %v1379, %v1378
    %v1764 = vpack.c.b16 %v1381, %v1380
    %v1765 = vpack.c.b16 %v1383, %v1382
    %v1766 = vpack.c.b16 %v1385, %v1384
    %v1767 = vpack.c.b16 %v1387, %v1386
    %v1768 = vpack.c.b16 %v1389, %v1388
    %v1769 = vpack.c.b16 %v1391, %v1390
    %v1770 = vpack.c.b16 %v1393, %v1392
    %v1771 = vpack.c.b16 %v1395, %v1394
    %v1772 = vpack.c.b16 %v1397, %v1396
    %v1773 = vpack.c.b16 %v1399, %v1398
    %v1774 = vpack.c.b16 %v1401, %v1400
    %v1775 = vpack.c.b16 %v1403, %v1402
    %v1776 = vpack.c.b16 %v1405, %v1404
    %v1777 = vpack.c.b16 %v1407, %v1406
    %v1778 = vpack.c.b16 %v1409, %v1408
    %v1779 = vpack.c.b16 %v1411, %v1410
    %v1780 = vpack.c.b16 %v1413, %v1412
    %v1781 = vpack.c.b16 %v1415, %v1414
    %v1782 = vpack.c.b16 %v1417, %v1416
    %v1783 = vpack.c.b16 %v1419, %v1418
    %v1784 = vpack.c.b16 %v1421, %v1420
    %v1785 = vpack.c.b16 %v1423, %v1422
    %v1786 = vpack.c.b16 %v1425, %v1424
    %v1787 = vpack.c.b16 %v1427, %v1426
    %v1788 = vpack.c.b16 %v1429, %v1428
    %v1789 = vpack.c.b16 %v1431, %v1430
    %v1790 = vpack.c.b16 %v1433, %v1432
    %v1791 = vpack.c.b16 %v1435, %v1434
    %v1792 = vpack.c.b16 %v1437, %v1436
    %v1793 = vpack.c.b16 %v1439, %v1438
    %v1794 = vpack.c.b16 %v1441, %v1440
    %v1795 = vpack.c.b16 %v1443, %v1442
    %v1796 = vpack.c.b16 %v1445, %v1444
    %v1797 = vpack.c.b16 %v1447, %v1446
    %v1798 = vpack.c.b16 %v1449, %v1448
    %v1799 = vpack.c.b16 %v1451, %v1450
    %v1800 = vpack.c.b16 %v1453, %v1452
    %v1801 = vpack.c.b16 %v1455, %v1454
    %v1802 = vpack.c.b16 %v1457, %v1456
    %v1803 = vpack.c.b16 %v1459, %v1458
    %v1804 = vpack.c.b16 %v1461, %v1460
    %v1805 = vpack.c.b16 %v1463, %v1462
    %v1806 = vpack.c.b16 %v1465, %v1464
    %v1807 = vpack.c.b16 %v1467, %v1466
    %v1808 = vpack.c.b16 %v1469, %v1468
    %v1809 = vpack.c.b16 %v1471, %v1470
    %v1810 = vpack.c.b16 %v1473, %v1472
    %v1811 = vpack.c.b16 %v1475, %v1474
    %v1812 = vpack.c.b16 %v1477, %v1476
    %v1813 = vpack.c.b16 %v1479, %v1478
    %v1814 = vpack.c.b16 %v1481, %v1480
    %v1815 = vpack.c.b16 %v1483, %v1482
    %v1816 = vpack.c.b16 %v1485, %v1484
    %v1817 = vpack.c.b16 %v1487, %v1486
    %v1818 = vpack.c.b16 %v1489, %v1488
    %v1819 = vpack.c.b16 %v1491, %v1490
    %v1820 = vpack.c.b16 %v1493, %v1492
    %v1821 = vpack.c.b16 %v1495, %v1494
    %v1822 = vpack.c.b16 %v1497, %v1496
    %v1823 = vpack.c.b16 %v1499, %v1498
    %v1824 = vpack.c.b16 %v1501, %v1500
    %v1825 = vpack.c.b16 %v1503, %v1502
    %v1826 = vpack.c.b16 %v1505, %v1504
    %v1827 = vpack.c.b16 %v1507, %v1506
    %v1828 = vpack.c.b16 %v1509, %v1508
    %v1829 = vpack.c.b16 %v1511, %v1510
    %v1830 = vpack.c.b16 %v1513, %v1512
    %v1831 = vpack.c.b16 %v1515, %v1514
    %v1832 = vpack.c.b16 %v1517, %v1516
    %v1833 = vpack.c.b16 %v1519, %v1518
    %v1834 = vpack.c.b16 %v1521, %v1520
    %v1835 = vpack.c.b16 %v1523, %v1522
    %v1836 = vpack.c.b16 %v1525, %v1524
    %v1837 = vpack.c.b16 %v1527, %v1526
    %v1838 = vpack.c.b16 %v1529, %v1528
    %v1839 = vpack.c.b16 %v1531, %v1530
    %v1840 = vpack.c.b16 %v1533, %v1532
    %v1841 = vpack.c.b16 %v1535, %v1534
    %v1842 = vpack.c.b16 %v1537, %v1536
    %v1843 = vpack.c.b16 %v1539, %v1538
    %v1844 = vpack.c.b16 %v1541, %v1540
    %v1845 = vpack.c.b16 %v1543, %v1542
    %v1846 = vpack.c.b16 %v1545, %v1544
    %v1847 = vpack.c.b16 %v1547, %v1546
    %v1848 = vpack.c.b16 %v1549, %v1548
    %v1849 = vpack.c.b16 %v1551, %v1550
    %v1850 = vpack.c.b16 %v1553, %v1552
    %v1851 = vpack.c.b16 %v1555, %v1554
    %v1852 = vpack.c.b16 %v1557, %v1556
    %v1853 = vpack.c.b16 %v1559, %v1558
    %v1854 = vpack.c.b16 %v1561, %v1560
    %v1855 = vpack.c.b16 %v1563, %v1562
    %v1856 = vpack.c.b16 %v1565, %v1564
    %v1857 = vpack.c.b16 %v1567, %v1566
    %v1858 = vpack.c.b16 %v1569, %v1568
    %v1859 = vpack.c.b16 %v1571, %v1570
    %v1860 = vpack.c.b16 %v1573, %v1572
    %v1861 = vpack.c.b16 %v1575, %v1574
    %v1862 = vpack.c.b16 %v1577, %v1576
    %v1863 = vpack.c.b16 %v1579, %v1578
    %v1864 = vpack.c.b16 %v1581, %v1580
    %v1865 = vpack.c.b16 %v1583, %v1582
    %v1866 = vpack.c.b16 %v1585, %v1584
    %v1867 = vpack.c.b16 %v1587, %v1586
    %v1868 = vpack.c.b16 %v1589, %v1588
    %v1869 = vpack.c.b16 %v1591, %v1590
    %v1870 = vpack.c.b16 %v1593, %v1592
    %v1871 = vpack.c.b16 %v1595, %v1594
    %v1872 = vpack.c.b16 %v1597, %v1596
    %v1873 = vpack.c.b16 %v1599, %v1598
    %v1874 = vpack.c.b16 %v1601, %v1600
    %v1875 = vpack.c.b16 %v1603, %v1602
    %v1876 = vpack.c.b16 %v1605, %v1604
    %v1877 = vpack.c.b16 %v1607, %v1606
    %v1878 = vpack.c.b16 %v1609, %v1608
    %v1879 = vpack.c.b16 %v1611, %v1610
    %v1880 = vpack.c.b16 %v1613, %v1612
    %v1881 = vpack.c.b16 %v1615, %v1614
    %v1882 = vpack.c.b16 %v1617, %v1616
    %v1883 = vpack.c.b16 %v1619, %v1618
    %v1884 = vpack.c.b16 %v1621, %v1620
    %v1885 = vpack.c.b16 %v1623, %v1622
    %v1886 = vpack.c.b16 %v1625, %v1624
    %v1887 = vpack.c.b16 %v1627, %v1626
    %v1888 = vpack.c.b16 %v1629, %v1628
    %v1889 = vpack.c.b16 %v1631, %v1630
    %v1890 = vpack.c.b16 %v1633, %v1632
    %v1891 = vpack.c.b16 %v1635, %v1634
    %2148 = vmatpush.bf16.msra.mxu0 %v1643
    %2149 = vmatpush.bf16.msra.mxu0 %v1642
    %2150 = vmatpush.bf16.msra.mxu0 %v1641
    %2151 = vmatpush.bf16.msra.mxu0 %v1640
    %2152 = vmatpush.bf16.msra.mxu0 %v1639
    %2153 = vmatpush.bf16.msra.mxu0 %v1638
    %2154 = vmatpush.bf16.msra.mxu0 %v1637
    %2155 = vmatpush.bf16.msra.mxu0 %v1636
    %2156 = vmatmul.bf16.gmra.mxu0 %v542
    %v2157 = vpop.f32.mrf.mxu0
    %v2158 = vadd.f32 %v539, %v2157
    %v2159 = vpop.f32.mrf.mxu0
    %2160 = vdwg.mxu0
    %2161 = vmatpush.bf16.msra.mxu0 %v1651
    %2162 = vmatpush.bf16.msra.mxu0 %v1650
    %2163 = vmatpush.bf16.msra.mxu0 %v1649
    %2164 = vmatpush.bf16.msra.mxu0 %v1648
    %2165 = vmatpush.bf16.msra.mxu0 %v1647
    %2166 = vmatpush.bf16.msra.mxu0 %v1646
    %2167 = vmatpush.bf16.msra.mxu0 %v1645
    %2168 = vmatpush.bf16.msra.mxu0 %v1644
    %2169 = vmatmul.bf16.gmra.mxu0 %v543
    %v2170 = vpop.f32.mrf.mxu0
    %v2171 = vadd.f32 %v2158, %v2170
    %v2172 = vpop.f32.mrf.mxu0
    %2173 = vdwg.mxu0
    %2174 = vmatpush.bf16.msra.mxu0 %v1659
    %2175 = vmatpush.bf16.msra.mxu0 %v1658
    %2176 = vmatpush.bf16.msra.mxu0 %v1657
    %2177 = vmatpush.bf16.msra.mxu0 %v1656
    %2178 = vmatpush.bf16.msra.mxu0 %v1655
    %2179 = vmatpush.bf16.msra.mxu0 %v1654
    %2180 = vmatpush.bf16.msra.mxu0 %v1653
    %2181 = vmatpush.bf16.msra.mxu0 %v1652
    %2182 = vmatmul.bf16.gmra.mxu0 %v544
    %v2183 = vpop.f32.mrf.mxu0
    %v2184 = vadd.f32 %v2171, %v2183
    %v2185 = vpop.f32.mrf.mxu0
    %2186 = vdwg.mxu0
    %2187 = vmatpush.bf16.msra.mxu0 %v1667
    %2188 = vmatpush.bf16.msra.mxu0 %v1666
    %2189 = vmatpush.bf16.msra.mxu0 %v1665
    %2190 = vmatpush.bf16.msra.mxu0 %v1664
    %2191 = vmatpush.bf16.msra.mxu0 %v1663
    %2192 = vmatpush.bf16.msra.mxu0 %v1662
    %2193 = vmatpush.bf16.msra.mxu0 %v1661
    %2194 = vmatpush.bf16.msra.mxu0 %v1660
    %2195 = vmatmul.bf16.gmra.mxu0 %v545
    %v2196 = vpop.f32.mrf.mxu0
    %v2197 = vadd.f32 %v2184, %v2196
    %v2198 = vpop.f32.mrf.mxu0
    %2199 = vdwg.mxu0
    %2200 = vmatpush.bf16.msra.mxu0 %v1675
    %2201 = vmatpush.bf16.msra.mxu0 %v1674
    %2202 = vmatpush.bf16.msra.mxu0 %v1673
    %2203 = vmatpush.bf16.msra.mxu0 %v1672
    %2204 = vmatpush.bf16.msra.mxu0 %v1671
    %2205 = vmatpush.bf16.msra.mxu0 %v1670
    %2206 = vmatpush.bf16.msra.mxu0 %v1669
    %2207 = vmatpush.bf16.msra.mxu0 %v1668
    %2208 = vmatmul.bf16.gmra.mxu0 %v546
    %v2209 = vpop.f32.mrf.mxu0
    %v2210 = vadd.f32 %v2197, %v2209
    %v2211 = vpop.f32.mrf.mxu0
    %2212 = vdwg.mxu0
    %2213 = vmatpush.bf16.msra.mxu0 %v1683
    %2214 = vmatpush.bf16.msra.mxu0 %v1682
    %2215 = vmatpush.bf16.msra.mxu0 %v1681
    %2216 = vmatpush.bf16.msra.mxu0 %v1680
    %2217 = vmatpush.bf16.msra.mxu0 %v1679
    %2218 = vmatpush.bf16.msra.mxu0 %v1678
    %2219 = vmatpush.bf16.msra.mxu0 %v1677
    %2220 = vmatpush.bf16.msra.mxu0 %v1676
    %2221 = vmatmul.bf16.gmra.mxu0 %v547
    %v2222 = vpop.f32.mrf.mxu0
    %v2223 = vadd.f32 %v2210, %v2222
    %v2224 = vpop.f32.mrf.mxu0
    %2225 = vdwg.mxu0
    %2226 = vmatpush.bf16.msra.mxu0 %v1691
    %2227 = vmatpush.bf16.msra.mxu0 %v1690
    %2228 = vmatpush.bf16.msra.mxu0 %v1689
    %2229 = vmatpush.bf16.msra.mxu0 %v1688
    %2230 = vmatpush.bf16.msra.mxu0 %v1687
    %2231 = vmatpush.bf16.msra.mxu0 %v1686
    %2232 = vmatpush.bf16.msra.mxu0 %v1685
    %2233 = vmatpush.bf16.msra.mxu0 %v1684
    %2234 = vmatmul.bf16.gmra.mxu0 %v548
    %v2235 = vpop.f32.mrf.mxu0
    %v2236 = vadd.f32 %v2223, %v2235
    %v2237 = vpop.f32.mrf.mxu0
    %2238 = vdwg.mxu0
    %2239 = vmatpush.bf16.msra.mxu0 %v1699
    %2240 = vmatpush.bf16.msra.mxu0 %v1698
    %2241 = vmatpush.bf16.msra.mxu0 %v1697
    %2242 = vmatpush.bf16.msra.mxu0 %v1696
    %2243 = vmatpush.bf16.msra.mxu0 %v1695
    %2244 = vmatpush.bf16.msra.mxu0 %v1694
    %2245 = vmatpush.bf16.msra.mxu0 %v1693
    %2246 = vmatpush.bf16.msra.mxu0 %v1692
    %2247 = vmatmul.bf16.gmra.mxu0 %v549
    %v2248 = vpop.f32.mrf.mxu0
    %v2249 = vadd.f32 %v2236, %v2248
    %v2250 = vpop.f32.mrf.mxu0
    %2251 = vdwg.mxu0
    %2252 = vmatpush.bf16.msra.mxu0 %v1707
    %2253 = vmatpush.bf16.msra.mxu0 %v1706
    %2254 = vmatpush.bf16.msra.mxu0 %v1705
    %2255 = vmatpush.bf16.msra.mxu0 %v1704
    %2256 = vmatpush.bf16.msra.mxu0 %v1703
    %2257 = vmatpush.bf16.msra.mxu0 %v1702
    %2258 = vmatpush.bf16.msra.mxu0 %v1701
    %2259 = vmatpush.bf16.msra.mxu0 %v1700
    %2260 = vmatmul.bf16.gmra.mxu0 %v552
    %v2261 = vpop.f32.mrf.mxu0
    %v2262 = vadd.f32 %v2249, %v2261
    %v2263 = vpop.f32.mrf.mxu0
    %2264 = vdwg.mxu0
    %2265 = vmatpush.bf16.msra.mxu0 %v1715
    %2266 = vmatpush.bf16.msra.mxu0 %v1714
    %2267 = vmatpush.bf16.msra.mxu0 %v1713
    %2268 = vmatpush.bf16.msra.mxu0 %v1712
    %2269 = vmatpush.bf16.msra.mxu0 %v1711
    %2270 = vmatpush.bf16.msra.mxu0 %v1710
    %2271 = vmatpush.bf16.msra.mxu0 %v1709
    %2272 = vmatpush.bf16.msra.mxu0 %v1708
    %2273 = vmatmul.bf16.gmra.mxu0 %v553
    %v2274 = vpop.f32.mrf.mxu0
    %v2275 = vadd.f32 %v2262, %v2274
    %v2276 = vpop.f32.mrf.mxu0
    %2277 = vdwg.mxu0
    %2278 = vmatpush.bf16.msra.mxu0 %v1723
    %2279 = vmatpush.bf16.msra.mxu0 %v1722
    %2280 = vmatpush.bf16.msra.mxu0 %v1721
    %2281 = vmatpush.bf16.msra.mxu0 %v1720
    %2282 = vmatpush.bf16.msra.mxu0 %v1719
    %2283 = vmatpush.bf16.msra.mxu0 %v1718
    %2284 = vmatpush.bf16.msra.mxu0 %v1717
    %2285 = vmatpush.bf16.msra.mxu0 %v1716
    %2286 = vmatmul.bf16.gmra.mxu0 %v554
    %v2287 = vpop.f32.mrf.mxu0
    %v2288 = vadd.f32 %v2275, %v2287
    %v2289 = vpop.f32.mrf.mxu0
    %2290 = vdwg.mxu0
    %2291 = vmatpush.bf16.msra.mxu0 %v1731
    %2292 = vmatpush.bf16.msra.mxu0 %v1730
    %2293 = vmatpush.bf16.msra.mxu0 %v1729
    %2294 = vmatpush.bf16.msra.mxu0 %v1728
    %2295 = vmatpush.bf16.msra.mxu0 %v1727
    %2296 = vmatpush.bf16.msra.mxu0 %v1726
    %2297 = vmatpush.bf16.msra.mxu0 %v1725
    %2298 = vmatpush.bf16.msra.mxu0 %v1724
    %2299 = vmatmul.bf16.gmra.mxu0 %v555
    %v2300 = vpop.f32.mrf.mxu0
    %v2301 = vadd.f32 %v2288, %v2300
    %v2302 = vpop.f32.mrf.mxu0
    %2303 = vdwg.mxu0
    %2304 = vmatpush.bf16.msra.mxu0 %v1739
    %2305 = vmatpush.bf16.msra.mxu0 %v1738
    %2306 = vmatpush.bf16.msra.mxu0 %v1737
    %2307 = vmatpush.bf16.msra.mxu0 %v1736
    %2308 = vmatpush.bf16.msra.mxu0 %v1735
    %2309 = vmatpush.bf16.msra.mxu0 %v1734
    %2310 = vmatpush.bf16.msra.mxu0 %v1733
    %2311 = vmatpush.bf16.msra.mxu0 %v1732
    %2312 = vmatmul.bf16.gmra.mxu0 %v556
    %v2313 = vpop.f32.mrf.mxu0
    %v2314 = vadd.f32 %v2301, %v2313
    %v2315 = vpop.f32.mrf.mxu0
    %2316 = vdwg.mxu0
    %2317 = vmatpush.bf16.msra.mxu0 %v1747
    %2318 = vmatpush.bf16.msra.mxu0 %v1746
    %2319 = vmatpush.bf16.msra.mxu0 %v1745
    %2320 = vmatpush.bf16.msra.mxu0 %v1744
    %2321 = vmatpush.bf16.msra.mxu0 %v1743
    %2322 = vmatpush.bf16.msra.mxu0 %v1742
    %2323 = vmatpush.bf16.msra.mxu0 %v1741
    %2324 = vmatpush.bf16.msra.mxu0 %v1740
    %2325 = vmatmul.bf16.gmra.mxu0 %v557
    %v2326 = vpop.f32.mrf.mxu0
    %v2327 = vadd.f32 %v2314, %v2326
    %v2328 = vpop.f32.mrf.mxu0
    %2329 = vdwg.mxu0
    %2330 = vmatpush.bf16.msra.mxu0 %v1755
    %2331 = vmatpush.bf16.msra.mxu0 %v1754
    %2332 = vmatpush.bf16.msra.mxu0 %v1753
    %2333 = vmatpush.bf16.msra.mxu0 %v1752
    %2334 = vmatpush.bf16.msra.mxu0 %v1751
    %2335 = vmatpush.bf16.msra.mxu0 %v1750
    %2336 = vmatpush.bf16.msra.mxu0 %v1749
    %2337 = vmatpush.bf16.msra.mxu0 %v1748
    %2338 = vmatmul.bf16.gmra.mxu0 %v558
    %v2339 = vpop.f32.mrf.mxu0
    %v2340 = vadd.f32 %v2327, %v2339
    %v2341 = vpop.f32.mrf.mxu0
    %2342 = vdwg.mxu0
    %2343 = vmatpush.bf16.msra.mxu0 %v1763
    %2344 = vmatpush.bf16.msra.mxu0 %v1762
    %2345 = vmatpush.bf16.msra.mxu0 %v1761
    %2346 = vmatpush.bf16.msra.mxu0 %v1760
    %2347 = vmatpush.bf16.msra.mxu0 %v1759
    %2348 = vmatpush.bf16.msra.mxu0 %v1758
    %2349 = vmatpush.bf16.msra.mxu0 %v1757
    %2350 = vmatpush.bf16.msra.mxu0 %v1756
    %2351 = vmatmul.bf16.gmra.mxu0 %v559
    %v2352 = vpop.f32.mrf.mxu0
    %v2353 = vadd.f32 %v2340, %v2352
    %v2354 = vpop.f32.mrf.mxu0
    %2355 = vdwg.mxu0
    %2356 = vmatpush.bf16.msra.mxu0 %v1771
    %2357 = vmatpush.bf16.msra.mxu0 %v1770
    %2358 = vmatpush.bf16.msra.mxu0 %v1769
    %2359 = vmatpush.bf16.msra.mxu0 %v1768
    %2360 = vmatpush.bf16.msra.mxu0 %v1767
    %2361 = vmatpush.bf16.msra.mxu0 %v1766
    %2362 = vmatpush.bf16.msra.mxu0 %v1765
    %2363 = vmatpush.bf16.msra.mxu0 %v1764
    %2364 = vmatmul.bf16.gmra.mxu0 %v562
    %v2365 = vpop.f32.mrf.mxu0
    %v2366 = vadd.f32 %v2353, %v2365
    %v2367 = vpop.f32.mrf.mxu0
    %2368 = vdwg.mxu0
    %2369 = vmatpush.bf16.msra.mxu0 %v1779
    %2370 = vmatpush.bf16.msra.mxu0 %v1778
    %2371 = vmatpush.bf16.msra.mxu0 %v1777
    %2372 = vmatpush.bf16.msra.mxu0 %v1776
    %2373 = vmatpush.bf16.msra.mxu0 %v1775
    %2374 = vmatpush.bf16.msra.mxu0 %v1774
    %2375 = vmatpush.bf16.msra.mxu0 %v1773
    %2376 = vmatpush.bf16.msra.mxu0 %v1772
    %2377 = vmatmul.bf16.gmra.mxu0 %v563
    %v2378 = vpop.f32.mrf.mxu0
    %v2379 = vadd.f32 %v2366, %v2378
    %v2380 = vpop.f32.mrf.mxu0
    %2381 = vdwg.mxu0
    %2382 = vmatpush.bf16.msra.mxu0 %v1787
    %2383 = vmatpush.bf16.msra.mxu0 %v1786
    %2384 = vmatpush.bf16.msra.mxu0 %v1785
    %2385 = vmatpush.bf16.msra.mxu0 %v1784
    %2386 = vmatpush.bf16.msra.mxu0 %v1783
    %2387 = vmatpush.bf16.msra.mxu0 %v1782
    %2388 = vmatpush.bf16.msra.mxu0 %v1781
    %2389 = vmatpush.bf16.msra.mxu0 %v1780
    %2390 = vmatmul.bf16.gmra.mxu0 %v564
    %v2391 = vpop.f32.mrf.mxu0
    %v2392 = vadd.f32 %v2379, %v2391
    %v2393 = vpop.f32.mrf.mxu0
    %2394 = vdwg.mxu0
    %2395 = vmatpush.bf16.msra.mxu0 %v1795
    %2396 = vmatpush.bf16.msra.mxu0 %v1794
    %2397 = vmatpush.bf16.msra.mxu0 %v1793
    %2398 = vmatpush.bf16.msra.mxu0 %v1792
    %2399 = vmatpush.bf16.msra.mxu0 %v1791
    %2400 = vmatpush.bf16.msra.mxu0 %v1790
    %2401 = vmatpush.bf16.msra.mxu0 %v1789
    %2402 = vmatpush.bf16.msra.mxu0 %v1788
    %2403 = vmatmul.bf16.gmra.mxu0 %v565
    %v2404 = vpop.f32.mrf.mxu0
    %v2405 = vadd.f32 %v2392, %v2404
    %v2406 = vpop.f32.mrf.mxu0
    %2407 = vdwg.mxu0
    %2408 = vmatpush.bf16.msra.mxu0 %v1803
    %2409 = vmatpush.bf16.msra.mxu0 %v1802
    %2410 = vmatpush.bf16.msra.mxu0 %v1801
    %2411 = vmatpush.bf16.msra.mxu0 %v1800
    %2412 = vmatpush.bf16.msra.mxu0 %v1799
    %2413 = vmatpush.bf16.msra.mxu0 %v1798
    %2414 = vmatpush.bf16.msra.mxu0 %v1797
    %2415 = vmatpush.bf16.msra.mxu0 %v1796
    %2416 = vmatmul.bf16.gmra.mxu0 %v566
    %v2417 = vpop.f32.mrf.mxu0
    %v2418 = vadd.f32 %v2405, %v2417
    %v2419 = vpop.f32.mrf.mxu0
    %2420 = vdwg.mxu0
    %2421 = vmatpush.bf16.msra.mxu0 %v1811
    %2422 = vmatpush.bf16.msra.mxu0 %v1810
    %2423 = vmatpush.bf16.msra.mxu0 %v1809
    %2424 = vmatpush.bf16.msra.mxu0 %v1808
    %2425 = vmatpush.bf16.msra.mxu0 %v1807
    %2426 = vmatpush.bf16.msra.mxu0 %v1806
    %2427 = vmatpush.bf16.msra.mxu0 %v1805
    %2428 = vmatpush.bf16.msra.mxu0 %v1804
    %2429 = vmatmul.bf16.gmra.mxu0 %v567
    %v2430 = vpop.f32.mrf.mxu0
    %v2431 = vadd.f32 %v2418, %v2430
    %v2432 = vpop.f32.mrf.mxu0
    %2433 = vdwg.mxu0
    %2434 = vmatpush.bf16.msra.mxu0 %v1819
    %2435 = vmatpush.bf16.msra.mxu0 %v1818
    %2436 = vmatpush.bf16.msra.mxu0 %v1817
    %2437 = vmatpush.bf16.msra.mxu0 %v1816
    %2438 = vmatpush.bf16.msra.mxu0 %v1815
    %2439 = vmatpush.bf16.msra.mxu0 %v1814
    %2440 = vmatpush.bf16.msra.mxu0 %v1813
    %2441 = vmatpush.bf16.msra.mxu0 %v1812
    %2442 = vmatmul.bf16.gmra.mxu0 %v568
    %v2443 = vpop.f32.mrf.mxu0
    %v2444 = vadd.f32 %v2431, %v2443
    %v2445 = vpop.f32.mrf.mxu0
    %2446 = vdwg.mxu0
    %2447 = vmatpush.bf16.msra.mxu0 %v1827
    %2448 = vmatpush.bf16.msra.mxu0 %v1826
    %2449 = vmatpush.bf16.msra.mxu0 %v1825
    %2450 = vmatpush.bf16.msra.mxu0 %v1824
    %2451 = vmatpush.bf16.msra.mxu0 %v1823
    %2452 = vmatpush.bf16.msra.mxu0 %v1822
    %2453 = vmatpush.bf16.msra.mxu0 %v1821
    %2454 = vmatpush.bf16.msra.mxu0 %v1820
    %2455 = vmatmul.bf16.gmra.mxu0 %v569
    %v2456 = vpop.f32.mrf.mxu0
    %v2457 = vadd.f32 %v2444, %v2456
    %v2458 = vpop.f32.mrf.mxu0
    %2459 = vdwg.mxu0
    %2460 = vmatpush.bf16.msra.mxu0 %v1835
    %2461 = vmatpush.bf16.msra.mxu0 %v1834
    %2462 = vmatpush.bf16.msra.mxu0 %v1833
    %2463 = vmatpush.bf16.msra.mxu0 %v1832
    %2464 = vmatpush.bf16.msra.mxu0 %v1831
    %2465 = vmatpush.bf16.msra.mxu0 %v1830
    %2466 = vmatpush.bf16.msra.mxu0 %v1829
    %2467 = vmatpush.bf16.msra.mxu0 %v1828
    %2468 = vmatmul.bf16.gmra.mxu0 %v572
    %v2469 = vpop.f32.mrf.mxu0
    %v2470 = vadd.f32 %v2457, %v2469
    %v2471 = vpop.f32.mrf.mxu0
    %2472 = vdwg.mxu0
    %2473 = vmatpush.bf16.msra.mxu0 %v1843
    %2474 = vmatpush.bf16.msra.mxu0 %v1842
    %2475 = vmatpush.bf16.msra.mxu0 %v1841
    %2476 = vmatpush.bf16.msra.mxu0 %v1840
    %2477 = vmatpush.bf16.msra.mxu0 %v1839
    %2478 = vmatpush.bf16.msra.mxu0 %v1838
    %2479 = vmatpush.bf16.msra.mxu0 %v1837
    %2480 = vmatpush.bf16.msra.mxu0 %v1836
    %2481 = vmatmul.bf16.gmra.mxu0 %v573
    %v2482 = vpop.f32.mrf.mxu0
    %v2483 = vadd.f32 %v2470, %v2482
    %v2484 = vpop.f32.mrf.mxu0
    %2485 = vdwg.mxu0
    %2486 = vmatpush.bf16.msra.mxu0 %v1851
    %2487 = vmatpush.bf16.msra.mxu0 %v1850
    %2488 = vmatpush.bf16.msra.mxu0 %v1849
    %2489 = vmatpush.bf16.msra.mxu0 %v1848
    %2490 = vmatpush.bf16.msra.mxu0 %v1847
    %2491 = vmatpush.bf16.msra.mxu0 %v1846
    %2492 = vmatpush.bf16.msra.mxu0 %v1845
    %2493 = vmatpush.bf16.msra.mxu0 %v1844
    %2494 = vmatmul.bf16.gmra.mxu0 %v574
    %v2495 = vpop.f32.mrf.mxu0
    %v2496 = vadd.f32 %v2483, %v2495
    %v2497 = vpop.f32.mrf.mxu0
    %2498 = vdwg.mxu0
    %2499 = vmatpush.bf16.msra.mxu0 %v1859
    %2500 = vmatpush.bf16.msra.mxu0 %v1858
    %2501 = vmatpush.bf16.msra.mxu0 %v1857
    %2502 = vmatpush.bf16.msra.mxu0 %v1856
    %2503 = vmatpush.bf16.msra.mxu0 %v1855
    %2504 = vmatpush.bf16.msra.mxu0 %v1854
    %2505 = vmatpush.bf16.msra.mxu0 %v1853
    %2506 = vmatpush.bf16.msra.mxu0 %v1852
    %2507 = vmatmul.bf16.gmra.mxu0 %v575
    %v2508 = vpop.f32.mrf.mxu0
    %v2509 = vadd.f32 %v2496, %v2508
    %v2510 = vpop.f32.mrf.mxu0
    %2511 = vdwg.mxu0
    %2512 = vmatpush.bf16.msra.mxu0 %v1867
    %2513 = vmatpush.bf16.msra.mxu0 %v1866
    %2514 = vmatpush.bf16.msra.mxu0 %v1865
    %2515 = vmatpush.bf16.msra.mxu0 %v1864
    %2516 = vmatpush.bf16.msra.mxu0 %v1863
    %2517 = vmatpush.bf16.msra.mxu0 %v1862
    %2518 = vmatpush.bf16.msra.mxu0 %v1861
    %2519 = vmatpush.bf16.msra.mxu0 %v1860
    %2520 = vmatmul.bf16.gmra.mxu0 %v576
    %v2521 = vpop.f32.mrf.mxu0
    %v2522 = vadd.f32 %v2509, %v2521
    %v2523 = vpop.f32.mrf.mxu0
    %2524 = vdwg.mxu0
    %2525 = vmatpush.bf16.msra.mxu0 %v1875
    %2526 = vmatpush.bf16.msra.mxu0 %v1874
    %2527 = vmatpush.bf16.msra.mxu0 %v1873
    %2528 = vmatpush.bf16.msra.mxu0 %v1872
    %2529 = vmatpush.bf16.msra.mxu0 %v1871
    %2530 = vmatpush.bf16.msra.mxu0 %v1870
    %2531 = vmatpush.bf16.msra.mxu0 %v1869
    %2532 = vmatpush.bf16.msra.mxu0 %v1868
    %2533 = vmatmul.bf16.gmra.mxu0 %v577
    %v2534 = vpop.f32.mrf.mxu0
    %v2535 = vadd.f32 %v2522, %v2534
    %v2536 = vpop.f32.mrf.mxu0
    %2537 = vdwg.mxu0
    %2538 = vmatpush.bf16.msra.mxu0 %v1883
    %2539 = vmatpush.bf16.msra.mxu0 %v1882
    %2540 = vmatpush.bf16.msra.mxu0 %v1881
    %2541 = vmatpush.bf16.msra.mxu0 %v1880
    %2542 = vmatpush.bf16.msra.mxu0 %v1879
    %2543 = vmatpush.bf16.msra.mxu0 %v1878
    %2544 = vmatpush.bf16.msra.mxu0 %v1877
    %2545 = vmatpush.bf16.msra.mxu0 %v1876
    %2546 = vmatmul.bf16.gmra.mxu0 %v578
    %v2547 = vpop.f32.mrf.mxu0
    %v2548 = vadd.f32 %v2535, %v2547
    %v2549 = vpop.f32.mrf.mxu0
    %2550 = vdwg.mxu0
    %2551 = vmatpush.bf16.msra.mxu0 %v1891
    %2552 = vmatpush.bf16.msra.mxu0 %v1890
    %2553 = vmatpush.bf16.msra.mxu0 %v1889
    %2554 = vmatpush.bf16.msra.mxu0 %v1888
    %2555 = vmatpush.bf16.msra.mxu0 %v1887
    %2556 = vmatpush.bf16.msra.mxu0 %v1886
    %2557 = vmatpush.bf16.msra.mxu0 %v1885
    %2558 = vmatpush.bf16.msra.mxu0 %v1884
    %2559 = vmatmul.bf16.gmra.mxu0 %v579
    %v2560 = vpop.f32.mrf.mxu0
    %v2561 = vadd.f32 %v2548, %v2560
    %v2562 = vpop.f32.mrf.mxu0
    %2563 = vdwg.mxu0
    %vm2564 = vcmask 8192
    %2565 = vst.msk [vmem:[#allocation3] sm:$0x1] %vm2564, %v2561
    // Predicated region
    $region14: #{_lambda_.7} parent=1 // pred_check
      _
    $region15: #{_lambda_.7} parent=1 // pred_check_branch
      %2567 = sbr.rel (0) target = $region17
    $region16: #{_lambda_.7} parent=1 // pred_region
      %2569 = vsyncadd [#allocation4], 0
      %s2571 = sshll.u32 [#allocation3], 4
      %s2572 = int_to_ptr.vmem [resolvable:$true] %s2571
      %s2573 = sshll.u32 %s3, 4
      %s2574 = int_to_ptr.hbm [resolvable:$true] %s2573
      %2576 = dma.vmem_to_hbm [thread:$0]  %s2572, 16, %s2574, [#allocation4]
    $region17: #{_lambda_.7} parent=1 // pred_fallthru
      _
    // Predicated region
    $region18: #{_lambda_.7} parent=1 // pred_check
      _
    $region19: #{_lambda_.7} parent=1 // pred_check_branch
      %2578 = sbr.rel (0) target = $region21
    $region20: #{_lambda_.7} parent=1 // pred_region
      %2580 = dma.done [#allocation4], 16
    $region21: #{_lambda_.7} parent=1 // pred_fallthru
      _
    %2581 = vsyncpa [#allocation4], 1

</llo_original>
